<compile_context>
chip_gen: v6e
topology: v6e:2x2x1
jax: 0.10.0
libtpu: 0.0.40
codegen_flags: <defaults>
</compile_context>

<pallas_src>
import functools

import jax
import jax.numpy as jnp
from jax.experimental import pallas as pl
from jax.experimental.pallas import tpu as pltpu

EPS = 1e-5
NEG_SLOPE = 0.2


# ----------------------------- kernel helpers ------------------------------ #

def _leaky(x):
    # max(x, a*x) == LeakyReLU(a) for 0 < a < 1: drops the compare+select.
    return jnp.maximum(x, NEG_SLOPE * x)


def _finalize_stats(s1, s2, inv_p):
    # Single-pass biased variance (matches nn.InstanceNorm2d defaults).
    # TODO(synk): offer a Welford / two-pass option for production inputs whose
    # post-activation mean >> std (E[x^2] - E[x]^2 can cancel catastrophically).
    mean = s1 * inv_p
    var = jnp.maximum(s2 * inv_p - mean * mean, 0.0)
    return mean, jax.lax.rsqrt(var + EPS)


def _pick_num_strips(Ho, Wo, C, target_bytes=2 << 20):
    # Smallest strip count dividing Ho whose f32 strip fits the target size.
    rows_target = max(1, target_bytes // max(1, Wo * C * 4))
    for n in range(1, Ho + 1):
        if Ho % n == 0 and Ho // n <= rows_target:
            return n
    return Ho


def _make_kernel(Ho, Wo, C, n_strips, bf16_matmul):
    P = Ho * Wo
    TR = Ho // n_strips          # output rows per strip
    PS = TR * Wo                 # positions per strip
    inv_p = 1.0 / P
    reuse_d = (n_strips == 1)    # single strip: keep depthwise, skip recompute

    def kernel(xph_ref, dw1_ref, pw1_ref, dw2_ref, pw2_ref, o_ref,
               pp_ref, y1_ref, y2_ref):
        # xph_ref: (4, Ho+1, Wo+1, C) phase-decomposed zero-padded input:
        #          xph[2a+b, i, j, c] == x_pad[2i+a, 2j+b, c]
        # dw*_ref: (9, C) depthwise taps (f32);  pw*_ref: (Cin, Cout)
        # o_ref  : (P, C)
        # pp_ref : (Ho+2, Wo+2, C) f32 scratch — padded 2x2-mean-pooled image
        # y1_ref / y2_ref: (P, C) f32 staging for the per-branch pointwise out

        # ---- padded pooled image, built in VMEM from xph (no 2nd HBM stream)
        # pooled[i,j] = 0.25*(x[2i,2j] + x[2i,2j+1] + x[2i+1,2j] + x[2i+1,2j+1])
        #             = 0.25*(xph[3,i,j] + xph[2,i,j+1]
        #                     + xph[1,i+1,j] + xph[0,i+1,j+1])
        pp_ref[...] = jnp.zeros_like(pp_ref)
        pooled = 0.25 * (
            xph_ref[3, pl.ds(0, Ho), pl.ds(0, Wo), :].astype(jnp.float32)
            + xph_ref[2, pl.ds(0, Ho), pl.ds(1, Wo), :].astype(jnp.float32)
            + xph_ref[1, pl.ds(1, Ho), pl.ds(0, Wo), :].astype(jnp.float32)
            + xph_ref[0, pl.ds(1, Ho), pl.ds(1, Wo), :].astype(jnp.float32))
        pp_ref[pl.ds(1, Ho), pl.ds(1, Wo), :] = pooled.astype(pp_ref.dtype)

        dw1 = dw1_ref[...]       # (9, C) f32, resident
        dw2 = dw2_ref[...]

        def d_strip(s, dw, stride2):
            # Depthwise 3x3 over output rows [s*TR, (s+1)*TR): streamed
            # accumulation of nine shifted unit-stride VMEM slices.
            r0 = s * TR
            acc = None
            for k in range(9):
                di, dj = divmod(k, 3)
                if stride2:
                    a, qi = di % 2, di // 2
                    b, qj = dj % 2, dj // 2
                    t = xph_ref[2 * a + b, pl.ds(r0 + qi, TR), pl.ds(qj, Wo), :]
                else:
                    t = pp_ref[pl.ds(r0 + di, TR), pl.ds(dj, Wo), :]
                # TODO(synk): on v6e/v7x the tap multiply could run in bf16 with
                # f32 accumulate; kept f32 so the same kernel is optimal on v5e.
                term = t.astype(jnp.float32) * dw[k]
                acc = term if acc is None else acc + term
            # Merging (TR, Wo) keeps C on lanes; this is a pure view as long as
            # Wo is a multiple of the sublane count (true at AnimeGAN sizes).
            return acc.reshape(PS, C)

        def pointwise(h, w):
            if bf16_matmul:
                # bf16 MXU matmul, f32 accumulation (weights pre-cast in wrapper)
                return jnp.dot(h.astype(jnp.bfloat16), w,
                               preferred_element_type=jnp.float32)
            return jnp.dot(h, w, preferred_element_type=jnp.float32,
                           precision=jax.lax.Precision.HIGHEST)

        # ---- pass 1 over strips: depthwise + IN1 sum / sumsq ---------------
        zero = jnp.zeros((1, C), jnp.float32)
        s1_d1 = s2_d1 = s1_d2 = s2_d2 = zero
        d_cache = []
        for s in range(n_strips):
            d1 = d_strip(s, dw1, True)
            d2 = d_strip(s, dw2, False)
            if reuse_d:
                d_cache.append((d1, d2))
            s1_d1 = s1_d1 + jnp.sum(d1, axis=0, keepdims=True)
            s2_d1 = s2_d1 + jnp.sum(d1 * d1, axis=0, keepdims=True)
            s1_d2 = s1_d2 + jnp.sum(d2, axis=0, keepdims=True)
            s2_d2 = s2_d2 + jnp.sum(d2 * d2, axis=0, keepdims=True)
        m_d1, r_d1 = _finalize_stats(s1_d1, s2_d1, inv_p)
        m_d2, r_d2 = _finalize_stats(s1_d2, s2_d2, inv_p)

        # ---- pass 2 over strips: normalize, matmul, stage y, IN2 stats -----
        pw1 = pw1_ref[...]       # resident, already in the matmul dtype
        pw2 = pw2_ref[...]
        s1_y1 = s2_y1 = s1_y2 = s2_y2 = zero
        for s in range(n_strips):
            if reuse_d:
                d1, d2 = d_cache[s]
            else:
                d1 = d_strip(s, dw1, True)
                d2 = d_strip(s, dw2, False)
            h1 = _leaky((d1 - m_d1) * r_d1)
            h2 = _leaky((d2 - m_d2) * r_d2)
            y1 = pointwise(h1, pw1)
            y2 = pointwise(h2, pw2)
            y1_ref[pl.ds(s * PS, PS), :] = y1
            y2_ref[pl.ds(s * PS, PS), :] = y2
            s1_y1 = s1_y1 + jnp.sum(y1, axis=0, keepdims=True)
            s2_y1 = s2_y1 + jnp.sum(y1 * y1, axis=0, keepdims=True)
            s1_y2 = s1_y2 + jnp.sum(y2, axis=0, keepdims=True)
            s2_y2 = s2_y2 + jnp.sum(y2 * y2, axis=0, keepdims=True)
        m_y1, r_y1 = _finalize_stats(s1_y1, s2_y1, inv_p)
        m_y2, r_y2 = _finalize_stats(s1_y2, s2_y2, inv_p)

        # ---- finalize: second IN + leaky on each branch, sum, store --------
        out = (_leaky((y1_ref[...] - m_y1) * r_y1)
               + _leaky((y2_ref[...] - m_y2) * r_y2))
        o_ref[...] = out.astype(o_ref.dtype)

    return kernel


# ------------------------------- JAX wrapper -------------------------------- #

@functools.partial(jax.jit, static_argnames=("bf16", "out_dtype"))
def down_conv(x_nchw, dw1, pw1, dw2, pw2, *, bf16=True, out_dtype=jnp.float32):
    """DownConv forward.  x: (N,C,H,W); dw*: (C,1,3,3); pw*: (C,C,1,1)."""
    N, C, H, W = x_nchw.shape
    assert H % 2 == 0 and W % 2 == 0, (
        "bilinear(scale=0.5, align_corners=False) == 2x2 mean only for even H, W")
    Ho, Wo = H // 2, W // 2
    P = Ho * Wo
    in_dtype = jnp.bfloat16 if bf16 else jnp.float32
    mm_dtype = jnp.bfloat16 if bf16 else jnp.float32

    # Single fused pre-processing pass: pad + phase-decompose + layout + cast.
    #   xph[n, 2a+b, i, j, c] = x_pad[n, c, 2i+a, 2j+b]
    # TODO(synk): an NHWC-native producer would fold this relayout away entirely.
    xp = jnp.pad(x_nchw, ((0, 0), (0, 0), (1, 1), (1, 1)))
    xph = xp.reshape(N, C, Ho + 1, 2, Wo + 1, 2)
    xph = jnp.transpose(xph, (0, 3, 5, 2, 4, 1))       # (N, a, b, Ho+1, Wo+1, C)
    xph = xph.reshape(N, 4, Ho + 1, Wo + 1, C).astype(in_dtype)

    # Weight re-layout: depthwise (C,1,3,3) -> (9, C) tap-major (f32 VPU math);
    # pointwise (Cout,Cin,1,1) -> (Cin,Cout), pre-cast to the matmul dtype so
    # the resident weights are not re-cast every grid step.
    dw1_t = dw1[:, 0].reshape(C, 9).T.astype(jnp.float32)
    dw2_t = dw2[:, 0].reshape(C, 9).T.astype(jnp.float32)
    pw1_t = pw1[:, :, 0, 0].T.astype(mm_dtype)
    pw2_t = pw2[:, :, 0, 0].T.astype(mm_dtype)

    n_strips = _pick_num_strips(Ho, Wo, C)

    # ---- VMEM budget from real block sizes, capped at 75% of physical ------
    in_item = jnp.dtype(in_dtype).itemsize
    out_item = jnp.dtype(out_dtype).itemsize
    in_bytes = 4 * (Ho + 1) * (Wo + 1) * C * in_item
    out_bytes = P * C * out_item
    pp_bytes = (Ho + 2) * (Wo + 2) * C * 4
    y_bytes = 2 * P * C * 4
    strip_bytes = (Ho // n_strips) * Wo * C * 4
    w_bytes = 2 * (9 * C * 4 + C * C * jnp.dtype(mm_dtype).itemsize)
    est = (2 * (in_bytes + out_bytes) + pp_bytes + y_bytes + 2 * w_bytes
           + 16 * strip_bytes + (2 << 20))
    try:
        cap = int(getattr(pltpu.get_tpu_info(), "vmem_capacity_bytes", 64 << 20))
    except Exception:
        cap = 64 << 20                      # conservative (v7x-sized) fallback
    vmem_limit = int(min(int(0.75 * cap), max(est, 32 << 20)))

    flops = N * ((2 * 18 + 40) * P * C      # depthwise (worst-case x2) + IN/leaky
                 + 4 * P * C * C)           # two pointwise matmuls
    bytes_accessed = (xph.size * in_item + N * P * C * out_item
                      + (dw1_t.size + dw2_t.size) * 4
                      + (pw1_t.size + pw2_t.size) * jnp.dtype(mm_dtype).itemsize)
    cost = pl.CostEstimate(flops=int(flops), transcendentals=int(N * 4 * C),
                           bytes_accessed=int(bytes_accessed))

    out = pl.pallas_call(
        _make_kernel(Ho, Wo, C, n_strips, bf16),
        out_shape=jax.ShapeDtypeStruct((N, P, C), out_dtype),
        grid=(N,),
        in_specs=[
            pl.BlockSpec((None, 4, Ho + 1, Wo + 1, C), lambda n: (n, 0, 0, 0, 0)),
            pl.BlockSpec((9, C), lambda n: (0, 0)),
            pl.BlockSpec((C, C), lambda n: (0, 0)),
            pl.BlockSpec((9, C), lambda n: (0, 0)),
            pl.BlockSpec((C, C), lambda n: (0, 0)),
        ],
        out_specs=pl.BlockSpec((None, P, C), lambda n: (n, 0, 0)),
        scratch_shapes=[
            pltpu.VMEM((Ho + 2, Wo + 2, C), jnp.float32),  # padded pooled image
            pltpu.VMEM((P, C), jnp.float32),               # branch-1 y staging
            pltpu.VMEM((P, C), jnp.float32),               # branch-2 y staging
        ],
        compiler_params=pltpu.CompilerParams(
            dimension_semantics=("parallel",),
            vmem_limit_bytes=vmem_limit),
        cost_estimate=cost,
    )(xph, dw1_t, pw1_t, dw2_t, pw2_t)

    out = out.reshape(N, Ho, Wo, C)
    return jnp.transpose(out, (0, 3, 1, 2)).astype(out_dtype)   # back to NCHW


# --------------------------- pure-JAX reference ----------------------------- #

def _ref_inorm(x):
    m = x.mean(axis=(2, 3), keepdims=True)
    v = ((x - m) ** 2).mean(axis=(2, 3), keepdims=True)
    return (x - m) * jax.lax.rsqrt(v + EPS)


def _ref_leaky(x):
    return jnp.where(x > 0, x, NEG_SLOPE * x)


def _ref_sep(x, dw, pw, stride, groups):
    out = jax.lax.conv_general_dilated(
        x, dw, (stride, stride), ((1, 1), (1, 1)),
        dimension_numbers=('NCHW', 'OIHW', 'NCHW'),
        feature_group_count=groups, precision=jax.lax.Precision.HIGHEST)
    out = _ref_leaky(_ref_inorm(out))
    out = jax.lax.conv_general_dilated(
        out, pw, (1, 1), 'VALID',
        dimension_numbers=('NCHW', 'OIHW', 'NCHW'),
        precision=jax.lax.Precision.HIGHEST)
    return _ref_leaky(_ref_inorm(out))


def down_conv_ref(x, dw1, pw1, dw2, pw2):
    N, C, H, W = x.shape
    out1 = _ref_sep(x, dw1, pw1, 2, C)
    pooled = x.reshape(N, C, H // 2, 2, W // 2, 2).mean(axis=(3, 5))
    out2 = _ref_sep(pooled, dw2, pw2, 1, C)
    return out1 + out2


# ----------------------------------- main ------------------------------------ #

if __name__ == "__main__":
    N, C, H, W = 2, 4, 16, 16
    key = jax.random.PRNGKey(0)
    kx, k1, k2, k3, k4 = jax.random.split(key, 5)

    x = jax.random.normal(kx, (N, C, H, W), jnp.float32)
    # initialize_weights(): conv weights ~ N(0, 0.02), bias=False
    dw1 = 0.02 * jax.random.normal(k1, (C, 1, 3, 3), jnp.float32)
    pw1 = 0.02 * jax.random.normal(k2, (C, C, 1, 1), jnp.float32)
    dw2 = 0.02 * jax.random.normal(k3, (C, 1, 3, 3), jnp.float32)
    pw2 = 0.02 * jax.random.normal(k4, (C, C, 1, 1), jnp.float32)

    ref = down_conv_ref(x, dw1, pw1, dw2, pw2)

    # Validation mode: f32 DMA + f32-accurate MXU matmul -> tight check.
    out_f32 = jax.block_until_ready(down_conv(x, dw1, pw1, dw2, pw2, bf16=False))
    assert out_f32.shape == (N, C, H // 2, W // 2), out_f32.shape
    max_err = float(jnp.max(jnp.abs(out_f32 - ref)))
    assert max_err < 1e-3, f"f32 path mismatch vs reference: {max_err}"

    # Default fast path: bf16 input DMA + bf16 MXU matmul (f32 accumulation).
    # At this toy config (C=4, 0.02-scale weights) the second InstanceNorm
    # divides by a ~0.02*sqrt(C) std, amplifying bf16 rounding, so validate
    # with a relative-RMS bound instead of the 1e-3 max-abs bound.
    out_fast = jax.block_until_ready(down_conv(x, dw1, pw1, dw2, pw2, bf16=True))
    assert out_fast.shape == (N, C, H // 2, W // 2), out_fast.shape
    rel_rms = float(jnp.sqrt(jnp.mean((out_fast - ref) ** 2) / jnp.mean(ref ** 2)))
    assert rel_rms < 0.05, f"bf16 path rel-RMS vs reference too large: {rel_rms}"

    print("KERNEL_OK")
</pallas_src>

<mosaic_0001>
module attributes {stable_mosaic.version = 11 : i64} {
  func.func @kernel(%arg0: i32, %arg1: memref<1x4x9x9x4xf32, #tpu.memory_space<vmem>>, %arg2: memref<9x4xf32, #tpu.memory_space<vmem>>, %arg3: memref<4x4xf32, #tpu.memory_space<vmem>>, %arg4: memref<9x4xf32, #tpu.memory_space<vmem>>, %arg5: memref<4x4xf32, #tpu.memory_space<vmem>>, %arg6: memref<1x64x4xf32, #tpu.memory_space<vmem>>, %arg7: memref<10x10x4xf32, #tpu.memory_space<vmem>>, %arg8: memref<64x4xf32, #tpu.memory_space<vmem>>, %arg9: memref<64x4xf32, #tpu.memory_space<vmem>>) attributes {dimension_semantics = [#tpu.dimension_semantics<parallel>], iteration_bounds = array<i64: 2>, scalar_prefetch = 0 : i64, scratch_operands = 3 : i64, tpu.core_type = #tpu.core_type<tc>, window_params = [{transform_indices = @transform_0, window_bounds = array<i64: 1, 4, 9, 9, 4>}, {pipeline_mode = #tpu.pipeline_mode<synchronous>, transform_indices = @transform_1, window_bounds = array<i64: 9, 4>}, {pipeline_mode = #tpu.pipeline_mode<synchronous>, transform_indices = @transform_2, window_bounds = array<i64: 4, 4>}, {pipeline_mode = #tpu.pipeline_mode<synchronous>, transform_indices = @transform_3, window_bounds = array<i64: 9, 4>}, {pipeline_mode = #tpu.pipeline_mode<synchronous>, transform_indices = @transform_4, window_bounds = array<i64: 4, 4>}, {transform_indices = @transform_5, window_bounds = array<i64: 1, 64, 4>}]} {
    %cst = arith.constant 0.000000e+00 : f32
    %0 = vector.broadcast %cst : f32 to vector<10x10x4xf32>
    %c0 = arith.constant 0 : index
    %c0_0 = arith.constant 0 : index
    %c0_1 = arith.constant 0 : index
    %1 = vector.load %arg7[%c0, %c0_0, %c0_1] : memref<10x10x4xf32, #tpu.memory_space<vmem>>, vector<10x10x4xf32>
    tpu.vector_store %arg7[%c0, %c0_0, %c0_1], %0 {strides = array<i32>} : memref<10x10x4xf32, #tpu.memory_space<vmem>>, vector<10x10x4xf32>,
    %c0_2 = arith.constant 0 : index
    %c3 = arith.constant 3 : index
    %c0_3 = arith.constant 0 : index
    %c0_4 = arith.constant 0 : index
    %c0_5 = arith.constant 0 : index
    %2 = vector.load %arg1[%c0_2, %c3, %c0_3, %c0_4, %c0_5] : memref<1x4x9x9x4xf32, #tpu.memory_space<vmem>>, vector<1x1x8x8x4xf32>
    %3 = vector.shape_cast %2 : vector<1x1x8x8x4xf32> to vector<8x8x4xf32>
    %c0_6 = arith.constant 0 : index
    %c2 = arith.constant 2 : index
    %c0_7 = arith.constant 0 : index
    %c1 = arith.constant 1 : index
    %c0_8 = arith.constant 0 : index
    %4 = vector.load %arg1[%c0_6, %c2, %c0_7, %c1, %c0_8] : memref<1x4x9x9x4xf32, #tpu.memory_space<vmem>>, vector<1x1x8x8x4xf32>
    %5 = vector.shape_cast %4 : vector<1x1x8x8x4xf32> to vector<8x8x4xf32>
    %6 = arith.addf %3, %5 : vector<8x8x4xf32>
    %c0_9 = arith.constant 0 : index
    %c1_10 = arith.constant 1 : index
    %c1_11 = arith.constant 1 : index
    %c0_12 = arith.constant 0 : index
    %c0_13 = arith.constant 0 : index
    %7 = vector.load %arg1[%c0_9, %c1_10, %c1_11, %c0_12, %c0_13] : memref<1x4x9x9x4xf32, #tpu.memory_space<vmem>>, vector<1x1x8x8x4xf32>
    %8 = vector.shape_cast %7 : vector<1x1x8x8x4xf32> to vector<8x8x4xf32>
    %9 = arith.addf %6, %8 : vector<8x8x4xf32>
    %c0_14 = arith.constant 0 : index
    %c0_15 = arith.constant 0 : index
    %c1_16 = arith.constant 1 : index
    %c1_17 = arith.constant 1 : index
    %c0_18 = arith.constant 0 : index
    %10 = vector.load %arg1[%c0_14, %c0_15, %c1_16, %c1_17, %c0_18] : memref<1x4x9x9x4xf32, #tpu.memory_space<vmem>>, vector<1x1x8x8x4xf32>
    %11 = vector.shape_cast %10 : vector<1x1x8x8x4xf32> to vector<8x8x4xf32>
    %12 = arith.addf %9, %11 : vector<8x8x4xf32>
    %cst_19 = arith.constant 2.500000e-01 : f32
    %13 = vector.broadcast %cst_19 : f32 to vector<8x8x4xf32>
    %14 = arith.mulf %13, %12 : vector<8x8x4xf32>
    %c1_20 = arith.constant 1 : index
    %c1_21 = arith.constant 1 : index
    %c0_22 = arith.constant 0 : index
    %15 = vector.load %arg7[%c1_20, %c1_21, %c0_22] : memref<10x10x4xf32, #tpu.memory_space<vmem>>, vector<8x8x4xf32>
    tpu.vector_store %arg7[%c1_20, %c1_21, %c0_22], %14 {strides = array<i32>} : memref<10x10x4xf32, #tpu.memory_space<vmem>>, vector<8x8x4xf32>,
    %c0_23 = arith.constant 0 : index
    %c0_24 = arith.constant 0 : index
    %16 = vector.load %arg2[%c0_23, %c0_24] : memref<9x4xf32, #tpu.memory_space<vmem>>, vector<9x4xf32>
    %c0_25 = arith.constant 0 : index
    %c0_26 = arith.constant 0 : index
    %17 = vector.load %arg4[%c0_25, %c0_26] : memref<9x4xf32, #tpu.memory_space<vmem>>, vector<9x4xf32>
    %cst_27 = arith.constant 0.000000e+00 : f32
    %18 = vector.broadcast %cst_27 : f32 to vector<1x4xf32>
    %c0_28 = arith.constant 0 : index
    %c0_29 = arith.constant 0 : index
    %c0_30 = arith.constant 0 : index
    %c0_31 = arith.constant 0 : index
    %c0_32 = arith.constant 0 : index
    %19 = vector.load %arg1[%c0_28, %c0_29, %c0_30, %c0_31, %c0_32] : memref<1x4x9x9x4xf32, #tpu.memory_space<vmem>>, vector<1x1x8x8x4xf32>
    %20 = vector.shape_cast %19 : vector<1x1x8x8x4xf32> to vector<8x8x4xf32>
    %21 = vector.extract_strided_slice %16 {offsets = [0, 0], sizes = [1, 4], strides = [1, 1]} : vector<9x4xf32> to vector<1x4xf32>
    %22 = vector.shape_cast %21 : vector<1x4xf32> to vector<4xf32>
    %23 = vector.shape_cast %22 : vector<4xf32> to vector<1x1x4xf32>
    %24 = vector.broadcast %23 : vector<1x1x4xf32> to vector<8x8x4xf32>
    %25 = arith.mulf %20, %24 : vector<8x8x4xf32>
    %c0_33 = arith.constant 0 : index
    %c1_34 = arith.constant 1 : index
    %c0_35 = arith.constant 0 : index
    %c0_36 = arith.constant 0 : index
    %c0_37 = arith.constant 0 : index
    %26 = vector.load %arg1[%c0_33, %c1_34, %c0_35, %c0_36, %c0_37] : memref<1x4x9x9x4xf32, #tpu.memory_space<vmem>>, vector<1x1x8x8x4xf32>
    %27 = vector.shape_cast %26 : vector<1x1x8x8x4xf32> to vector<8x8x4xf32>
    %28 = vector.extract_strided_slice %16 {offsets = [1, 0], sizes = [1, 4], strides = [1, 1]} : vector<9x4xf32> to vector<1x4xf32>
    %29 = vector.shape_cast %28 : vector<1x4xf32> to vector<4xf32>
    %30 = vector.shape_cast %29 : vector<4xf32> to vector<1x1x4xf32>
    %31 = vector.broadcast %30 : vector<1x1x4xf32> to vector<8x8x4xf32>
    %32 = arith.mulf %27, %31 : vector<8x8x4xf32>
    %33 = arith.addf %25, %32 : vector<8x8x4xf32>
    %c0_38 = arith.constant 0 : index
    %c0_39 = arith.constant 0 : index
    %c0_40 = arith.constant 0 : index
    %c1_41 = arith.constant 1 : index
    %c0_42 = arith.constant 0 : index
    %34 = vector.load %arg1[%c0_38, %c0_39, %c0_40, %c1_41, %c0_42] : memref<1x4x9x9x4xf32, #tpu.memory_space<vmem>>, vector<1x1x8x8x4xf32>
    %35 = vector.shape_cast %34 : vector<1x1x8x8x4xf32> to vector<8x8x4xf32>
    %36 = vector.extract_strided_slice %16 {offsets = [2, 0], sizes = [1, 4], strides = [1, 1]} : vector<9x4xf32> to vector<1x4xf32>
    %37 = vector.shape_cast %36 : vector<1x4xf32> to vector<4xf32>
    %38 = vector.shape_cast %37 : vector<4xf32> to vector<1x1x4xf32>
    %39 = vector.broadcast %38 : vector<1x1x4xf32> to vector<8x8x4xf32>
    %40 = arith.mulf %35, %39 : vector<8x8x4xf32>
    %41 = arith.addf %33, %40 : vector<8x8x4xf32>
    %c0_43 = arith.constant 0 : index
    %c2_44 = arith.constant 2 : index
    %c0_45 = arith.constant 0 : index
    %c0_46 = arith.constant 0 : index
    %c0_47 = arith.constant 0 : index
    %42 = vector.load %arg1[%c0_43, %c2_44, %c0_45, %c0_46, %c0_47] : memref<1x4x9x9x4xf32, #tpu.memory_space<vmem>>, vector<1x1x8x8x4xf32>
    %43 = vector.shape_cast %42 : vector<1x1x8x8x4xf32> to vector<8x8x4xf32>
    %44 = vector.extract_strided_slice %16 {offsets = [3, 0], sizes = [1, 4], strides = [1, 1]} : vector<9x4xf32> to vector<1x4xf32>
    %45 = vector.shape_cast %44 : vector<1x4xf32> to vector<4xf32>
    %46 = vector.shape_cast %45 : vector<4xf32> to vector<1x1x4xf32>
    %47 = vector.broadcast %46 : vector<1x1x4xf32> to vector<8x8x4xf32>
    %48 = arith.mulf %43, %47 : vector<8x8x4xf32>
    %49 = arith.addf %41, %48 : vector<8x8x4xf32>
    %c0_48 = arith.constant 0 : index
    %c3_49 = arith.constant 3 : index
    %c0_50 = arith.constant 0 : index
    %c0_51 = arith.constant 0 : index
    %c0_52 = arith.constant 0 : index
    %50 = vector.load %arg1[%c0_48, %c3_49, %c0_50, %c0_51, %c0_52] : memref<1x4x9x9x4xf32, #tpu.memory_space<vmem>>, vector<1x1x8x8x4xf32>
    %51 = vector.shape_cast %50 : vector<1x1x8x8x4xf32> to vector<8x8x4xf32>
    %52 = vector.extract_strided_slice %16 {offsets = [4, 0], sizes = [1, 4], strides = [1, 1]} : vector<9x4xf32> to vector<1x4xf32>
    %53 = vector.shape_cast %52 : vector<1x4xf32> to vector<4xf32>
    %54 = vector.shape_cast %53 : vector<4xf32> to vector<1x1x4xf32>
    %55 = vector.broadcast %54 : vector<1x1x4xf32> to vector<8x8x4xf32>
    %56 = arith.mulf %51, %55 : vector<8x8x4xf32>
    %57 = arith.addf %49, %56 : vector<8x8x4xf32>
    %c0_53 = arith.constant 0 : index
    %c2_54 = arith.constant 2 : index
    %c0_55 = arith.constant 0 : index
    %c1_56 = arith.constant 1 : index
    %c0_57 = arith.constant 0 : index
    %58 = vector.load %arg1[%c0_53, %c2_54, %c0_55, %c1_56, %c0_57] : memref<1x4x9x9x4xf32, #tpu.memory_space<vmem>>, vector<1x1x8x8x4xf32>
    %59 = vector.shape_cast %58 : vector<1x1x8x8x4xf32> to vector<8x8x4xf32>
    %60 = vector.extract_strided_slice %16 {offsets = [5, 0], sizes = [1, 4], strides = [1, 1]} : vector<9x4xf32> to vector<1x4xf32>
    %61 = vector.shape_cast %60 : vector<1x4xf32> to vector<4xf32>
    %62 = vector.shape_cast %61 : vector<4xf32> to vector<1x1x4xf32>
    %63 = vector.broadcast %62 : vector<1x1x4xf32> to vector<8x8x4xf32>
    %64 = arith.mulf %59, %63 : vector<8x8x4xf32>
    %65 = arith.addf %57, %64 : vector<8x8x4xf32>
    %c0_58 = arith.constant 0 : index
    %c0_59 = arith.constant 0 : index
    %c1_60 = arith.constant 1 : index
    %c0_61 = arith.constant 0 : index
    %c0_62 = arith.constant 0 : index
    %66 = vector.load %arg1[%c0_58, %c0_59, %c1_60, %c0_61, %c0_62] : memref<1x4x9x9x4xf32, #tpu.memory_space<vmem>>, vector<1x1x8x8x4xf32>
    %67 = vector.shape_cast %66 : vector<1x1x8x8x4xf32> to vector<8x8x4xf32>
    %68 = vector.extract_strided_slice %16 {offsets = [6, 0], sizes = [1, 4], strides = [1, 1]} : vector<9x4xf32> to vector<1x4xf32>
    %69 = vector.shape_cast %68 : vector<1x4xf32> to vector<4xf32>
    %70 = vector.shape_cast %69 : vector<4xf32> to vector<1x1x4xf32>
    %71 = vector.broadcast %70 : vector<1x1x4xf32> to vector<8x8x4xf32>
    %72 = arith.mulf %67, %71 : vector<8x8x4xf32>
    %73 = arith.addf %65, %72 : vector<8x8x4xf32>
    %c0_63 = arith.constant 0 : index
    %c1_64 = arith.constant 1 : index
    %c1_65 = arith.constant 1 : index
    %c0_66 = arith.constant 0 : index
    %c0_67 = arith.constant 0 : index
    %74 = vector.load %arg1[%c0_63, %c1_64, %c1_65, %c0_66, %c0_67] : memref<1x4x9x9x4xf32, #tpu.memory_space<vmem>>, vector<1x1x8x8x4xf32>
    %75 = vector.shape_cast %74 : vector<1x1x8x8x4xf32> to vector<8x8x4xf32>
    %76 = vector.extract_strided_slice %16 {offsets = [7, 0], sizes = [1, 4], strides = [1, 1]} : vector<9x4xf32> to vector<1x4xf32>
    %77 = vector.shape_cast %76 : vector<1x4xf32> to vector<4xf32>
    %78 = vector.shape_cast %77 : vector<4xf32> to vector<1x1x4xf32>
    %79 = vector.broadcast %78 : vector<1x1x4xf32> to vector<8x8x4xf32>
    %80 = arith.mulf %75, %79 : vector<8x8x4xf32>
    %81 = arith.addf %73, %80 : vector<8x8x4xf32>
    %c0_68 = arith.constant 0 : index
    %c0_69 = arith.constant 0 : index
    %c1_70 = arith.constant 1 : index
    %c1_71 = arith.constant 1 : index
    %c0_72 = arith.constant 0 : index
    %82 = vector.load %arg1[%c0_68, %c0_69, %c1_70, %c1_71, %c0_72] : memref<1x4x9x9x4xf32, #tpu.memory_space<vmem>>, vector<1x1x8x8x4xf32>
    %83 = vector.shape_cast %82 : vector<1x1x8x8x4xf32> to vector<8x8x4xf32>
    %84 = vector.extract_strided_slice %16 {offsets = [8, 0], sizes = [1, 4], strides = [1, 1]} : vector<9x4xf32> to vector<1x4xf32>
    %85 = vector.shape_cast %84 : vector<1x4xf32> to vector<4xf32>
    %86 = vector.shape_cast %85 : vector<4xf32> to vector<1x1x4xf32>
    %87 = vector.broadcast %86 : vector<1x1x4xf32> to vector<8x8x4xf32>
    %88 = arith.mulf %83, %87 : vector<8x8x4xf32>
    %89 = arith.addf %81, %88 : vector<8x8x4xf32>
    %90 = vector.shape_cast %89 : vector<8x8x4xf32> to vector<64x4xf32>
    %c0_73 = arith.constant 0 : index
    %c0_74 = arith.constant 0 : index
    %c0_75 = arith.constant 0 : index
    %91 = vector.load %arg7[%c0_73, %c0_74, %c0_75] : memref<10x10x4xf32, #tpu.memory_space<vmem>>, vector<8x8x4xf32>
    %92 = vector.extract_strided_slice %17 {offsets = [0, 0], sizes = [1, 4], strides = [1, 1]} : vector<9x4xf32> to vector<1x4xf32>
    %93 = vector.shape_cast %92 : vector<1x4xf32> to vector<4xf32>
    %94 = vector.shape_cast %93 : vector<4xf32> to vector<1x1x4xf32>
    %95 = vector.broadcast %94 : vector<1x1x4xf32> to vector<8x8x4xf32>
    %96 = arith.mulf %91, %95 : vector<8x8x4xf32>
    %c0_76 = arith.constant 0 : index
    %c1_77 = arith.constant 1 : index
    %c0_78 = arith.constant 0 : index
    %97 = vector.load %arg7[%c0_76, %c1_77, %c0_78] : memref<10x10x4xf32, #tpu.memory_space<vmem>>, vector<8x8x4xf32>
    %98 = vector.extract_strided_slice %17 {offsets = [1, 0], sizes = [1, 4], strides = [1, 1]} : vector<9x4xf32> to vector<1x4xf32>
    %99 = vector.shape_cast %98 : vector<1x4xf32> to vector<4xf32>
    %100 = vector.shape_cast %99 : vector<4xf32> to vector<1x1x4xf32>
    %101 = vector.broadcast %100 : vector<1x1x4xf32> to vector<8x8x4xf32>
    %102 = arith.mulf %97, %101 : vector<8x8x4xf32>
    %103 = arith.addf %96, %102 : vector<8x8x4xf32>
    %c0_79 = arith.constant 0 : index
    %c2_80 = arith.constant 2 : index
    %c0_81 = arith.constant 0 : index
    %104 = vector.load %arg7[%c0_79, %c2_80, %c0_81] : memref<10x10x4xf32, #tpu.memory_space<vmem>>, vector<8x8x4xf32>
    %105 = vector.extract_strided_slice %17 {offsets = [2, 0], sizes = [1, 4], strides = [1, 1]} : vector<9x4xf32> to vector<1x4xf32>
    %106 = vector.shape_cast %105 : vector<1x4xf32> to vector<4xf32>
    %107 = vector.shape_cast %106 : vector<4xf32> to vector<1x1x4xf32>
    %108 = vector.broadcast %107 : vector<1x1x4xf32> to vector<8x8x4xf32>
    %109 = arith.mulf %104, %108 : vector<8x8x4xf32>
    %110 = arith.addf %103, %109 : vector<8x8x4xf32>
    %c1_82 = arith.constant 1 : index
    %c0_83 = arith.constant 0 : index
    %c0_84 = arith.constant 0 : index
    %111 = vector.load %arg7[%c1_82, %c0_83, %c0_84] : memref<10x10x4xf32, #tpu.memory_space<vmem>>, vector<8x8x4xf32>
    %112 = vector.extract_strided_slice %17 {offsets = [3, 0], sizes = [1, 4], strides = [1, 1]} : vector<9x4xf32> to vector<1x4xf32>
    %113 = vector.shape_cast %112 : vector<1x4xf32> to vector<4xf32>
    %114 = vector.shape_cast %113 : vector<4xf32> to vector<1x1x4xf32>
    %115 = vector.broadcast %114 : vector<1x1x4xf32> to vector<8x8x4xf32>
    %116 = arith.mulf %111, %115 : vector<8x8x4xf32>
    %117 = arith.addf %110, %116 : vector<8x8x4xf32>
    %c1_85 = arith.constant 1 : index
    %c1_86 = arith.constant 1 : index
    %c0_87 = arith.constant 0 : index
    %118 = vector.load %arg7[%c1_85, %c1_86, %c0_87] : memref<10x10x4xf32, #tpu.memory_space<vmem>>, vector<8x8x4xf32>
    %119 = vector.extract_strided_slice %17 {offsets = [4, 0], sizes = [1, 4], strides = [1, 1]} : vector<9x4xf32> to vector<1x4xf32>
    %120 = vector.shape_cast %119 : vector<1x4xf32> to vector<4xf32>
    %121 = vector.shape_cast %120 : vector<4xf32> to vector<1x1x4xf32>
    %122 = vector.broadcast %121 : vector<1x1x4xf32> to vector<8x8x4xf32>
    %123 = arith.mulf %118, %122 : vector<8x8x4xf32>
    %124 = arith.addf %117, %123 : vector<8x8x4xf32>
    %c1_88 = arith.constant 1 : index
    %c2_89 = arith.constant 2 : index
    %c0_90 = arith.constant 0 : index
    %125 = vector.load %arg7[%c1_88, %c2_89, %c0_90] : memref<10x10x4xf32, #tpu.memory_space<vmem>>, vector<8x8x4xf32>
    %126 = vector.extract_strided_slice %17 {offsets = [5, 0], sizes = [1, 4], strides = [1, 1]} : vector<9x4xf32> to vector<1x4xf32>
    %127 = vector.shape_cast %126 : vector<1x4xf32> to vector<4xf32>
    %128 = vector.shape_cast %127 : vector<4xf32> to vector<1x1x4xf32>
    %129 = vector.broadcast %128 : vector<1x1x4xf32> to vector<8x8x4xf32>
    %130 = arith.mulf %125, %129 : vector<8x8x4xf32>
    %131 = arith.addf %124, %130 : vector<8x8x4xf32>
    %c2_91 = arith.constant 2 : index
    %c0_92 = arith.constant 0 : index
    %c0_93 = arith.constant 0 : index
    %132 = vector.load %arg7[%c2_91, %c0_92, %c0_93] : memref<10x10x4xf32, #tpu.memory_space<vmem>>, vector<8x8x4xf32>
    %133 = vector.extract_strided_slice %17 {offsets = [6, 0], sizes = [1, 4], strides = [1, 1]} : vector<9x4xf32> to vector<1x4xf32>
    %134 = vector.shape_cast %133 : vector<1x4xf32> to vector<4xf32>
    %135 = vector.shape_cast %134 : vector<4xf32> to vector<1x1x4xf32>
    %136 = vector.broadcast %135 : vector<1x1x4xf32> to vector<8x8x4xf32>
    %137 = arith.mulf %132, %136 : vector<8x8x4xf32>
    %138 = arith.addf %131, %137 : vector<8x8x4xf32>
    %c2_94 = arith.constant 2 : index
    %c1_95 = arith.constant 1 : index
    %c0_96 = arith.constant 0 : index
    %139 = vector.load %arg7[%c2_94, %c1_95, %c0_96] : memref<10x10x4xf32, #tpu.memory_space<vmem>>, vector<8x8x4xf32>
    %140 = vector.extract_strided_slice %17 {offsets = [7, 0], sizes = [1, 4], strides = [1, 1]} : vector<9x4xf32> to vector<1x4xf32>
    %141 = vector.shape_cast %140 : vector<1x4xf32> to vector<4xf32>
    %142 = vector.shape_cast %141 : vector<4xf32> to vector<1x1x4xf32>
    %143 = vector.broadcast %142 : vector<1x1x4xf32> to vector<8x8x4xf32>
    %144 = arith.mulf %139, %143 : vector<8x8x4xf32>
    %145 = arith.addf %138, %144 : vector<8x8x4xf32>
    %c2_97 = arith.constant 2 : index
    %c2_98 = arith.constant 2 : index
    %c0_99 = arith.constant 0 : index
    %146 = vector.load %arg7[%c2_97, %c2_98, %c0_99] : memref<10x10x4xf32, #tpu.memory_space<vmem>>, vector<8x8x4xf32>
    %147 = vector.extract_strided_slice %17 {offsets = [8, 0], sizes = [1, 4], strides = [1, 1]} : vector<9x4xf32> to vector<1x4xf32>
    %148 = vector.shape_cast %147 : vector<1x4xf32> to vector<4xf32>
    %149 = vector.shape_cast %148 : vector<4xf32> to vector<1x1x4xf32>
    %150 = vector.broadcast %149 : vector<1x1x4xf32> to vector<8x8x4xf32>
    %151 = arith.mulf %146, %150 : vector<8x8x4xf32>
    %152 = arith.addf %145, %151 : vector<8x8x4xf32>
    %153 = vector.shape_cast %152 : vector<8x8x4xf32> to vector<64x4xf32>
    %cst_100 = arith.constant dense<0.000000e+00> : vector<4xf32>
    %154 = vector.multi_reduction <add>, %90, %cst_100 [0] : vector<64x4xf32> to vector<4xf32>
    %155 = vector.shape_cast %154 : vector<4xf32> to vector<1x4xf32>
    %156 = arith.addf %18, %155 : vector<1x4xf32>
    %157 = arith.mulf %90, %90 : vector<64x4xf32>
    %cst_101 = arith.constant dense<0.000000e+00> : vector<4xf32>
    %158 = vector.multi_reduction <add>, %157, %cst_101 [0] : vector<64x4xf32> to vector<4xf32>
    %159 = vector.shape_cast %158 : vector<4xf32> to vector<1x4xf32>
    %160 = arith.addf %18, %159 : vector<1x4xf32>
    %cst_102 = arith.constant dense<0.000000e+00> : vector<4xf32>
    %161 = vector.multi_reduction <add>, %153, %cst_102 [0] : vector<64x4xf32> to vector<4xf32>
    %162 = vector.shape_cast %161 : vector<4xf32> to vector<1x4xf32>
    %163 = arith.addf %18, %162 : vector<1x4xf32>
    %164 = arith.mulf %153, %153 : vector<64x4xf32>
    %cst_103 = arith.constant dense<0.000000e+00> : vector<4xf32>
    %165 = vector.multi_reduction <add>, %164, %cst_103 [0] : vector<64x4xf32> to vector<4xf32>
    %166 = vector.shape_cast %165 : vector<4xf32> to vector<1x4xf32>
    %167 = arith.addf %18, %166 : vector<1x4xf32>
    %cst_104 = arith.constant 1.562500e-02 : f32
    %168 = vector.broadcast %cst_104 : f32 to vector<1x4xf32>
    %169 = arith.mulf %156, %168 : vector<1x4xf32>
    %cst_105 = arith.constant 1.562500e-02 : f32
    %170 = vector.broadcast %cst_105 : f32 to vector<1x4xf32>
    %171 = arith.mulf %160, %170 : vector<1x4xf32>
    %172 = arith.mulf %169, %169 : vector<1x4xf32>
    %173 = arith.subf %171, %172 : vector<1x4xf32>
    %cst_106 = arith.constant 0.000000e+00 : f32
    %174 = vector.broadcast %cst_106 : f32 to vector<1x4xf32>
    %175 = arith.maximumf %173, %174 : vector<1x4xf32>
    %cst_107 = arith.constant 9.99999974E-6 : f32
    %176 = vector.broadcast %cst_107 : f32 to vector<1x4xf32>
    %177 = arith.addf %175, %176 : vector<1x4xf32>
    %178 = math.rsqrt %177 : vector<1x4xf32>
    %cst_108 = arith.constant 1.562500e-02 : f32
    %179 = vector.broadcast %cst_108 : f32 to vector<1x4xf32>
    %180 = arith.mulf %163, %179 : vector<1x4xf32>
    %cst_109 = arith.constant 1.562500e-02 : f32
    %181 = vector.broadcast %cst_109 : f32 to vector<1x4xf32>
    %182 = arith.mulf %167, %181 : vector<1x4xf32>
    %183 = arith.mulf %180, %180 : vector<1x4xf32>
    %184 = arith.subf %182, %183 : vector<1x4xf32>
    %cst_110 = arith.constant 0.000000e+00 : f32
    %185 = vector.broadcast %cst_110 : f32 to vector<1x4xf32>
    %186 = arith.maximumf %184, %185 : vector<1x4xf32>
    %cst_111 = arith.constant 9.99999974E-6 : f32
    %187 = vector.broadcast %cst_111 : f32 to vector<1x4xf32>
    %188 = arith.addf %186, %187 : vector<1x4xf32>
    %189 = math.rsqrt %188 : vector<1x4xf32>
    %c0_112 = arith.constant 0 : index
    %c0_113 = arith.constant 0 : index
    %190 = vector.load %arg3[%c0_112, %c0_113] : memref<4x4xf32, #tpu.memory_space<vmem>>, vector<4x4xf32>
    %c0_114 = arith.constant 0 : index
    %c0_115 = arith.constant 0 : index
    %191 = vector.load %arg5[%c0_114, %c0_115] : memref<4x4xf32, #tpu.memory_space<vmem>>, vector<4x4xf32>
    %192 = vector.broadcast %169 : vector<1x4xf32> to vector<64x4xf32>
    %193 = arith.subf %90, %192 : vector<64x4xf32>
    %194 = vector.broadcast %178 : vector<1x4xf32> to vector<64x4xf32>
    %195 = arith.mulf %193, %194 : vector<64x4xf32>
    %cst_116 = arith.constant 2.000000e-01 : f32
    %196 = vector.broadcast %cst_116 : f32 to vector<64x4xf32>
    %197 = arith.mulf %196, %195 : vector<64x4xf32>
    %198 = arith.maximumf %195, %197 : vector<64x4xf32>
    %199 = vector.broadcast %180 : vector<1x4xf32> to vector<64x4xf32>
    %200 = arith.subf %153, %199 : vector<64x4xf32>
    %201 = vector.broadcast %189 : vector<1x4xf32> to vector<64x4xf32>
    %202 = arith.mulf %200, %201 : vector<64x4xf32>
    %cst_117 = arith.constant 2.000000e-01 : f32
    %203 = vector.broadcast %cst_117 : f32 to vector<64x4xf32>
    %204 = arith.mulf %203, %202 : vector<64x4xf32>
    %205 = arith.maximumf %202, %204 : vector<64x4xf32>
    %cst_118 = arith.constant dense<0.000000e+00> : vector<64x4xf32>
    %206 = tpu.matmul %198, %190, %cst_118 {dimension_numbers = #tpu.dot_dimension_numbers<[1], [0], [0], [1], [0, 0, 1, 1], [], []>, precision = #tpu.contract_precision<fp32>} : vector<64x4xf32>, vector<4x4xf32>, vector<64x4xf32> -> vector<64x4xf32>
    %cst_119 = arith.constant dense<0.000000e+00> : vector<64x4xf32>
    %207 = tpu.matmul %205, %191, %cst_119 {dimension_numbers = #tpu.dot_dimension_numbers<[1], [0], [0], [1], [0, 0, 1, 1], [], []>, precision = #tpu.contract_precision<fp32>} : vector<64x4xf32>, vector<4x4xf32>, vector<64x4xf32> -> vector<64x4xf32>
    %c0_120 = arith.constant 0 : index
    %c0_121 = arith.constant 0 : index
    %208 = vector.load %arg8[%c0_120, %c0_121] : memref<64x4xf32, #tpu.memory_space<vmem>>, vector<64x4xf32>
    tpu.vector_store %arg8[%c0_120, %c0_121], %206 {strides = array<i32>} : memref<64x4xf32, #tpu.memory_space<vmem>>, vector<64x4xf32>,
    %c0_122 = arith.constant 0 : index
    %c0_123 = arith.constant 0 : index
    %209 = vector.load %arg9[%c0_122, %c0_123] : memref<64x4xf32, #tpu.memory_space<vmem>>, vector<64x4xf32>
    tpu.vector_store %arg9[%c0_122, %c0_123], %207 {strides = array<i32>} : memref<64x4xf32, #tpu.memory_space<vmem>>, vector<64x4xf32>,
    %cst_124 = arith.constant dense<0.000000e+00> : vector<4xf32>
    %210 = vector.multi_reduction <add>, %206, %cst_124 [0] : vector<64x4xf32> to vector<4xf32>
    %211 = vector.shape_cast %210 : vector<4xf32> to vector<1x4xf32>
    %212 = arith.addf %18, %211 : vector<1x4xf32>
    %213 = arith.mulf %206, %206 : vector<64x4xf32>
    %cst_125 = arith.constant dense<0.000000e+00> : vector<4xf32>
    %214 = vector.multi_reduction <add>, %213, %cst_125 [0] : vector<64x4xf32> to vector<4xf32>
    %215 = vector.shape_cast %214 : vector<4xf32> to vector<1x4xf32>
    %216 = arith.addf %18, %215 : vector<1x4xf32>
    %cst_126 = arith.constant dense<0.000000e+00> : vector<4xf32>
    %217 = vector.multi_reduction <add>, %207, %cst_126 [0] : vector<64x4xf32> to vector<4xf32>
    %218 = vector.shape_cast %217 : vector<4xf32> to vector<1x4xf32>
    %219 = arith.addf %18, %218 : vector<1x4xf32>
    %220 = arith.mulf %207, %207 : vector<64x4xf32>
    %cst_127 = arith.constant dense<0.000000e+00> : vector<4xf32>
    %221 = vector.multi_reduction <add>, %220, %cst_127 [0] : vector<64x4xf32> to vector<4xf32>
    %222 = vector.shape_cast %221 : vector<4xf32> to vector<1x4xf32>
    %223 = arith.addf %18, %222 : vector<1x4xf32>
    %cst_128 = arith.constant 1.562500e-02 : f32
    %224 = vector.broadcast %cst_128 : f32 to vector<1x4xf32>
    %225 = arith.mulf %212, %224 : vector<1x4xf32>
    %cst_129 = arith.constant 1.562500e-02 : f32
    %226 = vector.broadcast %cst_129 : f32 to vector<1x4xf32>
    %227 = arith.mulf %216, %226 : vector<1x4xf32>
    %228 = arith.mulf %225, %225 : vector<1x4xf32>
    %229 = arith.subf %227, %228 : vector<1x4xf32>
    %cst_130 = arith.constant 0.000000e+00 : f32
    %230 = vector.broadcast %cst_130 : f32 to vector<1x4xf32>
    %231 = arith.maximumf %229, %230 : vector<1x4xf32>
    %cst_131 = arith.constant 9.99999974E-6 : f32
    %232 = vector.broadcast %cst_131 : f32 to vector<1x4xf32>
    %233 = arith.addf %231, %232 : vector<1x4xf32>
    %234 = math.rsqrt %233 : vector<1x4xf32>
    %cst_132 = arith.constant 1.562500e-02 : f32
    %235 = vector.broadcast %cst_132 : f32 to vector<1x4xf32>
    %236 = arith.mulf %219, %235 : vector<1x4xf32>
    %cst_133 = arith.constant 1.562500e-02 : f32
    %237 = vector.broadcast %cst_133 : f32 to vector<1x4xf32>
    %238 = arith.mulf %223, %237 : vector<1x4xf32>
    %239 = arith.mulf %236, %236 : vector<1x4xf32>
    %240 = arith.subf %238, %239 : vector<1x4xf32>
    %cst_134 = arith.constant 0.000000e+00 : f32
    %241 = vector.broadcast %cst_134 : f32 to vector<1x4xf32>
    %242 = arith.maximumf %240, %241 : vector<1x4xf32>
    %cst_135 = arith.constant 9.99999974E-6 : f32
    %243 = vector.broadcast %cst_135 : f32 to vector<1x4xf32>
    %244 = arith.addf %242, %243 : vector<1x4xf32>
    %245 = math.rsqrt %244 : vector<1x4xf32>
    %c0_136 = arith.constant 0 : index
    %c0_137 = arith.constant 0 : index
    %246 = vector.load %arg8[%c0_136, %c0_137] : memref<64x4xf32, #tpu.memory_space<vmem>>, vector<64x4xf32>
    %247 = vector.broadcast %225 : vector<1x4xf32> to vector<64x4xf32>
    %248 = arith.subf %246, %247 : vector<64x4xf32>
    %249 = vector.broadcast %234 : vector<1x4xf32> to vector<64x4xf32>
    %250 = arith.mulf %248, %249 : vector<64x4xf32>
    %cst_138 = arith.constant 2.000000e-01 : f32
    %251 = vector.broadcast %cst_138 : f32 to vector<64x4xf32>
    %252 = arith.mulf %251, %250 : vector<64x4xf32>
    %253 = arith.maximumf %250, %252 : vector<64x4xf32>
    %c0_139 = arith.constant 0 : index
    %c0_140 = arith.constant 0 : index
    %254 = vector.load %arg9[%c0_139, %c0_140] : memref<64x4xf32, #tpu.memory_space<vmem>>, vector<64x4xf32>
    %255 = vector.broadcast %236 : vector<1x4xf32> to vector<64x4xf32>
    %256 = arith.subf %254, %255 : vector<64x4xf32>
    %257 = vector.broadcast %245 : vector<1x4xf32> to vector<64x4xf32>
    %258 = arith.mulf %256, %257 : vector<64x4xf32>
    %cst_141 = arith.constant 2.000000e-01 : f32
    %259 = vector.broadcast %cst_141 : f32 to vector<64x4xf32>
    %260 = arith.mulf %259, %258 : vector<64x4xf32>
    %261 = arith.maximumf %258, %260 : vector<64x4xf32>
    %262 = arith.addf %253, %261 : vector<64x4xf32>
    %c0_142 = arith.constant 0 : index
    %c0_143 = arith.constant 0 : index
    %c0_144 = arith.constant 0 : index
    %263 = vector.load %arg6[%c0_142, %c0_143, %c0_144] : memref<1x64x4xf32, #tpu.memory_space<vmem>>, vector<1x64x4xf32>
    %264 = vector.shape_cast %263 : vector<1x64x4xf32> to vector<64x4xf32>
    %265 = vector.shape_cast %262 : vector<64x4xf32> to vector<1x64x4xf32>
    tpu.vector_store %arg6[%c0_142, %c0_143, %c0_144], %265 {strides = array<i32>} : memref<1x64x4xf32, #tpu.memory_space<vmem>>, vector<1x64x4xf32>,
    return
  }
  func.func @transform_0(%arg0: i32) -> (i32, i32, i32, i32, i32) {
    %c0_i32 = arith.constant 0 : i32
    %c0_i32_0 = arith.constant 0 : i32
    %c0_i32_1 = arith.constant 0 : i32
    %c0_i32_2 = arith.constant 0 : i32
    %c0_i32_3 = arith.constant 0 : i32
    return %arg0, %c0_i32, %c0_i32_0, %c0_i32_1, %c0_i32_2 : i32, i32, i32, i32, i32
  }
  func.func @transform_1(%arg0: i32) -> (i32, i32) {
    %c0_i32 = arith.constant 0 : i32
    %c0_i32_0 = arith.constant 0 : i32
    %c0_i32_1 = arith.constant 0 : i32
    return %c0_i32, %c0_i32_0 : i32, i32
  }
  func.func @transform_2(%arg0: i32) -> (i32, i32) {
    %c0_i32 = arith.constant 0 : i32
    %c0_i32_0 = arith.constant 0 : i32
    %c0_i32_1 = arith.constant 0 : i32
    return %c0_i32, %c0_i32_0 : i32, i32
  }
  func.func @transform_3(%arg0: i32) -> (i32, i32) {
    %c0_i32 = arith.constant 0 : i32
    %c0_i32_0 = arith.constant 0 : i32
    %c0_i32_1 = arith.constant 0 : i32
    return %c0_i32, %c0_i32_0 : i32, i32
  }
  func.func @transform_4(%arg0: i32) -> (i32, i32) {
    %c0_i32 = arith.constant 0 : i32
    %c0_i32_0 = arith.constant 0 : i32
    %c0_i32_1 = arith.constant 0 : i32
    return %c0_i32, %c0_i32_0 : i32, i32
  }
  func.func @transform_5(%arg0: i32) -> (i32, i32, i32) {
    %c0_i32 = arith.constant 0 : i32
    %c0_i32_0 = arith.constant 0 : i32
    %c0_i32_1 = arith.constant 0 : i32
    return %arg0, %c0_i32, %c0_i32_0 : i32, i32, i32
  }
}

</mosaic_0001>

<llo_original>
// kernel: down_conv.1
$region0: #{down_conv.1}
  #allocation0 [shape = 'u32[]', space=smem, size = 0x4, offset = 0x4, fixed_abs, tag = 'smem constant byte address 0x4 - core index']
  #allocation1 [shape = 'u32[144,128]{1,0:T(1,128)}', space=vmem, size = 0x12000, scoped, tag = 'internal scratch']
  #allocation2 [shape = 'f32[10,10,4]{2,1,0:T(8,128)}', space=vmem, size = 0x14000, scoped, tag = 'scratch operand']
  #allocation3 [shape = 'f32[64,4]{1,0:T(8,128)}', space=vmem, size = 0x8000, scoped, tag = 'scratch operand']
  #allocation4 [shape = 'f32[64,4]{1,0:T(8,128)}', space=vmem, size = 0x8000, scoped, tag = 'scratch operand']
  %s0 = inlined_call_operand.vmem [shape: f32[2,4,9,9,4], index: 0, kind: input, shape index: {}]
  %s1 = inlined_call_operand.vmem [shape: f32[9,4], index: 1, kind: input, shape index: {}]
  %s2 = inlined_call_operand.vmem [shape: f32[4,4], index: 2, kind: input, shape index: {}]
  %s3 = inlined_call_operand.vmem [shape: f32[9,4], index: 3, kind: input, shape index: {}]
  %s4 = inlined_call_operand.vmem [shape: f32[4,4], index: 4, kind: input, shape index: {}]
  %s5 = inlined_call_operand.vmem [shape: f32[2,64,4], index: 5, kind: output, shape index: {}]
  %s6 = sld [smem:[#allocation0]]
  $region53: #{down_conv.1} parent=0
    _
  %s8 = ssub.s32 1, %s6
  %s9 = scalar_select 0, %s8, %s6
  loop: start=0, step=1, limit=4
  $region2: #{down_conv.1} parent=0 // loop_pre_header
    _
  $region3: #{down_conv.1} parent=0 // loop_header
    %s11 = sphi 0, %s15
    %p12 = scmp.ge.s32.totalorder %s11, 4
    %s21 = sphi 0, %s23
    %s24 = sphi 0, %s21
    %s25 = sphi 0, %s24
    %s41 = sphi 0, %s25
    %s45 = sphi 0, %s45
    %s47 = sphi 0, %s45
    %s48 = sphi 0, %s47
    %s62 = sphi 0, %s48
    %s66 = sphi 0, %s66
    %s68 = sphi 0, %s66
    %s69 = sphi 0, %s68
    %s83 = sphi 0, %s69
    %s87 = sphi 0, %s87
    %s89 = sphi 0, %s87
    %s90 = sphi 0, %s89
    %s104 = sphi 0, %s90
    %s108 = sphi 0, %s108
    %s110 = sphi 0, %s108
    %s111 = sphi 0, %s110
    %s125 = sphi 0, %s111
    %s131 = sphi 0, %s133
    %s134 = sphi 0, %s131
    %s135 = sphi 0, %s134
    %s151 = sphi 0, %s135
  $region4: #{down_conv.1} parent=0 // loop_header_branch
    %14 = sbr.rel (%p12) target = $region8
  $region5: #{down_conv.1} parent=0 // loop_body
    %s16 = ssub.s32 %s11, 1
    %s17 = ssub.s32 %s11, 2
    %s18 = sadd.s32 %s11, 1
    %s19 = ssub.s32 %s11, %s18
    %p20 = scmp.eq.s32.totalorder %s19, 0
    %s22 = sadd.s32 %s21, 1
    %s23 = scalar_select %p20, %s21, %s22
    %p26 = pneg %p20
    %p27 = scmp.eq.s32.totalorder %s11, 1
    %p28 = por %p26, %p27
    %p29 = scmp.ne.s32.totalorder %s21, %s24
    %p30 = scmp.eq.s32.totalorder %s11, 0
    %p31 = por %p29, %p30
    %p32 = scmp.ne.s32.totalorder %s21, %s24
    %p33 = scmp.eq.s32.totalorder %s16, 1
    %p34 = por %p32, %p33
    %p35 = scmp.ne.s32.totalorder %s24, %s25
    %p36 = scmp.eq.s32.totalorder %s16, 0
    %p37 = por %p35, %p36
    %p38 = scmp.ne.s32.totalorder %s24, %s25
    %p39 = scmp.eq.s32.totalorder %s17, 1
    %p40 = por %p38, %p39
    %p42 = scmp.ne.s32.totalorder %s25, %s41
    %p43 = scmp.eq.s32.totalorder %s17, 0
    %p44 = por %p42, %p43
    %s46 = sadd.s32 %s45, 1
    %p49 = scmp.eq.s32.totalorder %s11, 1
    %p50 = scmp.ne.s32.totalorder %s45, %s47
    %p51 = scmp.eq.s32.totalorder %s11, 0
    %p52 = por %p50, %p51
    %p53 = scmp.ne.s32.totalorder %s45, %s47
    %p54 = scmp.eq.s32.totalorder %s16, 1
    %p55 = por %p53, %p54
    %p56 = scmp.ne.s32.totalorder %s47, %s48
    %p57 = scmp.eq.s32.totalorder %s16, 0
    %p58 = por %p56, %p57
    %p59 = scmp.ne.s32.totalorder %s47, %s48
    %p60 = scmp.eq.s32.totalorder %s17, 1
    %p61 = por %p59, %p60
    %p63 = scmp.ne.s32.totalorder %s48, %s62
    %p64 = scmp.eq.s32.totalorder %s17, 0
    %p65 = por %p63, %p64
    %s67 = sadd.s32 %s66, 1
    %p70 = scmp.eq.s32.totalorder %s11, 1
    %p71 = scmp.ne.s32.totalorder %s66, %s68
    %p72 = scmp.eq.s32.totalorder %s11, 0
    %p73 = por %p71, %p72
    %p74 = scmp.ne.s32.totalorder %s66, %s68
    %p75 = scmp.eq.s32.totalorder %s16, 1
    %p76 = por %p74, %p75
    %p77 = scmp.ne.s32.totalorder %s68, %s69
    %p78 = scmp.eq.s32.totalorder %s16, 0
    %p79 = por %p77, %p78
    %p80 = scmp.ne.s32.totalorder %s68, %s69
    %p81 = scmp.eq.s32.totalorder %s17, 1
    %p82 = por %p80, %p81
    %p84 = scmp.ne.s32.totalorder %s69, %s83
    %p85 = scmp.eq.s32.totalorder %s17, 0
    %p86 = por %p84, %p85
    %s88 = sadd.s32 %s87, 1
    %p91 = scmp.eq.s32.totalorder %s11, 1
    %p92 = scmp.ne.s32.totalorder %s87, %s89
    %p93 = scmp.eq.s32.totalorder %s11, 0
    %p94 = por %p92, %p93
    %p95 = scmp.ne.s32.totalorder %s87, %s89
    %p96 = scmp.eq.s32.totalorder %s16, 1
    %p97 = por %p95, %p96
    %p98 = scmp.ne.s32.totalorder %s89, %s90
    %p99 = scmp.eq.s32.totalorder %s16, 0
    %p100 = por %p98, %p99
    %p101 = scmp.ne.s32.totalorder %s89, %s90
    %p102 = scmp.eq.s32.totalorder %s17, 1
    %p103 = por %p101, %p102
    %p105 = scmp.ne.s32.totalorder %s90, %s104
    %p106 = scmp.eq.s32.totalorder %s17, 0
    %p107 = por %p105, %p106
    %s109 = sadd.s32 %s108, 1
    %p112 = scmp.eq.s32.totalorder %s11, 1
    %p113 = scmp.ne.s32.totalorder %s108, %s110
    %p114 = scmp.eq.s32.totalorder %s11, 0
    %p115 = por %p113, %p114
    %p116 = scmp.ne.s32.totalorder %s108, %s110
    %p117 = scmp.eq.s32.totalorder %s16, 1
    %p118 = por %p116, %p117
    %p119 = scmp.ne.s32.totalorder %s110, %s111
    %p120 = scmp.eq.s32.totalorder %s16, 0
    %p121 = por %p119, %p120
    %p122 = scmp.ne.s32.totalorder %s110, %s111
    %p123 = scmp.eq.s32.totalorder %s17, 1
    %p124 = por %p122, %p123
    %p126 = scmp.ne.s32.totalorder %s111, %s125
    %p127 = scmp.eq.s32.totalorder %s17, 0
    %p128 = por %p126, %p127
    %s129 = ssub.s32 %s11, %s18
    %p130 = scmp.eq.s32.totalorder %s129, 0
    %s132 = sadd.s32 %s131, 1
    %s133 = scalar_select %p130, %s131, %s132
    %p136 = pneg %p130
    %p137 = scmp.eq.s32.totalorder %s11, 1
    %p138 = por %p136, %p137
    %p139 = scmp.ne.s32.totalorder %s131, %s134
    %p140 = scmp.eq.s32.totalorder %s11, 0
    %p141 = por %p139, %p140
    %p142 = scmp.ne.s32.totalorder %s131, %s134
    %p143 = scmp.eq.s32.totalorder %s16, 1
    %p144 = por %p142, %p143
    %p145 = scmp.ne.s32.totalorder %s134, %s135
    %p146 = scmp.eq.s32.totalorder %s16, 0
    %p147 = por %p145, %p146
    %p148 = scmp.ne.s32.totalorder %s134, %s135
    %p149 = scmp.eq.s32.totalorder %s17, 1
    %p150 = por %p148, %p149
    %p152 = scmp.ne.s32.totalorder %s135, %s151
    %p153 = scmp.eq.s32.totalorder %s17, 0
    %p154 = por %p152, %p153
    %p155 = scmp.le.s32.totalorder 1, %s11
    %p156 = scmp.lt.s32.totalorder %s11, 3
    %p157 = pnand %p155, %p156
    %p158 = pneg %p157
    // Predicated region
    $region9: #{down_conv.1} parent=5 // pred_check
      _
    $region10: #{down_conv.1} parent=5 // pred_check_branch
      %160 = sbr.rel (%p157) target = $region12
    $region11: #{down_conv.1} parent=5 // pred_region
      %s161 = ssub.s32 %s11, 1
      // Predicated region
      $region13: #{down_conv.1} parent=11 // pred_check
        %p162 = pneg %p58
      $region14: #{down_conv.1} parent=11 // pred_check_branch
        %164 = sbr.rel (%p162) target = $region16
      $region15: #{down_conv.1} parent=11 // pred_region
        _
      $region16: #{down_conv.1} parent=11 // pred_fallthru
        _
      // Predicated region
      $region17: #{down_conv.1} parent=11 // pred_check
        %p165 = pneg %p79
      $region18: #{down_conv.1} parent=11 // pred_check_branch
        %167 = sbr.rel (%p165) target = $region20
      $region19: #{down_conv.1} parent=11 // pred_region
        _
      $region20: #{down_conv.1} parent=11 // pred_fallthru
        _
      // Predicated region
      $region21: #{down_conv.1} parent=11 // pred_check
        %p168 = pneg %p100
      $region22: #{down_conv.1} parent=11 // pred_check_branch
        %170 = sbr.rel (%p168) target = $region24
      $region23: #{down_conv.1} parent=11 // pred_region
        _
      $region24: #{down_conv.1} parent=11 // pred_fallthru
        _
      // Predicated region
      $region25: #{down_conv.1} parent=11 // pred_check
        %p171 = pneg %p121
      $region26: #{down_conv.1} parent=11 // pred_check_branch
        %173 = sbr.rel (%p171) target = $region28
      $region27: #{down_conv.1} parent=11 // pred_region
        _
      $region28: #{down_conv.1} parent=11 // pred_fallthru
        _
    $region12: #{down_conv.1} parent=5 // pred_fallthru
      _
    %p174 = scmp.lt.s32.totalorder %s11, 2
    // Predicated region
    $region29: #{down_conv.1} parent=5 // pred_check
      %p175 = pneg %p174
    $region30: #{down_conv.1} parent=5 // pred_check_branch
      %177 = sbr.rel (%p175) target = $region32
    $region31: #{down_conv.1} parent=5 // pred_region
      // Predicated region
      $region33: #{down_conv.1} parent=31 // pred_check
        %p178 = pneg %p31
      $region34: #{down_conv.1} parent=31 // pred_check_branch
        %180 = sbr.rel (%p178) target = $region36
      $region35: #{down_conv.1} parent=31 // pred_region
        %p181 = scmp.lt.s32.totalorder %s11, 1
        %s182 = scalar_select %p181, %s11, 1
        %s183 = smul.addr %s182, 72
        %s184 = smul.addr %s183, 8
        %s185 = scalar_lea.vmem %s0, %s184
      $region36: #{down_conv.1} parent=31 // pred_fallthru
        _
    $region32: #{down_conv.1} parent=5 // pred_fallthru
      _
    %p186 = scmp.le.s32.totalorder 1, %s11
    %p187 = scmp.lt.s32.totalorder %s11, 3
    %p188 = pnand %p186, %p187
    %p189 = pneg %p188
    // Predicated region
    $region37: #{down_conv.1} parent=5 // pred_check
      _
    $region38: #{down_conv.1} parent=5 // pred_check_branch
      %191 = sbr.rel (%p188) target = $region40
    $region39: #{down_conv.1} parent=5 // pred_region
      %s192 = ssub.s32 %s11, 1
      %p193 = scmp.lt.s32.totalorder %s16, 1
      %s194 = scalar_select %p193, %s16, 1
      %s195 = smul.addr %s194, 72
      %s196 = smul.addr %s195, 8
      %s197 = scalar_lea.vmem %s0, %s196
      %p198 = pneg %p37
      %p199 = pneg %p34
      %p200 = pneg %p58
      %p201 = pneg %p55
      %p202 = pneg %p79
      %p203 = pneg %p76
      %p204 = pneg %p100
      %p205 = pneg %p97
      %p206 = pneg %p121
      %p207 = pneg %p118
      %p208 = pneg %p147
      %p209 = pneg %p144
      %p210 = scmp.lt.s32.totalorder %s16, 1
      %s211 = scalar_select %p210, %s16, 1
      %s212 = smul.addr %s211, 8
      %s213 = smul.addr %s212, 8
      %s214 = scalar_lea.vmem %s5, %s213
      %p215 = scmp.lt.s32.totalorder %s16, 1
      %s216 = scalar_select %p215, %s16, 1
      %s217 = smul.addr %s216, 72
      %s218 = smul.addr %s217, 8
      %s219 = scalar_lea.vmem %s0, %s218
      %p220 = scmp.lt.s32.totalorder %s16, 1
      %s221 = scalar_select %p220, %s16, 1
      %s222 = smul.addr %s221, 8
      %s223 = smul.addr %s222, 8
      %s224 = scalar_lea.vmem %s5, %s223
      %vm225 = vcmask 31744
      %226 = vst.msk [vmem:[#allocation2] sm:$0xff] %vm225, 0.0
      %vm227 = vcmask 25600
      %228 = vst.msk [vmem:[#allocation2 + $0x8] sm:$0x3] %vm227, 0.0
      %229 = vst.msk [vmem:[#allocation2 + $0x10] sm:$0xff] %vm225, 0.0
      %230 = vst.msk [vmem:[#allocation2 + $0x18] sm:$0x3] %vm227, 0.0
      %231 = vst.msk [vmem:[#allocation2 + $0x20] sm:$0xff] %vm225, 0.0
      %232 = vst.msk [vmem:[#allocation2 + $0x28] sm:$0x3] %vm227, 0.0
      %233 = vst.msk [vmem:[#allocation2 + $0x30] sm:$0xff] %vm225, 0.0
      %234 = vst.msk [vmem:[#allocation2 + $0x38] sm:$0x3] %vm227, 0.0
      %235 = vst.msk [vmem:[#allocation2 + $0x40] sm:$0xff] %vm225, 0.0
      %236 = vst.msk [vmem:[#allocation2 + $0x48] sm:$0x3] %vm227, 0.0
      %237 = vst.msk [vmem:[#allocation2 + $0x50] sm:$0xff] %vm225, 0.0
      %238 = vst.msk [vmem:[#allocation2 + $0x58] sm:$0x3] %vm227, 0.0
      %239 = vst.msk [vmem:[#allocation2 + $0x60] sm:$0xff] %vm225, 0.0
      %240 = vst.msk [vmem:[#allocation2 + $0x68] sm:$0x3] %vm227, 0.0
      %241 = vst.msk [vmem:[#allocation2 + $0x70] sm:$0xff] %vm225, 0.0
      %242 = vst.msk [vmem:[#allocation2 + $0x78] sm:$0x3] %vm227, 0.0
      %243 = vst.msk [vmem:[#allocation2 + $0x80] sm:$0xff] %vm225, 0.0
      %244 = vst.msk [vmem:[#allocation2 + $0x88] sm:$0x3] %vm227, 0.0
      %245 = vst.msk [vmem:[#allocation2 + $0x90] sm:$0xff] %vm225, 0.0
      %246 = vst.msk [vmem:[#allocation2 + $0x98] sm:$0x3] %vm227, 0.0
      %s247 = scalar_lea.vmem %s219, 432
      %v248 = vld [vmem:[%s247] sm:$0xff]
      %v249 = vld [vmem:[%s247 + $0x10] sm:$0xff]
      %v250 = vld [vmem:[%s247 + $0x20] sm:$0xff]
      %v251 = vld [vmem:[%s247 + $0x30] sm:$0xff]
      %v252 = vld [vmem:[%s247 + $0x40] sm:$0xff]
      %v253 = vld [vmem:[%s247 + $0x50] sm:$0xff]
      %v254 = vld [vmem:[%s247 + $0x60] sm:$0xff]
      %v255 = vld [vmem:[%s247 + $0x70] sm:$0xff]
      %s256 = scalar_lea.vmem %s219, 288
      %v257 = vld [vmem:[%s256 + $0x1] sm:$0xff]
      %v258 = vld [vmem:[%s256 + $0x11] sm:$0xff]
      %v259 = vld [vmem:[%s256 + $0x21] sm:$0xff]
      %v260 = vld [vmem:[%s256 + $0x31] sm:$0xff]
      %v261 = vld [vmem:[%s256 + $0x41] sm:$0xff]
      %v262 = vld [vmem:[%s256 + $0x51] sm:$0xff]
      %v263 = vld [vmem:[%s256 + $0x61] sm:$0xff]
      %v264 = vld [vmem:[%s256 + $0x71] sm:$0xff]
      %v265 = vadd.f32 %v248, %v257
      %v266 = vadd.f32 %v249, %v258
      %v267 = vadd.f32 %v250, %v259
      %v268 = vadd.f32 %v251, %v260
      %v269 = vadd.f32 %v252, %v261
      %v270 = vadd.f32 %v253, %v262
      %v271 = vadd.f32 %v254, %v263
      %v272 = vadd.f32 %v255, %v264
      %s273 = scalar_lea.vmem %s219, 160
      %v274 = vld [vmem:[%s273] sm:$0xff]
      %v275 = vld [vmem:[%s273 + $0x10] sm:$0xff]
      %v276 = vld [vmem:[%s273 + $0x20] sm:$0xff]
      %v277 = vld [vmem:[%s273 + $0x30] sm:$0xff]
      %v278 = vld [vmem:[%s273 + $0x40] sm:$0xff]
      %v279 = vld [vmem:[%s273 + $0x50] sm:$0xff]
      %v280 = vld [vmem:[%s273 + $0x60] sm:$0xff]
      %v281 = vld [vmem:[%s273 + $0x70] sm:$0xff]
      %v282 = vadd.f32 %v265, %v274
      %v283 = vadd.f32 %v266, %v275
      %v284 = vadd.f32 %v267, %v276
      %v285 = vadd.f32 %v268, %v277
      %v286 = vadd.f32 %v269, %v278
      %v287 = vadd.f32 %v270, %v279
      %v288 = vadd.f32 %v271, %v280
      %v289 = vadd.f32 %v272, %v281
      %s290 = scalar_lea.vmem %s219, 16
      %v291 = vld [vmem:[%s290 + $0x1] sm:$0xff]
      %v292 = vld [vmem:[%s290 + $0x11] sm:$0xff]
      %v293 = vld [vmem:[%s290 + $0x21] sm:$0xff]
      %v294 = vld [vmem:[%s290 + $0x31] sm:$0xff]
      %v295 = vld [vmem:[%s290 + $0x41] sm:$0xff]
      %v296 = vld [vmem:[%s290 + $0x51] sm:$0xff]
      %v297 = vld [vmem:[%s290 + $0x61] sm:$0xff]
      %v298 = vld [vmem:[%s290 + $0x71] sm:$0xff]
      %v299 = vadd.f32 %v282, %v291
      %v300 = vadd.f32 %v283, %v292
      %v301 = vadd.f32 %v284, %v293
      %v302 = vadd.f32 %v285, %v294
      %v303 = vadd.f32 %v286, %v295
      %v304 = vadd.f32 %v287, %v296
      %v305 = vadd.f32 %v288, %v297
      %v306 = vadd.f32 %v289, %v298
      %v307 = vmul.f32 %v299, 0.25
      %v308 = vmul.f32 %v300, 0.25
      %v309 = vmul.f32 %v301, 0.25
      %v310 = vmul.f32 %v302, 0.25
      %v311 = vmul.f32 %v303, 0.25
      %v312 = vmul.f32 %v304, 0.25
      %v313 = vmul.f32 %v305, 0.25
      %v314 = vmul.f32 %v306, 0.25
      %s315 = scalar_lea.vmem [#allocation2], 16
      %316 = vst.msk [vmem:[%s315 + $0x1] sm:$0xff] %vm225, %v307
      %317 = vst.msk [vmem:[%s315 + $0x11] sm:$0xff] %vm225, %v308
      %318 = vst.msk [vmem:[%s315 + $0x21] sm:$0xff] %vm225, %v309
      %319 = vst.msk [vmem:[%s315 + $0x31] sm:$0xff] %vm225, %v310
      %320 = vst.msk [vmem:[%s315 + $0x41] sm:$0xff] %vm225, %v311
      %321 = vst.msk [vmem:[%s315 + $0x51] sm:$0xff] %vm225, %v312
      %322 = vst.msk [vmem:[%s315 + $0x61] sm:$0xff] %vm225, %v313
      %323 = vst.msk [vmem:[%s315 + $0x71] sm:$0xff] %vm225, %v314
      %v324 = vld [vmem:[%s1] sm:$0xff]
      %v325 = vld [vmem:[%s1 + $0x8] sm:$0x1]
      %v326 = vld [vmem:[%s3] sm:$0xff]
      %v327 = vld [vmem:[%s3 + $0x8] sm:$0x1]
      %v328 = vld [vmem:[%s219] sm:$0xff]
      %v329 = vld [vmem:[%s219 + $0x10] sm:$0xff]
      %v330 = vld [vmem:[%s219 + $0x20] sm:$0xff]
      %v331 = vld [vmem:[%s219 + $0x30] sm:$0xff]
      %v332 = vld [vmem:[%s219 + $0x40] sm:$0xff]
      %v333 = vld [vmem:[%s219 + $0x50] sm:$0xff]
      %v334 = vld [vmem:[%s219 + $0x60] sm:$0xff]
      %v335 = vld [vmem:[%s219 + $0x70] sm:$0xff]
      %v336 = vlaneseq
      %v337 = vshrl.u32 %v336, 7
      %v338 = vsub.s32 0, %v337
      %v339 = vrot.slane %v324, %v338
      %v340 = vmul.f32 %v328, %v339
      %v341 = vmul.f32 %v329, %v339
      %v342 = vmul.f32 %v330, %v339
      %v343 = vmul.f32 %v331, %v339
      %v344 = vmul.f32 %v332, %v339
      %v345 = vmul.f32 %v333, %v339
      %v346 = vmul.f32 %v334, %v339
      %v347 = vmul.f32 %v335, %v339
      %s348 = scalar_lea.vmem %s219, 144
      %v349 = vld [vmem:[%s348] sm:$0xff]
      %v350 = vld [vmem:[%s348 + $0x10] sm:$0xff]
      %v351 = vld [vmem:[%s348 + $0x20] sm:$0xff]
      %v352 = vld [vmem:[%s348 + $0x30] sm:$0xff]
      %v353 = vld [vmem:[%s348 + $0x40] sm:$0xff]
      %v354 = vld [vmem:[%s348 + $0x50] sm:$0xff]
      %v355 = vld [vmem:[%s348 + $0x60] sm:$0xff]
      %v356 = vld [vmem:[%s348 + $0x70] sm:$0xff]
      %v357 = vlaneseq
      %v358 = vshrl.u32 %v357, 7
      %v359 = vsub.s32 1, %v358
      %v360 = vrot.slane %v324, %v359
      %v361 = vmul.f32 %v349, %v360
      %v362 = vmul.f32 %v350, %v360
      %v363 = vmul.f32 %v351, %v360
      %v364 = vmul.f32 %v352, %v360
      %v365 = vmul.f32 %v353, %v360
      %v366 = vmul.f32 %v354, %v360
      %v367 = vmul.f32 %v355, %v360
      %v368 = vmul.f32 %v356, %v360
      %v369 = vadd.f32 %v340, %v361
      %v370 = vadd.f32 %v341, %v362
      %v371 = vadd.f32 %v342, %v363
      %v372 = vadd.f32 %v343, %v364
      %v373 = vadd.f32 %v344, %v365
      %v374 = vadd.f32 %v345, %v366
      %v375 = vadd.f32 %v346, %v367
      %v376 = vadd.f32 %v347, %v368
      %v377 = vld [vmem:[%s219 + $0x1] sm:$0xff]
      %v378 = vld [vmem:[%s219 + $0x11] sm:$0xff]
      %v379 = vld [vmem:[%s219 + $0x21] sm:$0xff]
      %v380 = vld [vmem:[%s219 + $0x31] sm:$0xff]
      %v381 = vld [vmem:[%s219 + $0x41] sm:$0xff]
      %v382 = vld [vmem:[%s219 + $0x51] sm:$0xff]
      %v383 = vld [vmem:[%s219 + $0x61] sm:$0xff]
      %v384 = vld [vmem:[%s219 + $0x71] sm:$0xff]
      %v385 = vlaneseq
      %v386 = vshrl.u32 %v385, 7
      %v387 = vsub.s32 2, %v386
      %v388 = vrot.slane %v324, %v387
      %v389 = vmul.f32 %v377, %v388
      %v390 = vmul.f32 %v378, %v388
      %v391 = vmul.f32 %v379, %v388
      %v392 = vmul.f32 %v380, %v388
      %v393 = vmul.f32 %v381, %v388
      %v394 = vmul.f32 %v382, %v388
      %v395 = vmul.f32 %v383, %v388
      %v396 = vmul.f32 %v384, %v388
      %v397 = vadd.f32 %v369, %v389
      %v398 = vadd.f32 %v370, %v390
      %v399 = vadd.f32 %v371, %v391
      %v400 = vadd.f32 %v372, %v392
      %v401 = vadd.f32 %v373, %v393
      %v402 = vadd.f32 %v374, %v394
      %v403 = vadd.f32 %v375, %v395
      %v404 = vadd.f32 %v376, %v396
      %v405 = vld [vmem:[%s256] sm:$0xff]
      %v406 = vld [vmem:[%s256 + $0x10] sm:$0xff]
      %v407 = vld [vmem:[%s256 + $0x20] sm:$0xff]
      %v408 = vld [vmem:[%s256 + $0x30] sm:$0xff]
      %v409 = vld [vmem:[%s256 + $0x40] sm:$0xff]
      %v410 = vld [vmem:[%s256 + $0x50] sm:$0xff]
      %v411 = vld [vmem:[%s256 + $0x60] sm:$0xff]
      %v412 = vld [vmem:[%s256 + $0x70] sm:$0xff]
      %v413 = vlaneseq
      %v414 = vshrl.u32 %v413, 7
      %v415 = vsub.s32 3, %v414
      %v416 = vrot.slane %v324, %v415
      %v417 = vmul.f32 %v405, %v416
      %v418 = vmul.f32 %v406, %v416
      %v419 = vmul.f32 %v407, %v416
      %v420 = vmul.f32 %v408, %v416
      %v421 = vmul.f32 %v409, %v416
      %v422 = vmul.f32 %v410, %v416
      %v423 = vmul.f32 %v411, %v416
      %v424 = vmul.f32 %v412, %v416
      %v425 = vadd.f32 %v397, %v417
      %v426 = vadd.f32 %v398, %v418
      %v427 = vadd.f32 %v399, %v419
      %v428 = vadd.f32 %v400, %v420
      %v429 = vadd.f32 %v401, %v421
      %v430 = vadd.f32 %v402, %v422
      %v431 = vadd.f32 %v403, %v423
      %v432 = vadd.f32 %v404, %v424
      %v433 = vld [vmem:[%s247] sm:$0xff]
      %v434 = vld [vmem:[%s247 + $0x10] sm:$0xff]
      %v435 = vld [vmem:[%s247 + $0x20] sm:$0xff]
      %v436 = vld [vmem:[%s247 + $0x30] sm:$0xff]
      %v437 = vld [vmem:[%s247 + $0x40] sm:$0xff]
      %v438 = vld [vmem:[%s247 + $0x50] sm:$0xff]
      %v439 = vld [vmem:[%s247 + $0x60] sm:$0xff]
      %v440 = vld [vmem:[%s247 + $0x70] sm:$0xff]
      %v441 = vlaneseq
      %v442 = vshrl.u32 %v441, 7
      %v443 = vsub.s32 4, %v442
      %v444 = vrot.slane %v324, %v443
      %v445 = vmul.f32 %v433, %v444
      %v446 = vmul.f32 %v434, %v444
      %v447 = vmul.f32 %v435, %v444
      %v448 = vmul.f32 %v436, %v444
      %v449 = vmul.f32 %v437, %v444
      %v450 = vmul.f32 %v438, %v444
      %v451 = vmul.f32 %v439, %v444
      %v452 = vmul.f32 %v440, %v444
      %v453 = vadd.f32 %v425, %v445
      %v454 = vadd.f32 %v426, %v446
      %v455 = vadd.f32 %v427, %v447
      %v456 = vadd.f32 %v428, %v448
      %v457 = vadd.f32 %v429, %v449
      %v458 = vadd.f32 %v430, %v450
      %v459 = vadd.f32 %v431, %v451
      %v460 = vadd.f32 %v432, %v452
      %v461 = vld [vmem:[%s256 + $0x1] sm:$0xff]
      %v462 = vld [vmem:[%s256 + $0x11] sm:$0xff]
      %v463 = vld [vmem:[%s256 + $0x21] sm:$0xff]
      %v464 = vld [vmem:[%s256 + $0x31] sm:$0xff]
      %v465 = vld [vmem:[%s256 + $0x41] sm:$0xff]
      %v466 = vld [vmem:[%s256 + $0x51] sm:$0xff]
      %v467 = vld [vmem:[%s256 + $0x61] sm:$0xff]
      %v468 = vld [vmem:[%s256 + $0x71] sm:$0xff]
      %v469 = vlaneseq
      %v470 = vshrl.u32 %v469, 7
      %v471 = vsub.s32 5, %v470
      %v472 = vrot.slane %v324, %v471
      %v473 = vmul.f32 %v461, %v472
      %v474 = vmul.f32 %v462, %v472
      %v475 = vmul.f32 %v463, %v472
      %v476 = vmul.f32 %v464, %v472
      %v477 = vmul.f32 %v465, %v472
      %v478 = vmul.f32 %v466, %v472
      %v479 = vmul.f32 %v467, %v472
      %v480 = vmul.f32 %v468, %v472
      %v481 = vadd.f32 %v453, %v473
      %v482 = vadd.f32 %v454, %v474
      %v483 = vadd.f32 %v455, %v475
      %v484 = vadd.f32 %v456, %v476
      %v485 = vadd.f32 %v457, %v477
      %v486 = vadd.f32 %v458, %v478
      %v487 = vadd.f32 %v459, %v479
      %v488 = vadd.f32 %v460, %v480
      %v489 = vld [vmem:[%s290] sm:$0xff]
      %v490 = vld [vmem:[%s290 + $0x10] sm:$0xff]
      %v491 = vld [vmem:[%s290 + $0x20] sm:$0xff]
      %v492 = vld [vmem:[%s290 + $0x30] sm:$0xff]
      %v493 = vld [vmem:[%s290 + $0x40] sm:$0xff]
      %v494 = vld [vmem:[%s290 + $0x50] sm:$0xff]
      %v495 = vld [vmem:[%s290 + $0x60] sm:$0xff]
      %v496 = vld [vmem:[%s290 + $0x70] sm:$0xff]
      %v497 = vlaneseq
      %v498 = vshrl.u32 %v497, 7
      %v499 = vsub.s32 6, %v498
      %v500 = vrot.slane %v324, %v499
      %v501 = vmul.f32 %v489, %v500
      %v502 = vmul.f32 %v490, %v500
      %v503 = vmul.f32 %v491, %v500
      %v504 = vmul.f32 %v492, %v500
      %v505 = vmul.f32 %v493, %v500
      %v506 = vmul.f32 %v494, %v500
      %v507 = vmul.f32 %v495, %v500
      %v508 = vmul.f32 %v496, %v500
      %v509 = vadd.f32 %v481, %v501
      %v510 = vadd.f32 %v482, %v502
      %v511 = vadd.f32 %v483, %v503
      %v512 = vadd.f32 %v484, %v504
      %v513 = vadd.f32 %v485, %v505
      %v514 = vadd.f32 %v486, %v506
      %v515 = vadd.f32 %v487, %v507
      %v516 = vadd.f32 %v488, %v508
      %v517 = vld [vmem:[%s273] sm:$0xff]
      %v518 = vld [vmem:[%s273 + $0x10] sm:$0xff]
      %v519 = vld [vmem:[%s273 + $0x20] sm:$0xff]
      %v520 = vld [vmem:[%s273 + $0x30] sm:$0xff]
      %v521 = vld [vmem:[%s273 + $0x40] sm:$0xff]
      %v522 = vld [vmem:[%s273 + $0x50] sm:$0xff]
      %v523 = vld [vmem:[%s273 + $0x60] sm:$0xff]
      %v524 = vld [vmem:[%s273 + $0x70] sm:$0xff]
      %v525 = vlaneseq
      %v526 = vshrl.u32 %v525, 7
      %v527 = vsub.s32 7, %v526
      %v528 = vrot.slane %v324, %v527
      %v529 = vmul.f32 %v517, %v528
      %v530 = vmul.f32 %v518, %v528
      %v531 = vmul.f32 %v519, %v528
      %v532 = vmul.f32 %v520, %v528
      %v533 = vmul.f32 %v521, %v528
      %v534 = vmul.f32 %v522, %v528
      %v535 = vmul.f32 %v523, %v528
      %v536 = vmul.f32 %v524, %v528
      %v537 = vadd.f32 %v509, %v529
      %v538 = vadd.f32 %v510, %v530
      %v539 = vadd.f32 %v511, %v531
      %v540 = vadd.f32 %v512, %v532
      %v541 = vadd.f32 %v513, %v533
      %v542 = vadd.f32 %v514, %v534
      %v543 = vadd.f32 %v515, %v535
      %v544 = vadd.f32 %v516, %v536
      %v545 = vld [vmem:[%s290 + $0x1] sm:$0xff]
      %v546 = vld [vmem:[%s290 + $0x11] sm:$0xff]
      %v547 = vld [vmem:[%s290 + $0x21] sm:$0xff]
      %v548 = vld [vmem:[%s290 + $0x31] sm:$0xff]
      %v549 = vld [vmem:[%s290 + $0x41] sm:$0xff]
      %v550 = vld [vmem:[%s290 + $0x51] sm:$0xff]
      %v551 = vld [vmem:[%s290 + $0x61] sm:$0xff]
      %v552 = vld [vmem:[%s290 + $0x71] sm:$0xff]
      %v553 = vlaneseq
      %v554 = vshrl.u32 %v553, 7
      %v555 = vsub.s32 0, %v554
      %v556 = vrot.slane %v325, %v555
      %v557 = vmul.f32 %v545, %v556
      %v558 = vmul.f32 %v546, %v556
      %v559 = vmul.f32 %v547, %v556
      %v560 = vmul.f32 %v548, %v556
      %v561 = vmul.f32 %v549, %v556
      %v562 = vmul.f32 %v550, %v556
      %v563 = vmul.f32 %v551, %v556
      %v564 = vmul.f32 %v552, %v556
      %v565 = vadd.f32 %v537, %v557
      %v566 = vadd.f32 %v538, %v558
      %v567 = vadd.f32 %v539, %v559
      %v568 = vadd.f32 %v540, %v560
      %v569 = vadd.f32 %v541, %v561
      %v570 = vadd.f32 %v542, %v562
      %v571 = vadd.f32 %v543, %v563
      %v572 = vadd.f32 %v544, %v564
      %v573 = vld [vmem:[#allocation2] sm:$0xff]
      %v574 = vld [vmem:[#allocation2 + $0x10] sm:$0xff]
      %v575 = vld [vmem:[#allocation2 + $0x20] sm:$0xff]
      %v576 = vld [vmem:[#allocation2 + $0x30] sm:$0xff]
      %v577 = vld [vmem:[#allocation2 + $0x40] sm:$0xff]
      %v578 = vld [vmem:[#allocation2 + $0x50] sm:$0xff]
      %v579 = vld [vmem:[#allocation2 + $0x60] sm:$0xff]
      %v580 = vld [vmem:[#allocation2 + $0x70] sm:$0xff]
      %v581 = vlaneseq
      %v582 = vshrl.u32 %v581, 7
      %v583 = vsub.s32 0, %v582
      %v584 = vrot.slane %v326, %v583
      %v585 = vmul.f32 %v573, %v584
      %v586 = vmul.f32 %v574, %v584
      %v587 = vmul.f32 %v575, %v584
      %v588 = vmul.f32 %v576, %v584
      %v589 = vmul.f32 %v577, %v584
      %v590 = vmul.f32 %v578, %v584
      %v591 = vmul.f32 %v579, %v584
      %v592 = vmul.f32 %v580, %v584
      %v593 = vld [vmem:[#allocation2 + $0x1] sm:$0xff]
      %v594 = vld [vmem:[#allocation2 + $0x11] sm:$0xff]
      %v595 = vld [vmem:[#allocation2 + $0x21] sm:$0xff]
      %v596 = vld [vmem:[#allocation2 + $0x31] sm:$0xff]
      %v597 = vld [vmem:[#allocation2 + $0x41] sm:$0xff]
      %v598 = vld [vmem:[#allocation2 + $0x51] sm:$0xff]
      %v599 = vld [vmem:[#allocation2 + $0x61] sm:$0xff]
      %v600 = vld [vmem:[#allocation2 + $0x71] sm:$0xff]
      %v601 = vlaneseq
      %v602 = vshrl.u32 %v601, 7
      %v603 = vsub.s32 1, %v602
      %v604 = vrot.slane %v326, %v603
      %v605 = vmul.f32 %v593, %v604
      %v606 = vmul.f32 %v594, %v604
      %v607 = vmul.f32 %v595, %v604
      %v608 = vmul.f32 %v596, %v604
      %v609 = vmul.f32 %v597, %v604
      %v610 = vmul.f32 %v598, %v604
      %v611 = vmul.f32 %v599, %v604
      %v612 = vmul.f32 %v600, %v604
      %v613 = vadd.f32 %v585, %v605
      %v614 = vadd.f32 %v586, %v606
      %v615 = vadd.f32 %v587, %v607
      %v616 = vadd.f32 %v588, %v608
      %v617 = vadd.f32 %v589, %v609
      %v618 = vadd.f32 %v590, %v610
      %v619 = vadd.f32 %v591, %v611
      %v620 = vadd.f32 %v592, %v612
      %v621 = vld [vmem:[#allocation2 + $0x2] sm:$0xff]
      %v622 = vld [vmem:[#allocation2 + $0x12] sm:$0xff]
      %v623 = vld [vmem:[#allocation2 + $0x22] sm:$0xff]
      %v624 = vld [vmem:[#allocation2 + $0x32] sm:$0xff]
      %v625 = vld [vmem:[#allocation2 + $0x42] sm:$0xff]
      %v626 = vld [vmem:[#allocation2 + $0x52] sm:$0xff]
      %v627 = vld [vmem:[#allocation2 + $0x62] sm:$0xff]
      %v628 = vld [vmem:[#allocation2 + $0x72] sm:$0xff]
      %v629 = vlaneseq
      %v630 = vshrl.u32 %v629, 7
      %v631 = vsub.s32 2, %v630
      %v632 = vrot.slane %v326, %v631
      %v633 = vmul.f32 %v621, %v632
      %v634 = vmul.f32 %v622, %v632
      %v635 = vmul.f32 %v623, %v632
      %v636 = vmul.f32 %v624, %v632
      %v637 = vmul.f32 %v625, %v632
      %v638 = vmul.f32 %v626, %v632
      %v639 = vmul.f32 %v627, %v632
      %v640 = vmul.f32 %v628, %v632
      %v641 = vadd.f32 %v613, %v633
      %v642 = vadd.f32 %v614, %v634
      %v643 = vadd.f32 %v615, %v635
      %v644 = vadd.f32 %v616, %v636
      %v645 = vadd.f32 %v617, %v637
      %v646 = vadd.f32 %v618, %v638
      %v647 = vadd.f32 %v619, %v639
      %v648 = vadd.f32 %v620, %v640
      %v649 = vld [vmem:[%s315] sm:$0xff]
      %v650 = vld [vmem:[%s315 + $0x10] sm:$0xff]
      %v651 = vld [vmem:[%s315 + $0x20] sm:$0xff]
      %v652 = vld [vmem:[%s315 + $0x30] sm:$0xff]
      %v653 = vld [vmem:[%s315 + $0x40] sm:$0xff]
      %v654 = vld [vmem:[%s315 + $0x50] sm:$0xff]
      %v655 = vld [vmem:[%s315 + $0x60] sm:$0xff]
      %v656 = vld [vmem:[%s315 + $0x70] sm:$0xff]
      %v657 = vlaneseq
      %v658 = vshrl.u32 %v657, 7
      %v659 = vsub.s32 3, %v658
      %v660 = vrot.slane %v326, %v659
      %v661 = vmul.f32 %v649, %v660
      %v662 = vmul.f32 %v650, %v660
      %v663 = vmul.f32 %v651, %v660
      %v664 = vmul.f32 %v652, %v660
      %v665 = vmul.f32 %v653, %v660
      %v666 = vmul.f32 %v654, %v660
      %v667 = vmul.f32 %v655, %v660
      %v668 = vmul.f32 %v656, %v660
      %v669 = vadd.f32 %v641, %v661
      %v670 = vadd.f32 %v642, %v662
      %v671 = vadd.f32 %v643, %v663
      %v672 = vadd.f32 %v644, %v664
      %v673 = vadd.f32 %v645, %v665
      %v674 = vadd.f32 %v646, %v666
      %v675 = vadd.f32 %v647, %v667
      %v676 = vadd.f32 %v648, %v668
      %v677 = vld [vmem:[%s315 + $0x1] sm:$0xff]
      %v678 = vld [vmem:[%s315 + $0x11] sm:$0xff]
      %v679 = vld [vmem:[%s315 + $0x21] sm:$0xff]
      %v680 = vld [vmem:[%s315 + $0x31] sm:$0xff]
      %v681 = vld [vmem:[%s315 + $0x41] sm:$0xff]
      %v682 = vld [vmem:[%s315 + $0x51] sm:$0xff]
      %v683 = vld [vmem:[%s315 + $0x61] sm:$0xff]
      %v684 = vld [vmem:[%s315 + $0x71] sm:$0xff]
      %v685 = vlaneseq
      %v686 = vshrl.u32 %v685, 7
      %v687 = vsub.s32 4, %v686
      %v688 = vrot.slane %v326, %v687
      %v689 = vmul.f32 %v677, %v688
      %v690 = vmul.f32 %v678, %v688
      %v691 = vmul.f32 %v679, %v688
      %v692 = vmul.f32 %v680, %v688
      %v693 = vmul.f32 %v681, %v688
      %v694 = vmul.f32 %v682, %v688
      %v695 = vmul.f32 %v683, %v688
      %v696 = vmul.f32 %v684, %v688
      %v697 = vadd.f32 %v669, %v689
      %v698 = vadd.f32 %v670, %v690
      %v699 = vadd.f32 %v671, %v691
      %v700 = vadd.f32 %v672, %v692
      %v701 = vadd.f32 %v673, %v693
      %v702 = vadd.f32 %v674, %v694
      %v703 = vadd.f32 %v675, %v695
      %v704 = vadd.f32 %v676, %v696
      %v705 = vld [vmem:[%s315 + $0x2] sm:$0xff]
      %v706 = vld [vmem:[%s315 + $0x12] sm:$0xff]
      %v707 = vld [vmem:[%s315 + $0x22] sm:$0xff]
      %v708 = vld [vmem:[%s315 + $0x32] sm:$0xff]
      %v709 = vld [vmem:[%s315 + $0x42] sm:$0xff]
      %v710 = vld [vmem:[%s315 + $0x52] sm:$0xff]
      %v711 = vld [vmem:[%s315 + $0x62] sm:$0xff]
      %v712 = vld [vmem:[%s315 + $0x72] sm:$0xff]
      %v713 = vlaneseq
      %v714 = vshrl.u32 %v713, 7
      %v715 = vsub.s32 5, %v714
      %v716 = vrot.slane %v326, %v715
      %v717 = vmul.f32 %v705, %v716
      %v718 = vmul.f32 %v706, %v716
      %v719 = vmul.f32 %v707, %v716
      %v720 = vmul.f32 %v708, %v716
      %v721 = vmul.f32 %v709, %v716
      %v722 = vmul.f32 %v710, %v716
      %v723 = vmul.f32 %v711, %v716
      %v724 = vmul.f32 %v712, %v716
      %v725 = vadd.f32 %v697, %v717
      %v726 = vadd.f32 %v698, %v718
      %v727 = vadd.f32 %v699, %v719
      %v728 = vadd.f32 %v700, %v720
      %v729 = vadd.f32 %v701, %v721
      %v730 = vadd.f32 %v702, %v722
      %v731 = vadd.f32 %v703, %v723
      %v732 = vadd.f32 %v704, %v724
      %s733 = scalar_lea.vmem [#allocation2], 32
      %v734 = vld [vmem:[%s733] sm:$0xff]
      %v735 = vld [vmem:[%s733 + $0x10] sm:$0xff]
      %v736 = vld [vmem:[%s733 + $0x20] sm:$0xff]
      %v737 = vld [vmem:[%s733 + $0x30] sm:$0xff]
      %v738 = vld [vmem:[%s733 + $0x40] sm:$0xff]
      %v739 = vld [vmem:[%s733 + $0x50] sm:$0xff]
      %v740 = vld [vmem:[%s733 + $0x60] sm:$0xff]
      %v741 = vld [vmem:[%s733 + $0x70] sm:$0xff]
      %v742 = vlaneseq
      %v743 = vshrl.u32 %v742, 7
      %v744 = vsub.s32 6, %v743
      %v745 = vrot.slane %v326, %v744
      %v746 = vmul.f32 %v734, %v745
      %v747 = vmul.f32 %v735, %v745
      %v748 = vmul.f32 %v736, %v745
      %v749 = vmul.f32 %v737, %v745
      %v750 = vmul.f32 %v738, %v745
      %v751 = vmul.f32 %v739, %v745
      %v752 = vmul.f32 %v740, %v745
      %v753 = vmul.f32 %v741, %v745
      %v754 = vadd.f32 %v725, %v746
      %v755 = vadd.f32 %v726, %v747
      %v756 = vadd.f32 %v727, %v748
      %v757 = vadd.f32 %v728, %v749
      %v758 = vadd.f32 %v729, %v750
      %v759 = vadd.f32 %v730, %v751
      %v760 = vadd.f32 %v731, %v752
      %v761 = vadd.f32 %v732, %v753
      %v762 = vld [vmem:[%s733 + $0x1] sm:$0xff]
      %v763 = vld [vmem:[%s733 + $0x11] sm:$0xff]
      %v764 = vld [vmem:[%s733 + $0x21] sm:$0xff]
      %v765 = vld [vmem:[%s733 + $0x31] sm:$0xff]
      %v766 = vld [vmem:[%s733 + $0x41] sm:$0xff]
      %v767 = vld [vmem:[%s733 + $0x51] sm:$0xff]
      %v768 = vld [vmem:[%s733 + $0x61] sm:$0xff]
      %v769 = vld [vmem:[%s733 + $0x71] sm:$0xff]
      %v770 = vlaneseq
      %v771 = vshrl.u32 %v770, 7
      %v772 = vsub.s32 7, %v771
      %v773 = vrot.slane %v326, %v772
      %v774 = vmul.f32 %v762, %v773
      %v775 = vmul.f32 %v763, %v773
      %v776 = vmul.f32 %v764, %v773
      %v777 = vmul.f32 %v765, %v773
      %v778 = vmul.f32 %v766, %v773
      %v779 = vmul.f32 %v767, %v773
      %v780 = vmul.f32 %v768, %v773
      %v781 = vmul.f32 %v769, %v773
      %v782 = vadd.f32 %v754, %v774
      %v783 = vadd.f32 %v755, %v775
      %v784 = vadd.f32 %v756, %v776
      %v785 = vadd.f32 %v757, %v777
      %v786 = vadd.f32 %v758, %v778
      %v787 = vadd.f32 %v759, %v779
      %v788 = vadd.f32 %v760, %v780
      %v789 = vadd.f32 %v761, %v781
      %v790 = vld [vmem:[%s733 + $0x2] sm:$0xff]
      %v791 = vld [vmem:[%s733 + $0x12] sm:$0xff]
      %v792 = vld [vmem:[%s733 + $0x22] sm:$0xff]
      %v793 = vld [vmem:[%s733 + $0x32] sm:$0xff]
      %v794 = vld [vmem:[%s733 + $0x42] sm:$0xff]
      %v795 = vld [vmem:[%s733 + $0x52] sm:$0xff]
      %v796 = vld [vmem:[%s733 + $0x62] sm:$0xff]
      %v797 = vld [vmem:[%s733 + $0x72] sm:$0xff]
      %v798 = vlaneseq
      %v799 = vshrl.u32 %v798, 7
      %v800 = vsub.s32 0, %v799
      %v801 = vrot.slane %v327, %v800
      %v802 = vmul.f32 %v790, %v801
      %v803 = vmul.f32 %v791, %v801
      %v804 = vmul.f32 %v792, %v801
      %v805 = vmul.f32 %v793, %v801
      %v806 = vmul.f32 %v794, %v801
      %v807 = vmul.f32 %v795, %v801
      %v808 = vmul.f32 %v796, %v801
      %v809 = vmul.f32 %v797, %v801
      %v810 = vadd.f32 %v782, %v802
      %v811 = vadd.f32 %v783, %v803
      %v812 = vadd.f32 %v784, %v804
      %v813 = vadd.f32 %v785, %v805
      %v814 = vadd.f32 %v786, %v806
      %v815 = vadd.f32 %v787, %v807
      %v816 = vadd.f32 %v788, %v808
      %v817 = vadd.f32 %v789, %v809
      %v818 = vsel %vm225, %v565, 0.0
      %v819 = vsel %vm225, %v566, 0.0
      %v820 = vadd.f32 %v818, %v819
      %v821 = vsel %vm225, %v567, 0.0
      %v822 = vadd.f32 %v820, %v821
      %v823 = vsel %vm225, %v568, 0.0
      %v824 = vadd.f32 %v822, %v823
      %v825 = vsel %vm225, %v569, 0.0
      %v826 = vadd.f32 %v824, %v825
      %v827 = vsel %vm225, %v570, 0.0
      %v828 = vadd.f32 %v826, %v827
      %v829 = vsel %vm225, %v571, 0.0
      %v830 = vadd.f32 %v828, %v829
      %v831 = vsel %vm225, %v572, 0.0
      %v832 = vadd.f32 %v830, %v831
      %v833 = vrot.slane %v832, 4
      %v834 = vadd.f32 %v832, %v833
      %v835 = vrot.slane %v834, 2
      %v836 = vadd.f32 %v834, %v835
      %v837 = vrot.slane %v836, 1
      %v838 = vadd.f32 %v836, %v837
      %v839 = vadd.f32 %v838, 0.0
      %v840 = vmul.f32 %v565, %v565
      %v841 = vmul.f32 %v566, %v566
      %v842 = vmul.f32 %v567, %v567
      %v843 = vmul.f32 %v568, %v568
      %v844 = vmul.f32 %v569, %v569
      %v845 = vmul.f32 %v570, %v570
      %v846 = vmul.f32 %v571, %v571
      %v847 = vmul.f32 %v572, %v572
      %v848 = vsel %vm225, %v840, 0.0
      %v849 = vsel %vm225, %v841, 0.0
      %v850 = vadd.f32 %v848, %v849
      %v851 = vsel %vm225, %v842, 0.0
      %v852 = vadd.f32 %v850, %v851
      %v853 = vsel %vm225, %v843, 0.0
      %v854 = vadd.f32 %v852, %v853
      %v855 = vsel %vm225, %v844, 0.0
      %v856 = vadd.f32 %v854, %v855
      %v857 = vsel %vm225, %v845, 0.0
      %v858 = vadd.f32 %v856, %v857
      %v859 = vsel %vm225, %v846, 0.0
      %v860 = vadd.f32 %v858, %v859
      %v861 = vsel %vm225, %v847, 0.0
      %v862 = vadd.f32 %v860, %v861
      %v863 = vrot.slane %v862, 4
      %v864 = vadd.f32 %v862, %v863
      %v865 = vrot.slane %v864, 2
      %v866 = vadd.f32 %v864, %v865
      %v867 = vrot.slane %v866, 1
      %v868 = vadd.f32 %v866, %v867
      %v869 = vadd.f32 %v868, 0.0
      %v870 = vsel %vm225, %v810, 0.0
      %v871 = vsel %vm225, %v811, 0.0
      %v872 = vadd.f32 %v870, %v871
      %v873 = vsel %vm225, %v812, 0.0
      %v874 = vadd.f32 %v872, %v873
      %v875 = vsel %vm225, %v813, 0.0
      %v876 = vadd.f32 %v874, %v875
      %v877 = vsel %vm225, %v814, 0.0
      %v878 = vadd.f32 %v876, %v877
      %v879 = vsel %vm225, %v815, 0.0
      %v880 = vadd.f32 %v878, %v879
      %v881 = vsel %vm225, %v816, 0.0
      %v882 = vadd.f32 %v880, %v881
      %v883 = vsel %vm225, %v817, 0.0
      %v884 = vadd.f32 %v882, %v883
      %v885 = vrot.slane %v884, 4
      %v886 = vadd.f32 %v884, %v885
      %v887 = vrot.slane %v886, 2
      %v888 = vadd.f32 %v886, %v887
      %v889 = vrot.slane %v888, 1
      %v890 = vadd.f32 %v888, %v889
      %v891 = vadd.f32 %v890, 0.0
      %v892 = vmul.f32 %v810, %v810
      %v893 = vmul.f32 %v811, %v811
      %v894 = vmul.f32 %v812, %v812
      %v895 = vmul.f32 %v813, %v813
      %v896 = vmul.f32 %v814, %v814
      %v897 = vmul.f32 %v815, %v815
      %v898 = vmul.f32 %v816, %v816
      %v899 = vmul.f32 %v817, %v817
      %v900 = vsel %vm225, %v892, 0.0
      %v901 = vsel %vm225, %v893, 0.0
      %v902 = vadd.f32 %v900, %v901
      %v903 = vsel %vm225, %v894, 0.0
      %v904 = vadd.f32 %v902, %v903
      %v905 = vsel %vm225, %v895, 0.0
      %v906 = vadd.f32 %v904, %v905
      %v907 = vsel %vm225, %v896, 0.0
      %v908 = vadd.f32 %v906, %v907
      %v909 = vsel %vm225, %v897, 0.0
      %v910 = vadd.f32 %v908, %v909
      %v911 = vsel %vm225, %v898, 0.0
      %v912 = vadd.f32 %v910, %v911
      %v913 = vsel %vm225, %v899, 0.0
      %v914 = vadd.f32 %v912, %v913
      %v915 = vrot.slane %v914, 4
      %v916 = vadd.f32 %v914, %v915
      %v917 = vrot.slane %v916, 2
      %v918 = vadd.f32 %v916, %v917
      %v919 = vrot.slane %v918, 1
      %v920 = vadd.f32 %v918, %v919
      %v921 = vadd.f32 %v920, 0.0
      %v922 = vmul.f32 %v839, 0.015625
      %v923 = vmul.f32 %v869, 0.015625
      %v924 = vmul.f32 %v922, %v922
      %v925 = vsub.f32 %v923, %v924
      %v926 = vmax.f32 %v925, 0.0
      %v927 = vadd.f32 %v926, 1e-05
      %v928 = vrsqrt.pop %v927
      %v929 = vmul.f32 %v891, 0.015625
      %v930 = vmul.f32 %v921, 0.015625
      %v931 = vmul.f32 %v929, %v929
      %v932 = vsub.f32 %v930, %v931
      %v933 = vmax.f32 %v932, 0.0
      %v934 = vadd.f32 %v933, 1e-05
      %v935 = vrsqrt.pop %v934
      %v936 = vld [vmem:[%s2] sm:$0xf]
      %v937 = vld [vmem:[%s4] sm:$0xf]
      %v938 = vsub.f32 %v565, %v922
      %v939 = vsub.f32 %v566, %v922
      %v940 = vsub.f32 %v567, %v922
      %v941 = vsub.f32 %v568, %v922
      %v942 = vsub.f32 %v569, %v922
      %v943 = vsub.f32 %v570, %v922
      %v944 = vsub.f32 %v571, %v922
      %v945 = vsub.f32 %v572, %v922
      %v946 = vmul.f32 %v938, %v928
      %v947 = vmul.f32 %v939, %v928
      %v948 = vmul.f32 %v940, %v928
      %v949 = vmul.f32 %v941, %v928
      %v950 = vmul.f32 %v942, %v928
      %v951 = vmul.f32 %v943, %v928
      %v952 = vmul.f32 %v944, %v928
      %v953 = vmul.f32 %v945, %v928
      %v954 = vmul.f32 %v946, 0.2
      %v955 = vmul.f32 %v947, 0.2
      %v956 = vmul.f32 %v948, 0.2
      %v957 = vmul.f32 %v949, 0.2
      %v958 = vmul.f32 %v950, 0.2
      %v959 = vmul.f32 %v951, 0.2
      %v960 = vmul.f32 %v952, 0.2
      %v961 = vmul.f32 %v953, 0.2
      %v962 = vmax.f32 %v946, %v954
      %v963 = vmax.f32 %v947, %v955
      %v964 = vmax.f32 %v948, %v956
      %v965 = vmax.f32 %v949, %v957
      %v966 = vmax.f32 %v950, %v958
      %v967 = vmax.f32 %v951, %v959
      %v968 = vmax.f32 %v952, %v960
      %v969 = vmax.f32 %v953, %v961
      %v970 = vsub.f32 %v810, %v929
      %v971 = vsub.f32 %v811, %v929
      %v972 = vsub.f32 %v812, %v929
      %v973 = vsub.f32 %v813, %v929
      %v974 = vsub.f32 %v814, %v929
      %v975 = vsub.f32 %v815, %v929
      %v976 = vsub.f32 %v816, %v929
      %v977 = vsub.f32 %v817, %v929
      %v978 = vmul.f32 %v970, %v935
      %v979 = vmul.f32 %v971, %v935
      %v980 = vmul.f32 %v972, %v935
      %v981 = vmul.f32 %v973, %v935
      %v982 = vmul.f32 %v974, %v935
      %v983 = vmul.f32 %v975, %v935
      %v984 = vmul.f32 %v976, %v935
      %v985 = vmul.f32 %v977, %v935
      %v986 = vmul.f32 %v978, 0.2
      %v987 = vmul.f32 %v979, 0.2
      %v988 = vmul.f32 %v980, 0.2
      %v989 = vmul.f32 %v981, 0.2
      %v990 = vmul.f32 %v982, 0.2
      %v991 = vmul.f32 %v983, 0.2
      %v992 = vmul.f32 %v984, 0.2
      %v993 = vmul.f32 %v985, 0.2
      %v994 = vmax.f32 %v978, %v986
      %v995 = vmax.f32 %v979, %v987
      %v996 = vmax.f32 %v980, %v988
      %v997 = vmax.f32 %v981, %v989
      %v998 = vmax.f32 %v982, %v990
      %v999 = vmax.f32 %v983, %v991
      %v1000 = vmax.f32 %v984, %v992
      %v1001 = vmax.f32 %v985, %v993
      %v1003 = vsel %vm225, %v962, 0
      %v1006 = vsel %vm225, %v963, 0
      %v1009 = vsel %vm225, %v964, 0
      %v1012 = vsel %vm225, %v965, 0
      %v1015 = vsel %vm225, %v966, 0
      %v1018 = vsel %vm225, %v967, 0
      %v1021 = vsel %vm225, %v968, 0
      %v1024 = vsel %vm225, %v969, 0
      %vm1026 = vcmask 1043456
      %v1028 = vsel %vm1026, %v936, 0
      %1030 = vmatprep.subr.mxu0 0.0
      %1031 = vmatpush1.msra.mxu0 0.0
      %1032 = vmatprep.subr.mxu0 0.0
      %1033 = vmatpush1.msra.mxu0 0.0
      %1034 = vmatprep.subr.mxu0 0.0
      %1035 = vmatpush1.msra.mxu0 0.0
      %1036 = vmatprep.subr.mxu0 0.0
      %1037 = vmatpush1.msra.mxu0 0.0
      %1038 = vmatprep.subr.mxu0 0.0
      %1039 = vmatpush1.msra.mxu0 0.0
      %1040 = vmatprep.subr.mxu0 0.0
      %1041 = vmatpush1.msra.mxu0 0.0
      %1042 = vmatprep.subr.mxu0 0.0
      %1043 = vmatpush1.msra.mxu0 0.0
      %1044 = vmatprep.subr.mxu0 0.0
      %1045 = vmatpush1.msra.mxu0 0.0
      %1046 = vmatprep.subr.mxu0 0.0
      %1047 = vmatpush1.msra.mxu0 0.0
      %1048 = vmatprep.subr.mxu0 0.0
      %1049 = vmatpush1.msra.mxu0 0.0
      %1050 = vmatprep.subr.mxu0 0.0
      %1051 = vmatpush1.msra.mxu0 0.0
      %1052 = vmatprep.subr.mxu0 0.0
      %1053 = vmatpush1.msra.mxu0 0.0
      %1054 = vmatprep.subr.mxu0 0.0
      %1055 = vmatpush1.msra.mxu0 0.0
      %1056 = vmatprep.subr.mxu0 0.0
      %1057 = vmatpush1.msra.mxu0 0.0
      %1058 = vmatprep.subr.mxu0 0.0
      %1059 = vmatpush1.msra.mxu0 0.0
      %1060 = vmatprep.subr.mxu0 0.0
      %v1061 = vand.u32 %v1028, 4294901760
      %1062 = vmatpush1.msra.mxu0 %v1061
      %1063 = vmatprep.subr.mxu0 0.0
      %1064 = vmatpush2.msra.mxu0 0.0
      %1065 = vmatprep.subr.mxu0 0.0
      %1066 = vmatpush2.msra.mxu0 0.0
      %1067 = vmatprep.subr.mxu0 0.0
      %1068 = vmatpush2.msra.mxu0 0.0
      %1069 = vmatprep.subr.mxu0 0.0
      %1070 = vmatpush2.msra.mxu0 0.0
      %1071 = vmatprep.subr.mxu0 0.0
      %1072 = vmatpush2.msra.mxu0 0.0
      %1073 = vmatprep.subr.mxu0 0.0
      %1074 = vmatpush2.msra.mxu0 0.0
      %1075 = vmatprep.subr.mxu0 0.0
      %1076 = vmatpush2.msra.mxu0 0.0
      %1077 = vmatprep.subr.mxu0 0.0
      %1078 = vmatpush2.msra.mxu0 0.0
      %1079 = vmatprep.subr.mxu0 0.0
      %1080 = vmatpush2.msra.mxu0 0.0
      %1081 = vmatprep.subr.mxu0 0.0
      %1082 = vmatpush2.msra.mxu0 0.0
      %1083 = vmatprep.subr.mxu0 0.0
      %1084 = vmatpush2.msra.mxu0 0.0
      %1085 = vmatprep.subr.mxu0 0.0
      %1086 = vmatpush2.msra.mxu0 0.0
      %1087 = vmatprep.subr.mxu0 0.0
      %1088 = vmatpush2.msra.mxu0 0.0
      %1089 = vmatprep.subr.mxu0 0.0
      %1090 = vmatpush2.msra.mxu0 0.0
      %1091 = vmatprep.subr.mxu0 0.0
      %1092 = vmatpush2.msra.mxu0 0.0
      %1093 = vmatprep.subr.mxu0 0.0
      %1094 = vmatpush2.msra.mxu0 0.0
      %1095 = vmatprep.mubr.f32.mxu0 0.0
      %v1096 = vand.u32 %v1003, 4294901760
      %v1097 = vsub.f32 %v1003, %v1096
      %v1098 = vand.u32 %v1097, 4294901760
      %v1099 = vsub.f32 %v1097, %v1098
      %v1100 = vand.u32 %v1099, 4294901760
      %1101 = vmatmul.mubr.f32.gmra.mxu0 %v1100
      %v1102 = vpop.f32.mrf.mxu0
      %v1103 = vadd.f32 0.0, %v1102
      %v1104 = vpop.f32.mrf.mxu0
      %1105 = vmatprep.mubr.f32.mxu0 0.0
      %v1106 = vand.u32 %v1006, 4294901760
      %v1107 = vsub.f32 %v1006, %v1106
      %v1108 = vand.u32 %v1107, 4294901760
      %v1109 = vsub.f32 %v1107, %v1108
      %v1110 = vand.u32 %v1109, 4294901760
      %1111 = vmatmul.mubr.f32.gmra.mxu0 %v1110
      %v1112 = vpop.f32.mrf.mxu0
      %v1113 = vadd.f32 0.0, %v1112
      %v1114 = vpop.f32.mrf.mxu0
      %1115 = vmatprep.mubr.f32.mxu0 0.0
      %v1116 = vand.u32 %v1009, 4294901760
      %v1117 = vsub.f32 %v1009, %v1116
      %v1118 = vand.u32 %v1117, 4294901760
      %v1119 = vsub.f32 %v1117, %v1118
      %v1120 = vand.u32 %v1119, 4294901760
      %1121 = vmatmul.mubr.f32.gmra.mxu0 %v1120
      %v1122 = vpop.f32.mrf.mxu0
      %v1123 = vadd.f32 0.0, %v1122
      %v1124 = vpop.f32.mrf.mxu0
      %1125 = vmatprep.mubr.f32.mxu0 0.0
      %v1126 = vand.u32 %v1012, 4294901760
      %v1127 = vsub.f32 %v1012, %v1126
      %v1128 = vand.u32 %v1127, 4294901760
      %v1129 = vsub.f32 %v1127, %v1128
      %v1130 = vand.u32 %v1129, 4294901760
      %1131 = vmatmul.mubr.f32.gmra.mxu0 %v1130
      %v1132 = vpop.f32.mrf.mxu0
      %v1133 = vadd.f32 0.0, %v1132
      %v1134 = vpop.f32.mrf.mxu0
      %1135 = vmatprep.mubr.f32.mxu0 0.0
      %v1136 = vand.u32 %v1015, 4294901760
      %v1137 = vsub.f32 %v1015, %v1136
      %v1138 = vand.u32 %v1137, 4294901760
      %v1139 = vsub.f32 %v1137, %v1138
      %v1140 = vand.u32 %v1139, 4294901760
      %1141 = vmatmul.mubr.f32.gmra.mxu0 %v1140
      %v1142 = vpop.f32.mrf.mxu0
      %v1143 = vadd.f32 0.0, %v1142
      %v1144 = vpop.f32.mrf.mxu0
      %1145 = vmatprep.mubr.f32.mxu0 0.0
      %v1146 = vand.u32 %v1018, 4294901760
      %v1147 = vsub.f32 %v1018, %v1146
      %v1148 = vand.u32 %v1147, 4294901760
      %v1149 = vsub.f32 %v1147, %v1148
      %v1150 = vand.u32 %v1149, 4294901760
      %1151 = vmatmul.mubr.f32.gmra.mxu0 %v1150
      %v1152 = vpop.f32.mrf.mxu0
      %v1153 = vadd.f32 0.0, %v1152
      %v1154 = vpop.f32.mrf.mxu0
      %1155 = vmatprep.mubr.f32.mxu0 0.0
      %v1156 = vand.u32 %v1021, 4294901760
      %v1157 = vsub.f32 %v1021, %v1156
      %v1158 = vand.u32 %v1157, 4294901760
      %v1159 = vsub.f32 %v1157, %v1158
      %v1160 = vand.u32 %v1159, 4294901760
      %1161 = vmatmul.mubr.f32.gmra.mxu0 %v1160
      %v1162 = vpop.f32.mrf.mxu0
      %v1163 = vadd.f32 0.0, %v1162
      %v1164 = vpop.f32.mrf.mxu0
      %1165 = vmatprep.mubr.f32.mxu0 0.0
      %v1166 = vand.u32 %v1024, 4294901760
      %v1167 = vsub.f32 %v1024, %v1166
      %v1168 = vand.u32 %v1167, 4294901760
      %v1169 = vsub.f32 %v1167, %v1168
      %v1170 = vand.u32 %v1169, 4294901760
      %1171 = vmatmul.mubr.f32.gmra.mxu0 %v1170
      %v1172 = vpop.f32.mrf.mxu0
      %v1173 = vadd.f32 0.0, %v1172
      %v1174 = vpop.f32.mrf.mxu0
      %1175 = vdwg.mxu0
      %1176 = vmatprep.subr.mxu0 0.0
      %1177 = vmatpush1.msra.mxu0 0.0
      %1178 = vmatprep.subr.mxu0 0.0
      %1179 = vmatpush1.msra.mxu0 0.0
      %1180 = vmatprep.subr.mxu0 0.0
      %1181 = vmatpush1.msra.mxu0 0.0
      %1182 = vmatprep.subr.mxu0 0.0
      %1183 = vmatpush1.msra.mxu0 0.0
      %1184 = vmatprep.subr.mxu0 0.0
      %1185 = vmatpush1.msra.mxu0 0.0
      %1186 = vmatprep.subr.mxu0 0.0
      %1187 = vmatpush1.msra.mxu0 0.0
      %1188 = vmatprep.subr.mxu0 0.0
      %1189 = vmatpush1.msra.mxu0 0.0
      %1190 = vmatprep.subr.mxu0 0.0
      %1191 = vmatpush1.msra.mxu0 0.0
      %1192 = vmatprep.subr.mxu0 0.0
      %1193 = vmatpush1.msra.mxu0 0.0
      %1194 = vmatprep.subr.mxu0 0.0
      %1195 = vmatpush1.msra.mxu0 0.0
      %1196 = vmatprep.subr.mxu0 0.0
      %1197 = vmatpush1.msra.mxu0 0.0
      %1198 = vmatprep.subr.mxu0 0.0
      %1199 = vmatpush1.msra.mxu0 0.0
      %1200 = vmatprep.subr.mxu0 0.0
      %1201 = vmatpush1.msra.mxu0 0.0
      %1202 = vmatprep.subr.mxu0 0.0
      %1203 = vmatpush1.msra.mxu0 0.0
      %1204 = vmatprep.subr.mxu0 0.0
      %1205 = vmatpush1.msra.mxu0 0.0
      %1206 = vmatprep.subr.mxu0 0.0
      %v1207 = vand.u32 %v1028, 4294901760
      %v1208 = vsub.f32 %v1028, %v1207
      %v1209 = vand.u32 %v1208, 4294901760
      %v1210 = vsub.f32 %v1208, %v1209
      %v1211 = vand.u32 %v1210, 4294901760
      %1212 = vmatpush1.msra.mxu0 %v1211
      %1213 = vmatprep.subr.mxu0 0.0
      %1214 = vmatpush2.msra.mxu0 0.0
      %1215 = vmatprep.subr.mxu0 0.0
      %1216 = vmatpush2.msra.mxu0 0.0
      %1217 = vmatprep.subr.mxu0 0.0
      %1218 = vmatpush2.msra.mxu0 0.0
      %1219 = vmatprep.subr.mxu0 0.0
      %1220 = vmatpush2.msra.mxu0 0.0
      %1221 = vmatprep.subr.mxu0 0.0
      %1222 = vmatpush2.msra.mxu0 0.0
      %1223 = vmatprep.subr.mxu0 0.0
      %1224 = vmatpush2.msra.mxu0 0.0
      %1225 = vmatprep.subr.mxu0 0.0
      %1226 = vmatpush2.msra.mxu0 0.0
      %1227 = vmatprep.subr.mxu0 0.0
      %1228 = vmatpush2.msra.mxu0 0.0
      %1229 = vmatprep.subr.mxu0 0.0
      %1230 = vmatpush2.msra.mxu0 0.0
      %1231 = vmatprep.subr.mxu0 0.0
      %1232 = vmatpush2.msra.mxu0 0.0
      %1233 = vmatprep.subr.mxu0 0.0
      %1234 = vmatpush2.msra.mxu0 0.0
      %1235 = vmatprep.subr.mxu0 0.0
      %1236 = vmatpush2.msra.mxu0 0.0
      %1237 = vmatprep.subr.mxu0 0.0
      %1238 = vmatpush2.msra.mxu0 0.0
      %1239 = vmatprep.subr.mxu0 0.0
      %1240 = vmatpush2.msra.mxu0 0.0
      %1241 = vmatprep.subr.mxu0 0.0
      %1242 = vmatpush2.msra.mxu0 0.0
      %1243 = vmatprep.subr.mxu0 0.0
      %1244 = vmatpush2.msra.mxu0 0.0
      %1245 = vmatprep.mubr.f32.mxu0 0.0
      %v1246 = vand.u32 %v1003, 4294901760
      %1247 = vmatmul.mubr.f32.gmra.mxu0 %v1246
      %v1248 = vpop.f32.mrf.mxu0
      %v1249 = vadd.f32 %v1103, %v1248
      %v1250 = vpop.f32.mrf.mxu0
      %1251 = vmatprep.mubr.f32.mxu0 0.0
      %v1252 = vand.u32 %v1006, 4294901760
      %1253 = vmatmul.mubr.f32.gmra.mxu0 %v1252
      %v1254 = vpop.f32.mrf.mxu0
      %v1255 = vadd.f32 %v1113, %v1254
      %v1256 = vpop.f32.mrf.mxu0
      %1257 = vmatprep.mubr.f32.mxu0 0.0
      %v1258 = vand.u32 %v1009, 4294901760
      %1259 = vmatmul.mubr.f32.gmra.mxu0 %v1258
      %v1260 = vpop.f32.mrf.mxu0
      %v1261 = vadd.f32 %v1123, %v1260
      %v1262 = vpop.f32.mrf.mxu0
      %1263 = vmatprep.mubr.f32.mxu0 0.0
      %v1264 = vand.u32 %v1012, 4294901760
      %1265 = vmatmul.mubr.f32.gmra.mxu0 %v1264
      %v1266 = vpop.f32.mrf.mxu0
      %v1267 = vadd.f32 %v1133, %v1266
      %v1268 = vpop.f32.mrf.mxu0
      %1269 = vmatprep.mubr.f32.mxu0 0.0
      %v1270 = vand.u32 %v1015, 4294901760
      %1271 = vmatmul.mubr.f32.gmra.mxu0 %v1270
      %v1272 = vpop.f32.mrf.mxu0
      %v1273 = vadd.f32 %v1143, %v1272
      %v1274 = vpop.f32.mrf.mxu0
      %1275 = vmatprep.mubr.f32.mxu0 0.0
      %v1276 = vand.u32 %v1018, 4294901760
      %1277 = vmatmul.mubr.f32.gmra.mxu0 %v1276
      %v1278 = vpop.f32.mrf.mxu0
      %v1279 = vadd.f32 %v1153, %v1278
      %v1280 = vpop.f32.mrf.mxu0
      %1281 = vmatprep.mubr.f32.mxu0 0.0
      %v1282 = vand.u32 %v1021, 4294901760
      %1283 = vmatmul.mubr.f32.gmra.mxu0 %v1282
      %v1284 = vpop.f32.mrf.mxu0
      %v1285 = vadd.f32 %v1163, %v1284
      %v1286 = vpop.f32.mrf.mxu0
      %1287 = vmatprep.mubr.f32.mxu0 0.0
      %v1288 = vand.u32 %v1024, 4294901760
      %1289 = vmatmul.mubr.f32.gmra.mxu0 %v1288
      %v1290 = vpop.f32.mrf.mxu0
      %v1291 = vadd.f32 %v1173, %v1290
      %v1292 = vpop.f32.mrf.mxu0
      %1293 = vdwg.mxu0
      %1294 = vmatprep.subr.mxu0 0.0
      %1295 = vmatpush1.msra.mxu0 0.0
      %1296 = vmatprep.subr.mxu0 0.0
      %1297 = vmatpush1.msra.mxu0 0.0
      %1298 = vmatprep.subr.mxu0 0.0
      %1299 = vmatpush1.msra.mxu0 0.0
      %1300 = vmatprep.subr.mxu0 0.0
      %1301 = vmatpush1.msra.mxu0 0.0
      %1302 = vmatprep.subr.mxu0 0.0
      %1303 = vmatpush1.msra.mxu0 0.0
      %1304 = vmatprep.subr.mxu0 0.0
      %1305 = vmatpush1.msra.mxu0 0.0
      %1306 = vmatprep.subr.mxu0 0.0
      %1307 = vmatpush1.msra.mxu0 0.0
      %1308 = vmatprep.subr.mxu0 0.0
      %1309 = vmatpush1.msra.mxu0 0.0
      %1310 = vmatprep.subr.mxu0 0.0
      %1311 = vmatpush1.msra.mxu0 0.0
      %1312 = vmatprep.subr.mxu0 0.0
      %1313 = vmatpush1.msra.mxu0 0.0
      %1314 = vmatprep.subr.mxu0 0.0
      %1315 = vmatpush1.msra.mxu0 0.0
      %1316 = vmatprep.subr.mxu0 0.0
      %1317 = vmatpush1.msra.mxu0 0.0
      %1318 = vmatprep.subr.mxu0 0.0
      %1319 = vmatpush1.msra.mxu0 0.0
      %1320 = vmatprep.subr.mxu0 0.0
      %1321 = vmatpush1.msra.mxu0 0.0
      %1322 = vmatprep.subr.mxu0 0.0
      %1323 = vmatpush1.msra.mxu0 0.0
      %1324 = vmatprep.subr.mxu0 0.0
      %v1325 = vand.u32 %v1028, 4294901760
      %v1326 = vsub.f32 %v1028, %v1325
      %1327 = vmatpush1.msra.mxu0 %v1326
      %1328 = vmatprep.subr.mxu0 0.0
      %1329 = vmatpush2.msra.mxu0 0.0
      %1330 = vmatprep.subr.mxu0 0.0
      %1331 = vmatpush2.msra.mxu0 0.0
      %1332 = vmatprep.subr.mxu0 0.0
      %1333 = vmatpush2.msra.mxu0 0.0
      %1334 = vmatprep.subr.mxu0 0.0
      %1335 = vmatpush2.msra.mxu0 0.0
      %1336 = vmatprep.subr.mxu0 0.0
      %1337 = vmatpush2.msra.mxu0 0.0
      %1338 = vmatprep.subr.mxu0 0.0
      %1339 = vmatpush2.msra.mxu0 0.0
      %1340 = vmatprep.subr.mxu0 0.0
      %1341 = vmatpush2.msra.mxu0 0.0
      %1342 = vmatprep.subr.mxu0 0.0
      %1343 = vmatpush2.msra.mxu0 0.0
      %1344 = vmatprep.subr.mxu0 0.0
      %1345 = vmatpush2.msra.mxu0 0.0
      %1346 = vmatprep.subr.mxu0 0.0
      %1347 = vmatpush2.msra.mxu0 0.0
      %1348 = vmatprep.subr.mxu0 0.0
      %1349 = vmatpush2.msra.mxu0 0.0
      %1350 = vmatprep.subr.mxu0 0.0
      %1351 = vmatpush2.msra.mxu0 0.0
      %1352 = vmatprep.subr.mxu0 0.0
      %1353 = vmatpush2.msra.mxu0 0.0
      %1354 = vmatprep.subr.mxu0 0.0
      %1355 = vmatpush2.msra.mxu0 0.0
      %1356 = vmatprep.subr.mxu0 0.0
      %1357 = vmatpush2.msra.mxu0 0.0
      %1358 = vmatprep.subr.mxu0 0.0
      %1359 = vmatpush2.msra.mxu0 0.0
      %1360 = vmatprep.mubr.f32.mxu0 0.0
      %v1361 = vand.u32 %v1003, 4294901760
      %v1362 = vsub.f32 %v1003, %v1361
      %1363 = vmatmul.mubr.f32.gmra.mxu0 %v1362
      %v1364 = vpop.f32.mrf.mxu0
      %v1365 = vadd.f32 %v1249, %v1364
      %v1366 = vpop.f32.mrf.mxu0
      %1367 = vmatprep.mubr.f32.mxu0 0.0
      %v1368 = vand.u32 %v1006, 4294901760
      %v1369 = vsub.f32 %v1006, %v1368
      %1370 = vmatmul.mubr.f32.gmra.mxu0 %v1369
      %v1371 = vpop.f32.mrf.mxu0
      %v1372 = vadd.f32 %v1255, %v1371
      %v1373 = vpop.f32.mrf.mxu0
      %1374 = vmatprep.mubr.f32.mxu0 0.0
      %v1375 = vand.u32 %v1009, 4294901760
      %v1376 = vsub.f32 %v1009, %v1375
      %1377 = vmatmul.mubr.f32.gmra.mxu0 %v1376
      %v1378 = vpop.f32.mrf.mxu0
      %v1379 = vadd.f32 %v1261, %v1378
      %v1380 = vpop.f32.mrf.mxu0
      %1381 = vmatprep.mubr.f32.mxu0 0.0
      %v1382 = vand.u32 %v1012, 4294901760
      %v1383 = vsub.f32 %v1012, %v1382
      %1384 = vmatmul.mubr.f32.gmra.mxu0 %v1383
      %v1385 = vpop.f32.mrf.mxu0
      %v1386 = vadd.f32 %v1267, %v1385
      %v1387 = vpop.f32.mrf.mxu0
      %1388 = vmatprep.mubr.f32.mxu0 0.0
      %v1389 = vand.u32 %v1015, 4294901760
      %v1390 = vsub.f32 %v1015, %v1389
      %1391 = vmatmul.mubr.f32.gmra.mxu0 %v1390
      %v1392 = vpop.f32.mrf.mxu0
      %v1393 = vadd.f32 %v1273, %v1392
      %v1394 = vpop.f32.mrf.mxu0
      %1395 = vmatprep.mubr.f32.mxu0 0.0
      %v1396 = vand.u32 %v1018, 4294901760
      %v1397 = vsub.f32 %v1018, %v1396
      %1398 = vmatmul.mubr.f32.gmra.mxu0 %v1397
      %v1399 = vpop.f32.mrf.mxu0
      %v1400 = vadd.f32 %v1279, %v1399
      %v1401 = vpop.f32.mrf.mxu0
      %1402 = vmatprep.mubr.f32.mxu0 0.0
      %v1403 = vand.u32 %v1021, 4294901760
      %v1404 = vsub.f32 %v1021, %v1403
      %1405 = vmatmul.mubr.f32.gmra.mxu0 %v1404
      %v1406 = vpop.f32.mrf.mxu0
      %v1407 = vadd.f32 %v1285, %v1406
      %v1408 = vpop.f32.mrf.mxu0
      %1409 = vmatprep.mubr.f32.mxu0 0.0
      %v1410 = vand.u32 %v1024, 4294901760
      %v1411 = vsub.f32 %v1024, %v1410
      %1412 = vmatmul.mubr.f32.gmra.mxu0 %v1411
      %v1413 = vpop.f32.mrf.mxu0
      %v1414 = vadd.f32 %v1291, %v1413
      %v1415 = vpop.f32.mrf.mxu0
      %1416 = vdwg.mxu0
      %1417 = vmatprep.subr.mxu0 0.0
      %1418 = vmatpush1.msra.mxu0 0.0
      %1419 = vmatprep.subr.mxu0 0.0
      %1420 = vmatpush1.msra.mxu0 0.0
      %1421 = vmatprep.subr.mxu0 0.0
      %1422 = vmatpush1.msra.mxu0 0.0
      %1423 = vmatprep.subr.mxu0 0.0
      %1424 = vmatpush1.msra.mxu0 0.0
      %1425 = vmatprep.subr.mxu0 0.0
      %1426 = vmatpush1.msra.mxu0 0.0
      %1427 = vmatprep.subr.mxu0 0.0
      %1428 = vmatpush1.msra.mxu0 0.0
      %1429 = vmatprep.subr.mxu0 0.0
      %1430 = vmatpush1.msra.mxu0 0.0
      %1431 = vmatprep.subr.mxu0 0.0
      %1432 = vmatpush1.msra.mxu0 0.0
      %1433 = vmatprep.subr.mxu0 0.0
      %1434 = vmatpush1.msra.mxu0 0.0
      %1435 = vmatprep.subr.mxu0 0.0
      %1436 = vmatpush1.msra.mxu0 0.0
      %1437 = vmatprep.subr.mxu0 0.0
      %1438 = vmatpush1.msra.mxu0 0.0
      %1439 = vmatprep.subr.mxu0 0.0
      %1440 = vmatpush1.msra.mxu0 0.0
      %1441 = vmatprep.subr.mxu0 0.0
      %1442 = vmatpush1.msra.mxu0 0.0
      %1443 = vmatprep.subr.mxu0 0.0
      %1444 = vmatpush1.msra.mxu0 0.0
      %1445 = vmatprep.subr.mxu0 0.0
      %1446 = vmatpush1.msra.mxu0 0.0
      %1447 = vmatprep.subr.mxu0 0.0
      %v1448 = vand.u32 %v1028, 4294901760
      %1449 = vmatpush1.msra.mxu0 %v1448
      %1450 = vmatprep.subr.mxu0 0.0
      %1451 = vmatpush2.msra.mxu0 0.0
      %1452 = vmatprep.subr.mxu0 0.0
      %1453 = vmatpush2.msra.mxu0 0.0
      %1454 = vmatprep.subr.mxu0 0.0
      %1455 = vmatpush2.msra.mxu0 0.0
      %1456 = vmatprep.subr.mxu0 0.0
      %1457 = vmatpush2.msra.mxu0 0.0
      %1458 = vmatprep.subr.mxu0 0.0
      %1459 = vmatpush2.msra.mxu0 0.0
      %1460 = vmatprep.subr.mxu0 0.0
      %1461 = vmatpush2.msra.mxu0 0.0
      %1462 = vmatprep.subr.mxu0 0.0
      %1463 = vmatpush2.msra.mxu0 0.0
      %1464 = vmatprep.subr.mxu0 0.0
      %1465 = vmatpush2.msra.mxu0 0.0
      %1466 = vmatprep.subr.mxu0 0.0
      %1467 = vmatpush2.msra.mxu0 0.0
      %1468 = vmatprep.subr.mxu0 0.0
      %1469 = vmatpush2.msra.mxu0 0.0
      %1470 = vmatprep.subr.mxu0 0.0
      %1471 = vmatpush2.msra.mxu0 0.0
      %1472 = vmatprep.subr.mxu0 0.0
      %1473 = vmatpush2.msra.mxu0 0.0
      %1474 = vmatprep.subr.mxu0 0.0
      %1475 = vmatpush2.msra.mxu0 0.0
      %1476 = vmatprep.subr.mxu0 0.0
      %1477 = vmatpush2.msra.mxu0 0.0
      %1478 = vmatprep.subr.mxu0 0.0
      %1479 = vmatpush2.msra.mxu0 0.0
      %1480 = vmatprep.subr.mxu0 0.0
      %1481 = vmatpush2.msra.mxu0 0.0
      %1482 = vmatprep.mubr.f32.mxu0 0.0
      %v1483 = vand.u32 %v1003, 4294901760
      %v1484 = vsub.f32 %v1003, %v1483
      %v1485 = vand.u32 %v1484, 4294901760
      %1486 = vmatmul.mubr.f32.gmra.mxu0 %v1485
      %v1487 = vpop.f32.mrf.mxu0
      %v1488 = vadd.f32 %v1365, %v1487
      %v1489 = vpop.f32.mrf.mxu0
      %1490 = vmatprep.mubr.f32.mxu0 0.0
      %v1491 = vand.u32 %v1006, 4294901760
      %v1492 = vsub.f32 %v1006, %v1491
      %v1493 = vand.u32 %v1492, 4294901760
      %1494 = vmatmul.mubr.f32.gmra.mxu0 %v1493
      %v1495 = vpop.f32.mrf.mxu0
      %v1496 = vadd.f32 %v1372, %v1495
      %v1497 = vpop.f32.mrf.mxu0
      %1498 = vmatprep.mubr.f32.mxu0 0.0
      %v1499 = vand.u32 %v1009, 4294901760
      %v1500 = vsub.f32 %v1009, %v1499
      %v1501 = vand.u32 %v1500, 4294901760
      %1502 = vmatmul.mubr.f32.gmra.mxu0 %v1501
      %v1503 = vpop.f32.mrf.mxu0
      %v1504 = vadd.f32 %v1379, %v1503
      %v1505 = vpop.f32.mrf.mxu0
      %1506 = vmatprep.mubr.f32.mxu0 0.0
      %v1507 = vand.u32 %v1012, 4294901760
      %v1508 = vsub.f32 %v1012, %v1507
      %v1509 = vand.u32 %v1508, 4294901760
      %1510 = vmatmul.mubr.f32.gmra.mxu0 %v1509
      %v1511 = vpop.f32.mrf.mxu0
      %v1512 = vadd.f32 %v1386, %v1511
      %v1513 = vpop.f32.mrf.mxu0
      %1514 = vmatprep.mubr.f32.mxu0 0.0
      %v1515 = vand.u32 %v1015, 4294901760
      %v1516 = vsub.f32 %v1015, %v1515
      %v1517 = vand.u32 %v1516, 4294901760
      %1518 = vmatmul.mubr.f32.gmra.mxu0 %v1517
      %v1519 = vpop.f32.mrf.mxu0
      %v1520 = vadd.f32 %v1393, %v1519
      %v1521 = vpop.f32.mrf.mxu0
      %1522 = vmatprep.mubr.f32.mxu0 0.0
      %v1523 = vand.u32 %v1018, 4294901760
      %v1524 = vsub.f32 %v1018, %v1523
      %v1525 = vand.u32 %v1524, 4294901760
      %1526 = vmatmul.mubr.f32.gmra.mxu0 %v1525
      %v1527 = vpop.f32.mrf.mxu0
      %v1528 = vadd.f32 %v1400, %v1527
      %v1529 = vpop.f32.mrf.mxu0
      %1530 = vmatprep.mubr.f32.mxu0 0.0
      %v1531 = vand.u32 %v1021, 4294901760
      %v1532 = vsub.f32 %v1021, %v1531
      %v1533 = vand.u32 %v1532, 4294901760
      %1534 = vmatmul.mubr.f32.gmra.mxu0 %v1533
      %v1535 = vpop.f32.mrf.mxu0
      %v1536 = vadd.f32 %v1407, %v1535
      %v1537 = vpop.f32.mrf.mxu0
      %1538 = vmatprep.mubr.f32.mxu0 0.0
      %v1539 = vand.u32 %v1024, 4294901760
      %v1540 = vsub.f32 %v1024, %v1539
      %v1541 = vand.u32 %v1540, 4294901760
      %1542 = vmatmul.mubr.f32.gmra.mxu0 %v1541
      %v1543 = vpop.f32.mrf.mxu0
      %v1544 = vadd.f32 %v1414, %v1543
      %v1545 = vpop.f32.mrf.mxu0
      %1546 = vdwg.mxu0
      %1547 = vmatprep.subr.mxu0 0.0
      %1548 = vmatpush1.msra.mxu0 0.0
      %1549 = vmatprep.subr.mxu0 0.0
      %1550 = vmatpush1.msra.mxu0 0.0
      %1551 = vmatprep.subr.mxu0 0.0
      %1552 = vmatpush1.msra.mxu0 0.0
      %1553 = vmatprep.subr.mxu0 0.0
      %1554 = vmatpush1.msra.mxu0 0.0
      %1555 = vmatprep.subr.mxu0 0.0
      %1556 = vmatpush1.msra.mxu0 0.0
      %1557 = vmatprep.subr.mxu0 0.0
      %1558 = vmatpush1.msra.mxu0 0.0
      %1559 = vmatprep.subr.mxu0 0.0
      %1560 = vmatpush1.msra.mxu0 0.0
      %1561 = vmatprep.subr.mxu0 0.0
      %1562 = vmatpush1.msra.mxu0 0.0
      %1563 = vmatprep.subr.mxu0 0.0
      %1564 = vmatpush1.msra.mxu0 0.0
      %1565 = vmatprep.subr.mxu0 0.0
      %1566 = vmatpush1.msra.mxu0 0.0
      %1567 = vmatprep.subr.mxu0 0.0
      %1568 = vmatpush1.msra.mxu0 0.0
      %1569 = vmatprep.subr.mxu0 0.0
      %1570 = vmatpush1.msra.mxu0 0.0
      %1571 = vmatprep.subr.mxu0 0.0
      %1572 = vmatpush1.msra.mxu0 0.0
      %1573 = vmatprep.subr.mxu0 0.0
      %1574 = vmatpush1.msra.mxu0 0.0
      %1575 = vmatprep.subr.mxu0 0.0
      %1576 = vmatpush1.msra.mxu0 0.0
      %1577 = vmatprep.subr.mxu0 0.0
      %v1578 = vand.u32 %v1028, 4294901760
      %v1579 = vsub.f32 %v1028, %v1578
      %v1580 = vand.u32 %v1579, 4294901760
      %1581 = vmatpush1.msra.mxu0 %v1580
      %1582 = vmatprep.subr.mxu0 0.0
      %1583 = vmatpush2.msra.mxu0 0.0
      %1584 = vmatprep.subr.mxu0 0.0
      %1585 = vmatpush2.msra.mxu0 0.0
      %1586 = vmatprep.subr.mxu0 0.0
      %1587 = vmatpush2.msra.mxu0 0.0
      %1588 = vmatprep.subr.mxu0 0.0
      %1589 = vmatpush2.msra.mxu0 0.0
      %1590 = vmatprep.subr.mxu0 0.0
      %1591 = vmatpush2.msra.mxu0 0.0
      %1592 = vmatprep.subr.mxu0 0.0
      %1593 = vmatpush2.msra.mxu0 0.0
      %1594 = vmatprep.subr.mxu0 0.0
      %1595 = vmatpush2.msra.mxu0 0.0
      %1596 = vmatprep.subr.mxu0 0.0
      %1597 = vmatpush2.msra.mxu0 0.0
      %1598 = vmatprep.subr.mxu0 0.0
      %1599 = vmatpush2.msra.mxu0 0.0
      %1600 = vmatprep.subr.mxu0 0.0
      %1601 = vmatpush2.msra.mxu0 0.0
      %1602 = vmatprep.subr.mxu0 0.0
      %1603 = vmatpush2.msra.mxu0 0.0
      %1604 = vmatprep.subr.mxu0 0.0
      %1605 = vmatpush2.msra.mxu0 0.0
      %1606 = vmatprep.subr.mxu0 0.0
      %1607 = vmatpush2.msra.mxu0 0.0
      %1608 = vmatprep.subr.mxu0 0.0
      %1609 = vmatpush2.msra.mxu0 0.0
      %1610 = vmatprep.subr.mxu0 0.0
      %1611 = vmatpush2.msra.mxu0 0.0
      %1612 = vmatprep.subr.mxu0 0.0
      %1613 = vmatpush2.msra.mxu0 0.0
      %1614 = vmatprep.mubr.f32.mxu0 0.0
      %v1615 = vand.u32 %v1003, 4294901760
      %1616 = vmatmul.mubr.f32.gmra.mxu0 %v1615
      %v1617 = vpop.f32.mrf.mxu0
      %v1618 = vadd.f32 %v1488, %v1617
      %v1619 = vpop.f32.mrf.mxu0
      %1620 = vmatprep.mubr.f32.mxu0 0.0
      %v1621 = vand.u32 %v1006, 4294901760
      %1622 = vmatmul.mubr.f32.gmra.mxu0 %v1621
      %v1623 = vpop.f32.mrf.mxu0
      %v1624 = vadd.f32 %v1496, %v1623
      %v1625 = vpop.f32.mrf.mxu0
      %1626 = vmatprep.mubr.f32.mxu0 0.0
      %v1627 = vand.u32 %v1009, 4294901760
      %1628 = vmatmul.mubr.f32.gmra.mxu0 %v1627
      %v1629 = vpop.f32.mrf.mxu0
      %v1630 = vadd.f32 %v1504, %v1629
      %v1631 = vpop.f32.mrf.mxu0
      %1632 = vmatprep.mubr.f32.mxu0 0.0
      %v1633 = vand.u32 %v1012, 4294901760
      %1634 = vmatmul.mubr.f32.gmra.mxu0 %v1633
      %v1635 = vpop.f32.mrf.mxu0
      %v1636 = vadd.f32 %v1512, %v1635
      %v1637 = vpop.f32.mrf.mxu0
      %1638 = vmatprep.mubr.f32.mxu0 0.0
      %v1639 = vand.u32 %v1015, 4294901760
      %1640 = vmatmul.mubr.f32.gmra.mxu0 %v1639
      %v1641 = vpop.f32.mrf.mxu0
      %v1642 = vadd.f32 %v1520, %v1641
      %v1643 = vpop.f32.mrf.mxu0
      %1644 = vmatprep.mubr.f32.mxu0 0.0
      %v1645 = vand.u32 %v1018, 4294901760
      %1646 = vmatmul.mubr.f32.gmra.mxu0 %v1645
      %v1647 = vpop.f32.mrf.mxu0
      %v1648 = vadd.f32 %v1528, %v1647
      %v1649 = vpop.f32.mrf.mxu0
      %1650 = vmatprep.mubr.f32.mxu0 0.0
      %v1651 = vand.u32 %v1021, 4294901760
      %1652 = vmatmul.mubr.f32.gmra.mxu0 %v1651
      %v1653 = vpop.f32.mrf.mxu0
      %v1654 = vadd.f32 %v1536, %v1653
      %v1655 = vpop.f32.mrf.mxu0
      %1656 = vmatprep.mubr.f32.mxu0 0.0
      %v1657 = vand.u32 %v1024, 4294901760
      %1658 = vmatmul.mubr.f32.gmra.mxu0 %v1657
      %v1659 = vpop.f32.mrf.mxu0
      %v1660 = vadd.f32 %v1544, %v1659
      %v1661 = vpop.f32.mrf.mxu0
      %1662 = vdwg.mxu0
      %1663 = vmatprep.subr.mxu0 0.0
      %1664 = vmatpush1.msra.mxu0 0.0
      %1665 = vmatprep.subr.mxu0 0.0
      %1666 = vmatpush1.msra.mxu0 0.0
      %1667 = vmatprep.subr.mxu0 0.0
      %1668 = vmatpush1.msra.mxu0 0.0
      %1669 = vmatprep.subr.mxu0 0.0
      %1670 = vmatpush1.msra.mxu0 0.0
      %1671 = vmatprep.subr.mxu0 0.0
      %1672 = vmatpush1.msra.mxu0 0.0
      %1673 = vmatprep.subr.mxu0 0.0
      %1674 = vmatpush1.msra.mxu0 0.0
      %1675 = vmatprep.subr.mxu0 0.0
      %1676 = vmatpush1.msra.mxu0 0.0
      %1677 = vmatprep.subr.mxu0 0.0
      %1678 = vmatpush1.msra.mxu0 0.0
      %1679 = vmatprep.subr.mxu0 0.0
      %1680 = vmatpush1.msra.mxu0 0.0
      %1681 = vmatprep.subr.mxu0 0.0
      %1682 = vmatpush1.msra.mxu0 0.0
      %1683 = vmatprep.subr.mxu0 0.0
      %1684 = vmatpush1.msra.mxu0 0.0
      %1685 = vmatprep.subr.mxu0 0.0
      %1686 = vmatpush1.msra.mxu0 0.0
      %1687 = vmatprep.subr.mxu0 0.0
      %1688 = vmatpush1.msra.mxu0 0.0
      %1689 = vmatprep.subr.mxu0 0.0
      %1690 = vmatpush1.msra.mxu0 0.0
      %1691 = vmatprep.subr.mxu0 0.0
      %1692 = vmatpush1.msra.mxu0 0.0
      %1693 = vmatprep.subr.mxu0 0.0
      %v1694 = vand.u32 %v1028, 4294901760
      %1695 = vmatpush1.msra.mxu0 %v1694
      %1696 = vmatprep.subr.mxu0 0.0
      %1697 = vmatpush2.msra.mxu0 0.0
      %1698 = vmatprep.subr.mxu0 0.0
      %1699 = vmatpush2.msra.mxu0 0.0
      %1700 = vmatprep.subr.mxu0 0.0
      %1701 = vmatpush2.msra.mxu0 0.0
      %1702 = vmatprep.subr.mxu0 0.0
      %1703 = vmatpush2.msra.mxu0 0.0
      %1704 = vmatprep.subr.mxu0 0.0
      %1705 = vmatpush2.msra.mxu0 0.0
      %1706 = vmatprep.subr.mxu0 0.0
      %1707 = vmatpush2.msra.mxu0 0.0
      %1708 = vmatprep.subr.mxu0 0.0
      %1709 = vmatpush2.msra.mxu0 0.0
      %1710 = vmatprep.subr.mxu0 0.0
      %1711 = vmatpush2.msra.mxu0 0.0
      %1712 = vmatprep.subr.mxu0 0.0
      %1713 = vmatpush2.msra.mxu0 0.0
      %1714 = vmatprep.subr.mxu0 0.0
      %1715 = vmatpush2.msra.mxu0 0.0
      %1716 = vmatprep.subr.mxu0 0.0
      %1717 = vmatpush2.msra.mxu0 0.0
      %1718 = vmatprep.subr.mxu0 0.0
      %1719 = vmatpush2.msra.mxu0 0.0
      %1720 = vmatprep.subr.mxu0 0.0
      %1721 = vmatpush2.msra.mxu0 0.0
      %1722 = vmatprep.subr.mxu0 0.0
      %1723 = vmatpush2.msra.mxu0 0.0
      %1724 = vmatprep.subr.mxu0 0.0
      %1725 = vmatpush2.msra.mxu0 0.0
      %1726 = vmatprep.subr.mxu0 0.0
      %1727 = vmatpush2.msra.mxu0 0.0
      %1728 = vmatprep.mubr.f32.mxu0 0.0
      %v1729 = vand.u32 %v1003, 4294901760
      %1730 = vmatmul.mubr.f32.gmra.mxu0 %v1729
      %v1731 = vpop.f32.mrf.mxu0
      %v1732 = vadd.f32 %v1618, %v1731
      %v1733 = vpop.f32.mrf.mxu0
      %1734 = vmatprep.mubr.f32.mxu0 0.0
      %v1735 = vand.u32 %v1006, 4294901760
      %1736 = vmatmul.mubr.f32.gmra.mxu0 %v1735
      %v1737 = vpop.f32.mrf.mxu0
      %v1738 = vadd.f32 %v1624, %v1737
      %v1739 = vpop.f32.mrf.mxu0
      %1740 = vmatprep.mubr.f32.mxu0 0.0
      %v1741 = vand.u32 %v1009, 4294901760
      %1742 = vmatmul.mubr.f32.gmra.mxu0 %v1741
      %v1743 = vpop.f32.mrf.mxu0
      %v1744 = vadd.f32 %v1630, %v1743
      %v1745 = vpop.f32.mrf.mxu0
      %1746 = vmatprep.mubr.f32.mxu0 0.0
      %v1747 = vand.u32 %v1012, 4294901760
      %1748 = vmatmul.mubr.f32.gmra.mxu0 %v1747
      %v1749 = vpop.f32.mrf.mxu0
      %v1750 = vadd.f32 %v1636, %v1749
      %v1751 = vpop.f32.mrf.mxu0
      %1752 = vmatprep.mubr.f32.mxu0 0.0
      %v1753 = vand.u32 %v1015, 4294901760
      %1754 = vmatmul.mubr.f32.gmra.mxu0 %v1753
      %v1755 = vpop.f32.mrf.mxu0
      %v1756 = vadd.f32 %v1642, %v1755
      %v1757 = vpop.f32.mrf.mxu0
      %1758 = vmatprep.mubr.f32.mxu0 0.0
      %v1759 = vand.u32 %v1018, 4294901760
      %1760 = vmatmul.mubr.f32.gmra.mxu0 %v1759
      %v1761 = vpop.f32.mrf.mxu0
      %v1762 = vadd.f32 %v1648, %v1761
      %v1763 = vpop.f32.mrf.mxu0
      %1764 = vmatprep.mubr.f32.mxu0 0.0
      %v1765 = vand.u32 %v1021, 4294901760
      %1766 = vmatmul.mubr.f32.gmra.mxu0 %v1765
      %v1767 = vpop.f32.mrf.mxu0
      %v1768 = vadd.f32 %v1654, %v1767
      %v1769 = vpop.f32.mrf.mxu0
      %1770 = vmatprep.mubr.f32.mxu0 0.0
      %v1771 = vand.u32 %v1024, 4294901760
      %1772 = vmatmul.mubr.f32.gmra.mxu0 %v1771
      %v1773 = vpop.f32.mrf.mxu0
      %v1774 = vadd.f32 %v1660, %v1773
      %v1775 = vpop.f32.mrf.mxu0
      %1776 = vdwg.mxu0
      %v1778 = vsel %vm225, %v994, 0
      %v1781 = vsel %vm225, %v995, 0
      %v1784 = vsel %vm225, %v996, 0
      %v1787 = vsel %vm225, %v997, 0
      %v1790 = vsel %vm225, %v998, 0
      %v1793 = vsel %vm225, %v999, 0
      %v1796 = vsel %vm225, %v1000, 0
      %v1799 = vsel %vm225, %v1001, 0
      %v1802 = vsel %vm1026, %v937, 0
      %1804 = vmatprep.subr.mxu0 0.0
      %1805 = vmatpush1.msra.mxu0 0.0
      %1806 = vmatprep.subr.mxu0 0.0
      %1807 = vmatpush1.msra.mxu0 0.0
      %1808 = vmatprep.subr.mxu0 0.0
      %1809 = vmatpush1.msra.mxu0 0.0
      %1810 = vmatprep.subr.mxu0 0.0
      %1811 = vmatpush1.msra.mxu0 0.0
      %1812 = vmatprep.subr.mxu0 0.0
      %1813 = vmatpush1.msra.mxu0 0.0
      %1814 = vmatprep.subr.mxu0 0.0
      %1815 = vmatpush1.msra.mxu0 0.0
      %1816 = vmatprep.subr.mxu0 0.0
      %1817 = vmatpush1.msra.mxu0 0.0
      %1818 = vmatprep.subr.mxu0 0.0
      %1819 = vmatpush1.msra.mxu0 0.0
      %1820 = vmatprep.subr.mxu0 0.0
      %1821 = vmatpush1.msra.mxu0 0.0
      %1822 = vmatprep.subr.mxu0 0.0
      %1823 = vmatpush1.msra.mxu0 0.0
      %1824 = vmatprep.subr.mxu0 0.0
      %1825 = vmatpush1.msra.mxu0 0.0
      %1826 = vmatprep.subr.mxu0 0.0
      %1827 = vmatpush1.msra.mxu0 0.0
      %1828 = vmatprep.subr.mxu0 0.0
      %1829 = vmatpush1.msra.mxu0 0.0
      %1830 = vmatprep.subr.mxu0 0.0
      %1831 = vmatpush1.msra.mxu0 0.0
      %1832 = vmatprep.subr.mxu0 0.0
      %1833 = vmatpush1.msra.mxu0 0.0
      %1834 = vmatprep.subr.mxu0 0.0
      %v1835 = vand.u32 %v1802, 4294901760
      %1836 = vmatpush1.msra.mxu0 %v1835
      %1837 = vmatprep.subr.mxu0 0.0
      %1838 = vmatpush2.msra.mxu0 0.0
      %1839 = vmatprep.subr.mxu0 0.0
      %1840 = vmatpush2.msra.mxu0 0.0
      %1841 = vmatprep.subr.mxu0 0.0
      %1842 = vmatpush2.msra.mxu0 0.0
      %1843 = vmatprep.subr.mxu0 0.0
      %1844 = vmatpush2.msra.mxu0 0.0
      %1845 = vmatprep.subr.mxu0 0.0
      %1846 = vmatpush2.msra.mxu0 0.0
      %1847 = vmatprep.subr.mxu0 0.0
      %1848 = vmatpush2.msra.mxu0 0.0
      %1849 = vmatprep.subr.mxu0 0.0
      %1850 = vmatpush2.msra.mxu0 0.0
      %1851 = vmatprep.subr.mxu0 0.0
      %1852 = vmatpush2.msra.mxu0 0.0
      %1853 = vmatprep.subr.mxu0 0.0
      %1854 = vmatpush2.msra.mxu0 0.0
      %1855 = vmatprep.subr.mxu0 0.0
      %1856 = vmatpush2.msra.mxu0 0.0
      %1857 = vmatprep.subr.mxu0 0.0
      %1858 = vmatpush2.msra.mxu0 0.0
      %1859 = vmatprep.subr.mxu0 0.0
      %1860 = vmatpush2.msra.mxu0 0.0
      %1861 = vmatprep.subr.mxu0 0.0
      %1862 = vmatpush2.msra.mxu0 0.0
      %1863 = vmatprep.subr.mxu0 0.0
      %1864 = vmatpush2.msra.mxu0 0.0
      %1865 = vmatprep.subr.mxu0 0.0
      %1866 = vmatpush2.msra.mxu0 0.0
      %1867 = vmatprep.subr.mxu0 0.0
      %1868 = vmatpush2.msra.mxu0 0.0
      %1869 = vmatprep.mubr.f32.mxu0 0.0
      %v1870 = vand.u32 %v1778, 4294901760
      %v1871 = vsub.f32 %v1778, %v1870
      %v1872 = vand.u32 %v1871, 4294901760
      %v1873 = vsub.f32 %v1871, %v1872
      %v1874 = vand.u32 %v1873, 4294901760
      %1875 = vmatmul.mubr.f32.gmra.mxu0 %v1874
      %v1876 = vpop.f32.mrf.mxu0
      %v1877 = vadd.f32 0.0, %v1876
      %v1878 = vpop.f32.mrf.mxu0
      %1879 = vmatprep.mubr.f32.mxu0 0.0
      %v1880 = vand.u32 %v1781, 4294901760
      %v1881 = vsub.f32 %v1781, %v1880
      %v1882 = vand.u32 %v1881, 4294901760
      %v1883 = vsub.f32 %v1881, %v1882
      %v1884 = vand.u32 %v1883, 4294901760
      %1885 = vmatmul.mubr.f32.gmra.mxu0 %v1884
      %v1886 = vpop.f32.mrf.mxu0
      %v1887 = vadd.f32 0.0, %v1886
      %v1888 = vpop.f32.mrf.mxu0
      %1889 = vmatprep.mubr.f32.mxu0 0.0
      %v1890 = vand.u32 %v1784, 4294901760
      %v1891 = vsub.f32 %v1784, %v1890
      %v1892 = vand.u32 %v1891, 4294901760
      %v1893 = vsub.f32 %v1891, %v1892
      %v1894 = vand.u32 %v1893, 4294901760
      %1895 = vmatmul.mubr.f32.gmra.mxu0 %v1894
      %v1896 = vpop.f32.mrf.mxu0
      %v1897 = vadd.f32 0.0, %v1896
      %v1898 = vpop.f32.mrf.mxu0
      %1899 = vmatprep.mubr.f32.mxu0 0.0
      %v1900 = vand.u32 %v1787, 4294901760
      %v1901 = vsub.f32 %v1787, %v1900
      %v1902 = vand.u32 %v1901, 4294901760
      %v1903 = vsub.f32 %v1901, %v1902
      %v1904 = vand.u32 %v1903, 4294901760
      %1905 = vmatmul.mubr.f32.gmra.mxu0 %v1904
      %v1906 = vpop.f32.mrf.mxu0
      %v1907 = vadd.f32 0.0, %v1906
      %v1908 = vpop.f32.mrf.mxu0
      %1909 = vmatprep.mubr.f32.mxu0 0.0
      %v1910 = vand.u32 %v1790, 4294901760
      %v1911 = vsub.f32 %v1790, %v1910
      %v1912 = vand.u32 %v1911, 4294901760
      %v1913 = vsub.f32 %v1911, %v1912
      %v1914 = vand.u32 %v1913, 4294901760
      %1915 = vmatmul.mubr.f32.gmra.mxu0 %v1914
      %v1916 = vpop.f32.mrf.mxu0
      %v1917 = vadd.f32 0.0, %v1916
      %v1918 = vpop.f32.mrf.mxu0
      %1919 = vmatprep.mubr.f32.mxu0 0.0
      %v1920 = vand.u32 %v1793, 4294901760
      %v1921 = vsub.f32 %v1793, %v1920
      %v1922 = vand.u32 %v1921, 4294901760
      %v1923 = vsub.f32 %v1921, %v1922
      %v1924 = vand.u32 %v1923, 4294901760
      %1925 = vmatmul.mubr.f32.gmra.mxu0 %v1924
      %v1926 = vpop.f32.mrf.mxu0
      %v1927 = vadd.f32 0.0, %v1926
      %v1928 = vpop.f32.mrf.mxu0
      %1929 = vmatprep.mubr.f32.mxu0 0.0
      %v1930 = vand.u32 %v1796, 4294901760
      %v1931 = vsub.f32 %v1796, %v1930
      %v1932 = vand.u32 %v1931, 4294901760
      %v1933 = vsub.f32 %v1931, %v1932
      %v1934 = vand.u32 %v1933, 4294901760
      %1935 = vmatmul.mubr.f32.gmra.mxu0 %v1934
      %v1936 = vpop.f32.mrf.mxu0
      %v1937 = vadd.f32 0.0, %v1936
      %v1938 = vpop.f32.mrf.mxu0
      %1939 = vmatprep.mubr.f32.mxu0 0.0
      %v1940 = vand.u32 %v1799, 4294901760
      %v1941 = vsub.f32 %v1799, %v1940
      %v1942 = vand.u32 %v1941, 4294901760
      %v1943 = vsub.f32 %v1941, %v1942
      %v1944 = vand.u32 %v1943, 4294901760
      %1945 = vmatmul.mubr.f32.gmra.mxu0 %v1944
      %v1946 = vpop.f32.mrf.mxu0
      %v1947 = vadd.f32 0.0, %v1946
      %v1948 = vpop.f32.mrf.mxu0
      %1949 = vdwg.mxu0
      %1950 = vmatprep.subr.mxu0 0.0
      %1951 = vmatpush1.msra.mxu0 0.0
      %1952 = vmatprep.subr.mxu0 0.0
      %1953 = vmatpush1.msra.mxu0 0.0
      %1954 = vmatprep.subr.mxu0 0.0
      %1955 = vmatpush1.msra.mxu0 0.0
      %1956 = vmatprep.subr.mxu0 0.0
      %1957 = vmatpush1.msra.mxu0 0.0
      %1958 = vmatprep.subr.mxu0 0.0
      %1959 = vmatpush1.msra.mxu0 0.0
      %1960 = vmatprep.subr.mxu0 0.0
      %1961 = vmatpush1.msra.mxu0 0.0
      %1962 = vmatprep.subr.mxu0 0.0
      %1963 = vmatpush1.msra.mxu0 0.0
      %1964 = vmatprep.subr.mxu0 0.0
      %1965 = vmatpush1.msra.mxu0 0.0
      %1966 = vmatprep.subr.mxu0 0.0
      %1967 = vmatpush1.msra.mxu0 0.0
      %1968 = vmatprep.subr.mxu0 0.0
      %1969 = vmatpush1.msra.mxu0 0.0
      %1970 = vmatprep.subr.mxu0 0.0
      %1971 = vmatpush1.msra.mxu0 0.0
      %1972 = vmatprep.subr.mxu0 0.0
      %1973 = vmatpush1.msra.mxu0 0.0
      %1974 = vmatprep.subr.mxu0 0.0
      %1975 = vmatpush1.msra.mxu0 0.0
      %1976 = vmatprep.subr.mxu0 0.0
      %1977 = vmatpush1.msra.mxu0 0.0
      %1978 = vmatprep.subr.mxu0 0.0
      %1979 = vmatpush1.msra.mxu0 0.0
      %1980 = vmatprep.subr.mxu0 0.0
      %v1981 = vand.u32 %v1802, 4294901760
      %v1982 = vsub.f32 %v1802, %v1981
      %v1983 = vand.u32 %v1982, 4294901760
      %v1984 = vsub.f32 %v1982, %v1983
      %v1985 = vand.u32 %v1984, 4294901760
      %1986 = vmatpush1.msra.mxu0 %v1985
      %1987 = vmatprep.subr.mxu0 0.0
      %1988 = vmatpush2.msra.mxu0 0.0
      %1989 = vmatprep.subr.mxu0 0.0
      %1990 = vmatpush2.msra.mxu0 0.0
      %1991 = vmatprep.subr.mxu0 0.0
      %1992 = vmatpush2.msra.mxu0 0.0
      %1993 = vmatprep.subr.mxu0 0.0
      %1994 = vmatpush2.msra.mxu0 0.0
      %1995 = vmatprep.subr.mxu0 0.0
      %1996 = vmatpush2.msra.mxu0 0.0
      %1997 = vmatprep.subr.mxu0 0.0
      %1998 = vmatpush2.msra.mxu0 0.0
      %1999 = vmatprep.subr.mxu0 0.0
      %2000 = vmatpush2.msra.mxu0 0.0
      %2001 = vmatprep.subr.mxu0 0.0
      %2002 = vmatpush2.msra.mxu0 0.0
      %2003 = vmatprep.subr.mxu0 0.0
      %2004 = vmatpush2.msra.mxu0 0.0
      %2005 = vmatprep.subr.mxu0 0.0
      %2006 = vmatpush2.msra.mxu0 0.0
      %2007 = vmatprep.subr.mxu0 0.0
      %2008 = vmatpush2.msra.mxu0 0.0
      %2009 = vmatprep.subr.mxu0 0.0
      %2010 = vmatpush2.msra.mxu0 0.0
      %2011 = vmatprep.subr.mxu0 0.0
      %2012 = vmatpush2.msra.mxu0 0.0
      %2013 = vmatprep.subr.mxu0 0.0
      %2014 = vmatpush2.msra.mxu0 0.0
      %2015 = vmatprep.subr.mxu0 0.0
      %2016 = vmatpush2.msra.mxu0 0.0
      %2017 = vmatprep.subr.mxu0 0.0
      %2018 = vmatpush2.msra.mxu0 0.0
      %2019 = vmatprep.mubr.f32.mxu0 0.0
      %v2020 = vand.u32 %v1778, 4294901760
      %2021 = vmatmul.mubr.f32.gmra.mxu0 %v2020
      %v2022 = vpop.f32.mrf.mxu0
      %v2023 = vadd.f32 %v1877, %v2022
      %v2024 = vpop.f32.mrf.mxu0
      %2025 = vmatprep.mubr.f32.mxu0 0.0
      %v2026 = vand.u32 %v1781, 4294901760
      %2027 = vmatmul.mubr.f32.gmra.mxu0 %v2026
      %v2028 = vpop.f32.mrf.mxu0
      %v2029 = vadd.f32 %v1887, %v2028
      %v2030 = vpop.f32.mrf.mxu0
      %2031 = vmatprep.mubr.f32.mxu0 0.0
      %v2032 = vand.u32 %v1784, 4294901760
      %2033 = vmatmul.mubr.f32.gmra.mxu0 %v2032
      %v2034 = vpop.f32.mrf.mxu0
      %v2035 = vadd.f32 %v1897, %v2034
      %v2036 = vpop.f32.mrf.mxu0
      %2037 = vmatprep.mubr.f32.mxu0 0.0
      %v2038 = vand.u32 %v1787, 4294901760
      %2039 = vmatmul.mubr.f32.gmra.mxu0 %v2038
      %v2040 = vpop.f32.mrf.mxu0
      %v2041 = vadd.f32 %v1907, %v2040
      %v2042 = vpop.f32.mrf.mxu0
      %2043 = vmatprep.mubr.f32.mxu0 0.0
      %v2044 = vand.u32 %v1790, 4294901760
      %2045 = vmatmul.mubr.f32.gmra.mxu0 %v2044
      %v2046 = vpop.f32.mrf.mxu0
      %v2047 = vadd.f32 %v1917, %v2046
      %v2048 = vpop.f32.mrf.mxu0
      %2049 = vmatprep.mubr.f32.mxu0 0.0
      %v2050 = vand.u32 %v1793, 4294901760
      %2051 = vmatmul.mubr.f32.gmra.mxu0 %v2050
      %v2052 = vpop.f32.mrf.mxu0
      %v2053 = vadd.f32 %v1927, %v2052
      %v2054 = vpop.f32.mrf.mxu0
      %2055 = vmatprep.mubr.f32.mxu0 0.0
      %v2056 = vand.u32 %v1796, 4294901760
      %2057 = vmatmul.mubr.f32.gmra.mxu0 %v2056
      %v2058 = vpop.f32.mrf.mxu0
      %v2059 = vadd.f32 %v1937, %v2058
      %v2060 = vpop.f32.mrf.mxu0
      %2061 = vmatprep.mubr.f32.mxu0 0.0
      %v2062 = vand.u32 %v1799, 4294901760
      %2063 = vmatmul.mubr.f32.gmra.mxu0 %v2062
      %v2064 = vpop.f32.mrf.mxu0
      %v2065 = vadd.f32 %v1947, %v2064
      %v2066 = vpop.f32.mrf.mxu0
      %2067 = vdwg.mxu0
      %2068 = vmatprep.subr.mxu0 0.0
      %2069 = vmatpush1.msra.mxu0 0.0
      %2070 = vmatprep.subr.mxu0 0.0
      %2071 = vmatpush1.msra.mxu0 0.0
      %2072 = vmatprep.subr.mxu0 0.0
      %2073 = vmatpush1.msra.mxu0 0.0
      %2074 = vmatprep.subr.mxu0 0.0
      %2075 = vmatpush1.msra.mxu0 0.0
      %2076 = vmatprep.subr.mxu0 0.0
      %2077 = vmatpush1.msra.mxu0 0.0
      %2078 = vmatprep.subr.mxu0 0.0
      %2079 = vmatpush1.msra.mxu0 0.0
      %2080 = vmatprep.subr.mxu0 0.0
      %2081 = vmatpush1.msra.mxu0 0.0
      %2082 = vmatprep.subr.mxu0 0.0
      %2083 = vmatpush1.msra.mxu0 0.0
      %2084 = vmatprep.subr.mxu0 0.0
      %2085 = vmatpush1.msra.mxu0 0.0
      %2086 = vmatprep.subr.mxu0 0.0
      %2087 = vmatpush1.msra.mxu0 0.0
      %2088 = vmatprep.subr.mxu0 0.0
      %2089 = vmatpush1.msra.mxu0 0.0
      %2090 = vmatprep.subr.mxu0 0.0
      %2091 = vmatpush1.msra.mxu0 0.0
      %2092 = vmatprep.subr.mxu0 0.0
      %2093 = vmatpush1.msra.mxu0 0.0
      %2094 = vmatprep.subr.mxu0 0.0
      %2095 = vmatpush1.msra.mxu0 0.0
      %2096 = vmatprep.subr.mxu0 0.0
      %2097 = vmatpush1.msra.mxu0 0.0
      %2098 = vmatprep.subr.mxu0 0.0
      %v2099 = vand.u32 %v1802, 4294901760
      %v2100 = vsub.f32 %v1802, %v2099
      %2101 = vmatpush1.msra.mxu0 %v2100
      %2102 = vmatprep.subr.mxu0 0.0
      %2103 = vmatpush2.msra.mxu0 0.0
      %2104 = vmatprep.subr.mxu0 0.0
      %2105 = vmatpush2.msra.mxu0 0.0
      %2106 = vmatprep.subr.mxu0 0.0
      %2107 = vmatpush2.msra.mxu0 0.0
      %2108 = vmatprep.subr.mxu0 0.0
      %2109 = vmatpush2.msra.mxu0 0.0
      %2110 = vmatprep.subr.mxu0 0.0
      %2111 = vmatpush2.msra.mxu0 0.0
      %2112 = vmatprep.subr.mxu0 0.0
      %2113 = vmatpush2.msra.mxu0 0.0
      %2114 = vmatprep.subr.mxu0 0.0
      %2115 = vmatpush2.msra.mxu0 0.0
      %2116 = vmatprep.subr.mxu0 0.0
      %2117 = vmatpush2.msra.mxu0 0.0
      %2118 = vmatprep.subr.mxu0 0.0
      %2119 = vmatpush2.msra.mxu0 0.0
      %2120 = vmatprep.subr.mxu0 0.0
      %2121 = vmatpush2.msra.mxu0 0.0
      %2122 = vmatprep.subr.mxu0 0.0
      %2123 = vmatpush2.msra.mxu0 0.0
      %2124 = vmatprep.subr.mxu0 0.0
      %2125 = vmatpush2.msra.mxu0 0.0
      %2126 = vmatprep.subr.mxu0 0.0
      %2127 = vmatpush2.msra.mxu0 0.0
      %2128 = vmatprep.subr.mxu0 0.0
      %2129 = vmatpush2.msra.mxu0 0.0
      %2130 = vmatprep.subr.mxu0 0.0
      %2131 = vmatpush2.msra.mxu0 0.0
      %2132 = vmatprep.subr.mxu0 0.0
      %2133 = vmatpush2.msra.mxu0 0.0
      %2134 = vmatprep.mubr.f32.mxu0 0.0
      %v2135 = vand.u32 %v1778, 4294901760
      %v2136 = vsub.f32 %v1778, %v2135
      %2137 = vmatmul.mubr.f32.gmra.mxu0 %v2136
      %v2138 = vpop.f32.mrf.mxu0
      %v2139 = vadd.f32 %v2023, %v2138
      %v2140 = vpop.f32.mrf.mxu0
      %2141 = vmatprep.mubr.f32.mxu0 0.0
      %v2142 = vand.u32 %v1781, 4294901760
      %v2143 = vsub.f32 %v1781, %v2142
      %2144 = vmatmul.mubr.f32.gmra.mxu0 %v2143
      %v2145 = vpop.f32.mrf.mxu0
      %v2146 = vadd.f32 %v2029, %v2145
      %v2147 = vpop.f32.mrf.mxu0
      %2148 = vmatprep.mubr.f32.mxu0 0.0
      %v2149 = vand.u32 %v1784, 4294901760
      %v2150 = vsub.f32 %v1784, %v2149
      %2151 = vmatmul.mubr.f32.gmra.mxu0 %v2150
      %v2152 = vpop.f32.mrf.mxu0
      %v2153 = vadd.f32 %v2035, %v2152
      %v2154 = vpop.f32.mrf.mxu0
      %2155 = vmatprep.mubr.f32.mxu0 0.0
      %v2156 = vand.u32 %v1787, 4294901760
      %v2157 = vsub.f32 %v1787, %v2156
      %2158 = vmatmul.mubr.f32.gmra.mxu0 %v2157
      %v2159 = vpop.f32.mrf.mxu0
      %v2160 = vadd.f32 %v2041, %v2159
      %v2161 = vpop.f32.mrf.mxu0
      %2162 = vmatprep.mubr.f32.mxu0 0.0
      %v2163 = vand.u32 %v1790, 4294901760
      %v2164 = vsub.f32 %v1790, %v2163
      %2165 = vmatmul.mubr.f32.gmra.mxu0 %v2164
      %v2166 = vpop.f32.mrf.mxu0
      %v2167 = vadd.f32 %v2047, %v2166
      %v2168 = vpop.f32.mrf.mxu0
      %2169 = vmatprep.mubr.f32.mxu0 0.0
      %v2170 = vand.u32 %v1793, 4294901760
      %v2171 = vsub.f32 %v1793, %v2170
      %2172 = vmatmul.mubr.f32.gmra.mxu0 %v2171
      %v2173 = vpop.f32.mrf.mxu0
      %v2174 = vadd.f32 %v2053, %v2173
      %v2175 = vpop.f32.mrf.mxu0
      %2176 = vmatprep.mubr.f32.mxu0 0.0
      %v2177 = vand.u32 %v1796, 4294901760
      %v2178 = vsub.f32 %v1796, %v2177
      %2179 = vmatmul.mubr.f32.gmra.mxu0 %v2178
      %v2180 = vpop.f32.mrf.mxu0
      %v2181 = vadd.f32 %v2059, %v2180
      %v2182 = vpop.f32.mrf.mxu0
      %2183 = vmatprep.mubr.f32.mxu0 0.0
      %v2184 = vand.u32 %v1799, 4294901760
      %v2185 = vsub.f32 %v1799, %v2184
      %2186 = vmatmul.mubr.f32.gmra.mxu0 %v2185
      %v2187 = vpop.f32.mrf.mxu0
      %v2188 = vadd.f32 %v2065, %v2187
      %v2189 = vpop.f32.mrf.mxu0
      %2190 = vdwg.mxu0
      %2191 = vmatprep.subr.mxu0 0.0
      %2192 = vmatpush1.msra.mxu0 0.0
      %2193 = vmatprep.subr.mxu0 0.0
      %2194 = vmatpush1.msra.mxu0 0.0
      %2195 = vmatprep.subr.mxu0 0.0
      %2196 = vmatpush1.msra.mxu0 0.0
      %2197 = vmatprep.subr.mxu0 0.0
      %2198 = vmatpush1.msra.mxu0 0.0
      %2199 = vmatprep.subr.mxu0 0.0
      %2200 = vmatpush1.msra.mxu0 0.0
      %2201 = vmatprep.subr.mxu0 0.0
      %2202 = vmatpush1.msra.mxu0 0.0
      %2203 = vmatprep.subr.mxu0 0.0
      %2204 = vmatpush1.msra.mxu0 0.0
      %2205 = vmatprep.subr.mxu0 0.0
      %2206 = vmatpush1.msra.mxu0 0.0
      %2207 = vmatprep.subr.mxu0 0.0
      %2208 = vmatpush1.msra.mxu0 0.0
      %2209 = vmatprep.subr.mxu0 0.0
      %2210 = vmatpush1.msra.mxu0 0.0
      %2211 = vmatprep.subr.mxu0 0.0
      %2212 = vmatpush1.msra.mxu0 0.0
      %2213 = vmatprep.subr.mxu0 0.0
      %2214 = vmatpush1.msra.mxu0 0.0
      %2215 = vmatprep.subr.mxu0 0.0
      %2216 = vmatpush1.msra.mxu0 0.0
      %2217 = vmatprep.subr.mxu0 0.0
      %2218 = vmatpush1.msra.mxu0 0.0
      %2219 = vmatprep.subr.mxu0 0.0
      %2220 = vmatpush1.msra.mxu0 0.0
      %2221 = vmatprep.subr.mxu0 0.0
      %v2222 = vand.u32 %v1802, 4294901760
      %2223 = vmatpush1.msra.mxu0 %v2222
      %2224 = vmatprep.subr.mxu0 0.0
      %2225 = vmatpush2.msra.mxu0 0.0
      %2226 = vmatprep.subr.mxu0 0.0
      %2227 = vmatpush2.msra.mxu0 0.0
      %2228 = vmatprep.subr.mxu0 0.0
      %2229 = vmatpush2.msra.mxu0 0.0
      %2230 = vmatprep.subr.mxu0 0.0
      %2231 = vmatpush2.msra.mxu0 0.0
      %2232 = vmatprep.subr.mxu0 0.0
      %2233 = vmatpush2.msra.mxu0 0.0
      %2234 = vmatprep.subr.mxu0 0.0
      %2235 = vmatpush2.msra.mxu0 0.0
      %2236 = vmatprep.subr.mxu0 0.0
      %2237 = vmatpush2.msra.mxu0 0.0
      %2238 = vmatprep.subr.mxu0 0.0
      %2239 = vmatpush2.msra.mxu0 0.0
      %2240 = vmatprep.subr.mxu0 0.0
      %2241 = vmatpush2.msra.mxu0 0.0
      %2242 = vmatprep.subr.mxu0 0.0
      %2243 = vmatpush2.msra.mxu0 0.0
      %2244 = vmatprep.subr.mxu0 0.0
      %2245 = vmatpush2.msra.mxu0 0.0
      %2246 = vmatprep.subr.mxu0 0.0
      %2247 = vmatpush2.msra.mxu0 0.0
      %2248 = vmatprep.subr.mxu0 0.0
      %2249 = vmatpush2.msra.mxu0 0.0
      %2250 = vmatprep.subr.mxu0 0.0
      %2251 = vmatpush2.msra.mxu0 0.0
      %2252 = vmatprep.subr.mxu0 0.0
      %2253 = vmatpush2.msra.mxu0 0.0
      %2254 = vmatprep.subr.mxu0 0.0
      %2255 = vmatpush2.msra.mxu0 0.0
      %2256 = vmatprep.mubr.f32.mxu0 0.0
      %v2257 = vand.u32 %v1778, 4294901760
      %v2258 = vsub.f32 %v1778, %v2257
      %v2259 = vand.u32 %v2258, 4294901760
      %2260 = vmatmul.mubr.f32.gmra.mxu0 %v2259
      %v2261 = vpop.f32.mrf.mxu0
      %v2262 = vadd.f32 %v2139, %v2261
      %v2263 = vpop.f32.mrf.mxu0
      %2264 = vmatprep.mubr.f32.mxu0 0.0
      %v2265 = vand.u32 %v1781, 4294901760
      %v2266 = vsub.f32 %v1781, %v2265
      %v2267 = vand.u32 %v2266, 4294901760
      %2268 = vmatmul.mubr.f32.gmra.mxu0 %v2267
      %v2269 = vpop.f32.mrf.mxu0
      %v2270 = vadd.f32 %v2146, %v2269
      %v2271 = vpop.f32.mrf.mxu0
      %2272 = vmatprep.mubr.f32.mxu0 0.0
      %v2273 = vand.u32 %v1784, 4294901760
      %v2274 = vsub.f32 %v1784, %v2273
      %v2275 = vand.u32 %v2274, 4294901760
      %2276 = vmatmul.mubr.f32.gmra.mxu0 %v2275
      %v2277 = vpop.f32.mrf.mxu0
      %v2278 = vadd.f32 %v2153, %v2277
      %v2279 = vpop.f32.mrf.mxu0
      %2280 = vmatprep.mubr.f32.mxu0 0.0
      %v2281 = vand.u32 %v1787, 4294901760
      %v2282 = vsub.f32 %v1787, %v2281
      %v2283 = vand.u32 %v2282, 4294901760
      %2284 = vmatmul.mubr.f32.gmra.mxu0 %v2283
      %v2285 = vpop.f32.mrf.mxu0
      %v2286 = vadd.f32 %v2160, %v2285
      %v2287 = vpop.f32.mrf.mxu0
      %2288 = vmatprep.mubr.f32.mxu0 0.0
      %v2289 = vand.u32 %v1790, 4294901760
      %v2290 = vsub.f32 %v1790, %v2289
      %v2291 = vand.u32 %v2290, 4294901760
      %2292 = vmatmul.mubr.f32.gmra.mxu0 %v2291
      %v2293 = vpop.f32.mrf.mxu0
      %v2294 = vadd.f32 %v2167, %v2293
      %v2295 = vpop.f32.mrf.mxu0
      %2296 = vmatprep.mubr.f32.mxu0 0.0
      %v2297 = vand.u32 %v1793, 4294901760
      %v2298 = vsub.f32 %v1793, %v2297
      %v2299 = vand.u32 %v2298, 4294901760
      %2300 = vmatmul.mubr.f32.gmra.mxu0 %v2299
      %v2301 = vpop.f32.mrf.mxu0
      %v2302 = vadd.f32 %v2174, %v2301
      %v2303 = vpop.f32.mrf.mxu0
      %2304 = vmatprep.mubr.f32.mxu0 0.0
      %v2305 = vand.u32 %v1796, 4294901760
      %v2306 = vsub.f32 %v1796, %v2305
      %v2307 = vand.u32 %v2306, 4294901760
      %2308 = vmatmul.mubr.f32.gmra.mxu0 %v2307
      %v2309 = vpop.f32.mrf.mxu0
      %v2310 = vadd.f32 %v2181, %v2309
      %v2311 = vpop.f32.mrf.mxu0
      %2312 = vmatprep.mubr.f32.mxu0 0.0
      %v2313 = vand.u32 %v1799, 4294901760
      %v2314 = vsub.f32 %v1799, %v2313
      %v2315 = vand.u32 %v2314, 4294901760
      %2316 = vmatmul.mubr.f32.gmra.mxu0 %v2315
      %v2317 = vpop.f32.mrf.mxu0
      %v2318 = vadd.f32 %v2188, %v2317
      %v2319 = vpop.f32.mrf.mxu0
      %2320 = vdwg.mxu0
      %2321 = vmatprep.subr.mxu0 0.0
      %2322 = vmatpush1.msra.mxu0 0.0
      %2323 = vmatprep.subr.mxu0 0.0
      %2324 = vmatpush1.msra.mxu0 0.0
      %2325 = vmatprep.subr.mxu0 0.0
      %2326 = vmatpush1.msra.mxu0 0.0
      %2327 = vmatprep.subr.mxu0 0.0
      %2328 = vmatpush1.msra.mxu0 0.0
      %2329 = vmatprep.subr.mxu0 0.0
      %2330 = vmatpush1.msra.mxu0 0.0
      %2331 = vmatprep.subr.mxu0 0.0
      %2332 = vmatpush1.msra.mxu0 0.0
      %2333 = vmatprep.subr.mxu0 0.0
      %2334 = vmatpush1.msra.mxu0 0.0
      %2335 = vmatprep.subr.mxu0 0.0
      %2336 = vmatpush1.msra.mxu0 0.0
      %2337 = vmatprep.subr.mxu0 0.0
      %2338 = vmatpush1.msra.mxu0 0.0
      %2339 = vmatprep.subr.mxu0 0.0
      %2340 = vmatpush1.msra.mxu0 0.0
      %2341 = vmatprep.subr.mxu0 0.0
      %2342 = vmatpush1.msra.mxu0 0.0
      %2343 = vmatprep.subr.mxu0 0.0
      %2344 = vmatpush1.msra.mxu0 0.0
      %2345 = vmatprep.subr.mxu0 0.0
      %2346 = vmatpush1.msra.mxu0 0.0
      %2347 = vmatprep.subr.mxu0 0.0
      %2348 = vmatpush1.msra.mxu0 0.0
      %2349 = vmatprep.subr.mxu0 0.0
      %2350 = vmatpush1.msra.mxu0 0.0
      %2351 = vmatprep.subr.mxu0 0.0
      %v2352 = vand.u32 %v1802, 4294901760
      %v2353 = vsub.f32 %v1802, %v2352
      %v2354 = vand.u32 %v2353, 4294901760
      %2355 = vmatpush1.msra.mxu0 %v2354
      %2356 = vmatprep.subr.mxu0 0.0
      %2357 = vmatpush2.msra.mxu0 0.0
      %2358 = vmatprep.subr.mxu0 0.0
      %2359 = vmatpush2.msra.mxu0 0.0
      %2360 = vmatprep.subr.mxu0 0.0
      %2361 = vmatpush2.msra.mxu0 0.0
      %2362 = vmatprep.subr.mxu0 0.0
      %2363 = vmatpush2.msra.mxu0 0.0
      %2364 = vmatprep.subr.mxu0 0.0
      %2365 = vmatpush2.msra.mxu0 0.0
      %2366 = vmatprep.subr.mxu0 0.0
      %2367 = vmatpush2.msra.mxu0 0.0
      %2368 = vmatprep.subr.mxu0 0.0
      %2369 = vmatpush2.msra.mxu0 0.0
      %2370 = vmatprep.subr.mxu0 0.0
      %2371 = vmatpush2.msra.mxu0 0.0
      %2372 = vmatprep.subr.mxu0 0.0
      %2373 = vmatpush2.msra.mxu0 0.0
      %2374 = vmatprep.subr.mxu0 0.0
      %2375 = vmatpush2.msra.mxu0 0.0
      %2376 = vmatprep.subr.mxu0 0.0
      %2377 = vmatpush2.msra.mxu0 0.0
      %2378 = vmatprep.subr.mxu0 0.0
      %2379 = vmatpush2.msra.mxu0 0.0
      %2380 = vmatprep.subr.mxu0 0.0
      %2381 = vmatpush2.msra.mxu0 0.0
      %2382 = vmatprep.subr.mxu0 0.0
      %2383 = vmatpush2.msra.mxu0 0.0
      %2384 = vmatprep.subr.mxu0 0.0
      %2385 = vmatpush2.msra.mxu0 0.0
      %2386 = vmatprep.subr.mxu0 0.0
      %2387 = vmatpush2.msra.mxu0 0.0
      %2388 = vmatprep.mubr.f32.mxu0 0.0
      %v2389 = vand.u32 %v1778, 4294901760
      %2390 = vmatmul.mubr.f32.gmra.mxu0 %v2389
      %v2391 = vpop.f32.mrf.mxu0
      %v2392 = vadd.f32 %v2262, %v2391
      %v2393 = vpop.f32.mrf.mxu0
      %2394 = vmatprep.mubr.f32.mxu0 0.0
      %v2395 = vand.u32 %v1781, 4294901760
      %2396 = vmatmul.mubr.f32.gmra.mxu0 %v2395
      %v2397 = vpop.f32.mrf.mxu0
      %v2398 = vadd.f32 %v2270, %v2397
      %v2399 = vpop.f32.mrf.mxu0
      %2400 = vmatprep.mubr.f32.mxu0 0.0
      %v2401 = vand.u32 %v1784, 4294901760
      %2402 = vmatmul.mubr.f32.gmra.mxu0 %v2401
      %v2403 = vpop.f32.mrf.mxu0
      %v2404 = vadd.f32 %v2278, %v2403
      %v2405 = vpop.f32.mrf.mxu0
      %2406 = vmatprep.mubr.f32.mxu0 0.0
      %v2407 = vand.u32 %v1787, 4294901760
      %2408 = vmatmul.mubr.f32.gmra.mxu0 %v2407
      %v2409 = vpop.f32.mrf.mxu0
      %v2410 = vadd.f32 %v2286, %v2409
      %v2411 = vpop.f32.mrf.mxu0
      %2412 = vmatprep.mubr.f32.mxu0 0.0
      %v2413 = vand.u32 %v1790, 4294901760
      %2414 = vmatmul.mubr.f32.gmra.mxu0 %v2413
      %v2415 = vpop.f32.mrf.mxu0
      %v2416 = vadd.f32 %v2294, %v2415
      %v2417 = vpop.f32.mrf.mxu0
      %2418 = vmatprep.mubr.f32.mxu0 0.0
      %v2419 = vand.u32 %v1793, 4294901760
      %2420 = vmatmul.mubr.f32.gmra.mxu0 %v2419
      %v2421 = vpop.f32.mrf.mxu0
      %v2422 = vadd.f32 %v2302, %v2421
      %v2423 = vpop.f32.mrf.mxu0
      %2424 = vmatprep.mubr.f32.mxu0 0.0
      %v2425 = vand.u32 %v1796, 4294901760
      %2426 = vmatmul.mubr.f32.gmra.mxu0 %v2425
      %v2427 = vpop.f32.mrf.mxu0
      %v2428 = vadd.f32 %v2310, %v2427
      %v2429 = vpop.f32.mrf.mxu0
      %2430 = vmatprep.mubr.f32.mxu0 0.0
      %v2431 = vand.u32 %v1799, 4294901760
      %2432 = vmatmul.mubr.f32.gmra.mxu0 %v2431
      %v2433 = vpop.f32.mrf.mxu0
      %v2434 = vadd.f32 %v2318, %v2433
      %v2435 = vpop.f32.mrf.mxu0
      %2436 = vdwg.mxu0
      %2437 = vmatprep.subr.mxu0 0.0
      %2438 = vmatpush1.msra.mxu0 0.0
      %2439 = vmatprep.subr.mxu0 0.0
      %2440 = vmatpush1.msra.mxu0 0.0
      %2441 = vmatprep.subr.mxu0 0.0
      %2442 = vmatpush1.msra.mxu0 0.0
      %2443 = vmatprep.subr.mxu0 0.0
      %2444 = vmatpush1.msra.mxu0 0.0
      %2445 = vmatprep.subr.mxu0 0.0
      %2446 = vmatpush1.msra.mxu0 0.0
      %2447 = vmatprep.subr.mxu0 0.0
      %2448 = vmatpush1.msra.mxu0 0.0
      %2449 = vmatprep.subr.mxu0 0.0
      %2450 = vmatpush1.msra.mxu0 0.0
      %2451 = vmatprep.subr.mxu0 0.0
      %2452 = vmatpush1.msra.mxu0 0.0
      %2453 = vmatprep.subr.mxu0 0.0
      %2454 = vmatpush1.msra.mxu0 0.0
      %2455 = vmatprep.subr.mxu0 0.0
      %2456 = vmatpush1.msra.mxu0 0.0
      %2457 = vmatprep.subr.mxu0 0.0
      %2458 = vmatpush1.msra.mxu0 0.0
      %2459 = vmatprep.subr.mxu0 0.0
      %2460 = vmatpush1.msra.mxu0 0.0
      %2461 = vmatprep.subr.mxu0 0.0
      %2462 = vmatpush1.msra.mxu0 0.0
      %2463 = vmatprep.subr.mxu0 0.0
      %2464 = vmatpush1.msra.mxu0 0.0
      %2465 = vmatprep.subr.mxu0 0.0
      %2466 = vmatpush1.msra.mxu0 0.0
      %2467 = vmatprep.subr.mxu0 0.0
      %v2468 = vand.u32 %v1802, 4294901760
      %2469 = vmatpush1.msra.mxu0 %v2468
      %2470 = vmatprep.subr.mxu0 0.0
      %2471 = vmatpush2.msra.mxu0 0.0
      %2472 = vmatprep.subr.mxu0 0.0
      %2473 = vmatpush2.msra.mxu0 0.0
      %2474 = vmatprep.subr.mxu0 0.0
      %2475 = vmatpush2.msra.mxu0 0.0
      %2476 = vmatprep.subr.mxu0 0.0
      %2477 = vmatpush2.msra.mxu0 0.0
      %2478 = vmatprep.subr.mxu0 0.0
      %2479 = vmatpush2.msra.mxu0 0.0
      %2480 = vmatprep.subr.mxu0 0.0
      %2481 = vmatpush2.msra.mxu0 0.0
      %2482 = vmatprep.subr.mxu0 0.0
      %2483 = vmatpush2.msra.mxu0 0.0
      %2484 = vmatprep.subr.mxu0 0.0
      %2485 = vmatpush2.msra.mxu0 0.0
      %2486 = vmatprep.subr.mxu0 0.0
      %2487 = vmatpush2.msra.mxu0 0.0
      %2488 = vmatprep.subr.mxu0 0.0
      %2489 = vmatpush2.msra.mxu0 0.0
      %2490 = vmatprep.subr.mxu0 0.0
      %2491 = vmatpush2.msra.mxu0 0.0
      %2492 = vmatprep.subr.mxu0 0.0
      %2493 = vmatpush2.msra.mxu0 0.0
      %2494 = vmatprep.subr.mxu0 0.0
      %2495 = vmatpush2.msra.mxu0 0.0
      %2496 = vmatprep.subr.mxu0 0.0
      %2497 = vmatpush2.msra.mxu0 0.0
      %2498 = vmatprep.subr.mxu0 0.0
      %2499 = vmatpush2.msra.mxu0 0.0
      %2500 = vmatprep.subr.mxu0 0.0
      %2501 = vmatpush2.msra.mxu0 0.0
      %2502 = vmatprep.mubr.f32.mxu0 0.0
      %v2503 = vand.u32 %v1778, 4294901760
      %2504 = vmatmul.mubr.f32.gmra.mxu0 %v2503
      %v2505 = vpop.f32.mrf.mxu0
      %v2506 = vadd.f32 %v2392, %v2505
      %v2507 = vpop.f32.mrf.mxu0
      %2508 = vmatprep.mubr.f32.mxu0 0.0
      %v2509 = vand.u32 %v1781, 4294901760
      %2510 = vmatmul.mubr.f32.gmra.mxu0 %v2509
      %v2511 = vpop.f32.mrf.mxu0
      %v2512 = vadd.f32 %v2398, %v2511
      %v2513 = vpop.f32.mrf.mxu0
      %2514 = vmatprep.mubr.f32.mxu0 0.0
      %v2515 = vand.u32 %v1784, 4294901760
      %2516 = vmatmul.mubr.f32.gmra.mxu0 %v2515
      %v2517 = vpop.f32.mrf.mxu0
      %v2518 = vadd.f32 %v2404, %v2517
      %v2519 = vpop.f32.mrf.mxu0
      %2520 = vmatprep.mubr.f32.mxu0 0.0
      %v2521 = vand.u32 %v1787, 4294901760
      %2522 = vmatmul.mubr.f32.gmra.mxu0 %v2521
      %v2523 = vpop.f32.mrf.mxu0
      %v2524 = vadd.f32 %v2410, %v2523
      %v2525 = vpop.f32.mrf.mxu0
      %2526 = vmatprep.mubr.f32.mxu0 0.0
      %v2527 = vand.u32 %v1790, 4294901760
      %2528 = vmatmul.mubr.f32.gmra.mxu0 %v2527
      %v2529 = vpop.f32.mrf.mxu0
      %v2530 = vadd.f32 %v2416, %v2529
      %v2531 = vpop.f32.mrf.mxu0
      %2532 = vmatprep.mubr.f32.mxu0 0.0
      %v2533 = vand.u32 %v1793, 4294901760
      %2534 = vmatmul.mubr.f32.gmra.mxu0 %v2533
      %v2535 = vpop.f32.mrf.mxu0
      %v2536 = vadd.f32 %v2422, %v2535
      %v2537 = vpop.f32.mrf.mxu0
      %2538 = vmatprep.mubr.f32.mxu0 0.0
      %v2539 = vand.u32 %v1796, 4294901760
      %2540 = vmatmul.mubr.f32.gmra.mxu0 %v2539
      %v2541 = vpop.f32.mrf.mxu0
      %v2542 = vadd.f32 %v2428, %v2541
      %v2543 = vpop.f32.mrf.mxu0
      %2544 = vmatprep.mubr.f32.mxu0 0.0
      %v2545 = vand.u32 %v1799, 4294901760
      %2546 = vmatmul.mubr.f32.gmra.mxu0 %v2545
      %v2547 = vpop.f32.mrf.mxu0
      %v2548 = vadd.f32 %v2434, %v2547
      %v2549 = vpop.f32.mrf.mxu0
      %2550 = vdwg.mxu0
      %2551 = vst.msk [vmem:[#allocation3] sm:$0xff] %vm225, %v1732
      %2552 = vst.msk [vmem:[#allocation3 + $0x8] sm:$0xff] %vm225, %v1738
      %2553 = vst.msk [vmem:[#allocation3 + $0x10] sm:$0xff] %vm225, %v1744
      %2554 = vst.msk [vmem:[#allocation3 + $0x18] sm:$0xff] %vm225, %v1750
      %2555 = vst.msk [vmem:[#allocation3 + $0x20] sm:$0xff] %vm225, %v1756
      %2556 = vst.msk [vmem:[#allocation3 + $0x28] sm:$0xff] %vm225, %v1762
      %2557 = vst.msk [vmem:[#allocation3 + $0x30] sm:$0xff] %vm225, %v1768
      %2558 = vst.msk [vmem:[#allocation3 + $0x38] sm:$0xff] %vm225, %v1774
      %2559 = vst.msk [vmem:[#allocation4] sm:$0xff] %vm225, %v2506
      %2560 = vst.msk [vmem:[#allocation4 + $0x8] sm:$0xff] %vm225, %v2512
      %2561 = vst.msk [vmem:[#allocation4 + $0x10] sm:$0xff] %vm225, %v2518
      %2562 = vst.msk [vmem:[#allocation4 + $0x18] sm:$0xff] %vm225, %v2524
      %2563 = vst.msk [vmem:[#allocation4 + $0x20] sm:$0xff] %vm225, %v2530
      %2564 = vst.msk [vmem:[#allocation4 + $0x28] sm:$0xff] %vm225, %v2536
      %2565 = vst.msk [vmem:[#allocation4 + $0x30] sm:$0xff] %vm225, %v2542
      %2566 = vst.msk [vmem:[#allocation4 + $0x38] sm:$0xff] %vm225, %v2548
      %v2567 = vsel %vm225, %v1732, 0.0
      %v2568 = vsel %vm225, %v1738, 0.0
      %v2569 = vadd.f32 %v2567, %v2568
      %v2570 = vsel %vm225, %v1744, 0.0
      %v2571 = vadd.f32 %v2569, %v2570
      %v2572 = vsel %vm225, %v1750, 0.0
      %v2573 = vadd.f32 %v2571, %v2572
      %v2574 = vsel %vm225, %v1756, 0.0
      %v2575 = vadd.f32 %v2573, %v2574
      %v2576 = vsel %vm225, %v1762, 0.0
      %v2577 = vadd.f32 %v2575, %v2576
      %v2578 = vsel %vm225, %v1768, 0.0
      %v2579 = vadd.f32 %v2577, %v2578
      %v2580 = vsel %vm225, %v1774, 0.0
      %v2581 = vadd.f32 %v2579, %v2580
      %v2582 = vrot.slane %v2581, 4
      %v2583 = vadd.f32 %v2581, %v2582
      %v2584 = vrot.slane %v2583, 2
      %v2585 = vadd.f32 %v2583, %v2584
      %v2586 = vrot.slane %v2585, 1
      %v2587 = vadd.f32 %v2585, %v2586
      %v2588 = vadd.f32 %v2587, 0.0
      %v2589 = vmul.f32 %v1732, %v1732
      %v2590 = vmul.f32 %v1738, %v1738
      %v2591 = vmul.f32 %v1744, %v1744
      %v2592 = vmul.f32 %v1750, %v1750
      %v2593 = vmul.f32 %v1756, %v1756
      %v2594 = vmul.f32 %v1762, %v1762
      %v2595 = vmul.f32 %v1768, %v1768
      %v2596 = vmul.f32 %v1774, %v1774
      %v2597 = vsel %vm225, %v2589, 0.0
      %v2598 = vsel %vm225, %v2590, 0.0
      %v2599 = vadd.f32 %v2597, %v2598
      %v2600 = vsel %vm225, %v2591, 0.0
      %v2601 = vadd.f32 %v2599, %v2600
      %v2602 = vsel %vm225, %v2592, 0.0
      %v2603 = vadd.f32 %v2601, %v2602
      %v2604 = vsel %vm225, %v2593, 0.0
      %v2605 = vadd.f32 %v2603, %v2604
      %v2606 = vsel %vm225, %v2594, 0.0
      %v2607 = vadd.f32 %v2605, %v2606
      %v2608 = vsel %vm225, %v2595, 0.0
      %v2609 = vadd.f32 %v2607, %v2608
      %v2610 = vsel %vm225, %v2596, 0.0
      %v2611 = vadd.f32 %v2609, %v2610
      %v2612 = vrot.slane %v2611, 4
      %v2613 = vadd.f32 %v2611, %v2612
      %v2614 = vrot.slane %v2613, 2
      %v2615 = vadd.f32 %v2613, %v2614
      %v2616 = vrot.slane %v2615, 1
      %v2617 = vadd.f32 %v2615, %v2616
      %v2618 = vadd.f32 %v2617, 0.0
      %v2619 = vsel %vm225, %v2506, 0.0
      %v2620 = vsel %vm225, %v2512, 0.0
      %v2621 = vadd.f32 %v2619, %v2620
      %v2622 = vsel %vm225, %v2518, 0.0
      %v2623 = vadd.f32 %v2621, %v2622
      %v2624 = vsel %vm225, %v2524, 0.0
      %v2625 = vadd.f32 %v2623, %v2624
      %v2626 = vsel %vm225, %v2530, 0.0
      %v2627 = vadd.f32 %v2625, %v2626
      %v2628 = vsel %vm225, %v2536, 0.0
      %v2629 = vadd.f32 %v2627, %v2628
      %v2630 = vsel %vm225, %v2542, 0.0
      %v2631 = vadd.f32 %v2629, %v2630
      %v2632 = vsel %vm225, %v2548, 0.0
      %v2633 = vadd.f32 %v2631, %v2632
      %v2634 = vrot.slane %v2633, 4
      %v2635 = vadd.f32 %v2633, %v2634
      %v2636 = vrot.slane %v2635, 2
      %v2637 = vadd.f32 %v2635, %v2636
      %v2638 = vrot.slane %v2637, 1
      %v2639 = vadd.f32 %v2637, %v2638
      %v2640 = vadd.f32 %v2639, 0.0
      %v2641 = vmul.f32 %v2506, %v2506
      %v2642 = vmul.f32 %v2512, %v2512
      %v2643 = vmul.f32 %v2518, %v2518
      %v2644 = vmul.f32 %v2524, %v2524
      %v2645 = vmul.f32 %v2530, %v2530
      %v2646 = vmul.f32 %v2536, %v2536
      %v2647 = vmul.f32 %v2542, %v2542
      %v2648 = vmul.f32 %v2548, %v2548
      %v2649 = vsel %vm225, %v2641, 0.0
      %v2650 = vsel %vm225, %v2642, 0.0
      %v2651 = vadd.f32 %v2649, %v2650
      %v2652 = vsel %vm225, %v2643, 0.0
      %v2653 = vadd.f32 %v2651, %v2652
      %v2654 = vsel %vm225, %v2644, 0.0
      %v2655 = vadd.f32 %v2653, %v2654
      %v2656 = vsel %vm225, %v2645, 0.0
      %v2657 = vadd.f32 %v2655, %v2656
      %v2658 = vsel %vm225, %v2646, 0.0
      %v2659 = vadd.f32 %v2657, %v2658
      %v2660 = vsel %vm225, %v2647, 0.0
      %v2661 = vadd.f32 %v2659, %v2660
      %v2662 = vsel %vm225, %v2648, 0.0
      %v2663 = vadd.f32 %v2661, %v2662
      %v2664 = vrot.slane %v2663, 4
      %v2665 = vadd.f32 %v2663, %v2664
      %v2666 = vrot.slane %v2665, 2
      %v2667 = vadd.f32 %v2665, %v2666
      %v2668 = vrot.slane %v2667, 1
      %v2669 = vadd.f32 %v2667, %v2668
      %v2670 = vadd.f32 %v2669, 0.0
      %v2671 = vmul.f32 %v2588, 0.015625
      %v2672 = vmul.f32 %v2618, 0.015625
      %v2673 = vmul.f32 %v2671, %v2671
      %v2674 = vsub.f32 %v2672, %v2673
      %v2675 = vmax.f32 %v2674, 0.0
      %v2676 = vadd.f32 %v2675, 1e-05
      %v2677 = vrsqrt.pop %v2676
      %v2678 = vmul.f32 %v2640, 0.015625
      %v2679 = vmul.f32 %v2670, 0.015625
      %v2680 = vmul.f32 %v2678, %v2678
      %v2681 = vsub.f32 %v2679, %v2680
      %v2682 = vmax.f32 %v2681, 0.0
      %v2683 = vadd.f32 %v2682, 1e-05
      %v2684 = vrsqrt.pop %v2683
      %v2685 = vld [vmem:[#allocation3] sm:$0xff]
      %v2686 = vld [vmem:[#allocation3 + $0x8] sm:$0xff]
      %v2687 = vld [vmem:[#allocation3 + $0x10] sm:$0xff]
      %v2688 = vld [vmem:[#allocation3 + $0x18] sm:$0xff]
      %v2689 = vld [vmem:[#allocation3 + $0x20] sm:$0xff]
      %v2690 = vld [vmem:[#allocation3 + $0x28] sm:$0xff]
      %v2691 = vld [vmem:[#allocation3 + $0x30] sm:$0xff]
      %v2692 = vld [vmem:[#allocation3 + $0x38] sm:$0xff]
      %v2693 = vsub.f32 %v2685, %v2671
      %v2694 = vsub.f32 %v2686, %v2671
      %v2695 = vsub.f32 %v2687, %v2671
      %v2696 = vsub.f32 %v2688, %v2671
      %v2697 = vsub.f32 %v2689, %v2671
      %v2698 = vsub.f32 %v2690, %v2671
      %v2699 = vsub.f32 %v2691, %v2671
      %v2700 = vsub.f32 %v2692, %v2671
      %v2701 = vmul.f32 %v2693, %v2677
      %v2702 = vmul.f32 %v2694, %v2677
      %v2703 = vmul.f32 %v2695, %v2677
      %v2704 = vmul.f32 %v2696, %v2677
      %v2705 = vmul.f32 %v2697, %v2677
      %v2706 = vmul.f32 %v2698, %v2677
      %v2707 = vmul.f32 %v2699, %v2677
      %v2708 = vmul.f32 %v2700, %v2677
      %v2709 = vmul.f32 %v2701, 0.2
      %v2710 = vmul.f32 %v2702, 0.2
      %v2711 = vmul.f32 %v2703, 0.2
      %v2712 = vmul.f32 %v2704, 0.2
      %v2713 = vmul.f32 %v2705, 0.2
      %v2714 = vmul.f32 %v2706, 0.2
      %v2715 = vmul.f32 %v2707, 0.2
      %v2716 = vmul.f32 %v2708, 0.2
      %v2717 = vmax.f32 %v2701, %v2709
      %v2718 = vmax.f32 %v2702, %v2710
      %v2719 = vmax.f32 %v2703, %v2711
      %v2720 = vmax.f32 %v2704, %v2712
      %v2721 = vmax.f32 %v2705, %v2713
      %v2722 = vmax.f32 %v2706, %v2714
      %v2723 = vmax.f32 %v2707, %v2715
      %v2724 = vmax.f32 %v2708, %v2716
      %v2725 = vld [vmem:[#allocation4] sm:$0xff]
      %v2726 = vld [vmem:[#allocation4 + $0x8] sm:$0xff]
      %v2727 = vld [vmem:[#allocation4 + $0x10] sm:$0xff]
      %v2728 = vld [vmem:[#allocation4 + $0x18] sm:$0xff]
      %v2729 = vld [vmem:[#allocation4 + $0x20] sm:$0xff]
      %v2730 = vld [vmem:[#allocation4 + $0x28] sm:$0xff]
      %v2731 = vld [vmem:[#allocation4 + $0x30] sm:$0xff]
      %v2732 = vld [vmem:[#allocation4 + $0x38] sm:$0xff]
      %v2733 = vsub.f32 %v2725, %v2678
      %v2734 = vsub.f32 %v2726, %v2678
      %v2735 = vsub.f32 %v2727, %v2678
      %v2736 = vsub.f32 %v2728, %v2678
      %v2737 = vsub.f32 %v2729, %v2678
      %v2738 = vsub.f32 %v2730, %v2678
      %v2739 = vsub.f32 %v2731, %v2678
      %v2740 = vsub.f32 %v2732, %v2678
      %v2741 = vmul.f32 %v2733, %v2684
      %v2742 = vmul.f32 %v2734, %v2684
      %v2743 = vmul.f32 %v2735, %v2684
      %v2744 = vmul.f32 %v2736, %v2684
      %v2745 = vmul.f32 %v2737, %v2684
      %v2746 = vmul.f32 %v2738, %v2684
      %v2747 = vmul.f32 %v2739, %v2684
      %v2748 = vmul.f32 %v2740, %v2684
      %v2749 = vmul.f32 %v2741, 0.2
      %v2750 = vmul.f32 %v2742, 0.2
      %v2751 = vmul.f32 %v2743, 0.2
      %v2752 = vmul.f32 %v2744, 0.2
      %v2753 = vmul.f32 %v2745, 0.2
      %v2754 = vmul.f32 %v2746, 0.2
      %v2755 = vmul.f32 %v2747, 0.2
      %v2756 = vmul.f32 %v2748, 0.2
      %v2757 = vmax.f32 %v2741, %v2749
      %v2758 = vmax.f32 %v2742, %v2750
      %v2759 = vmax.f32 %v2743, %v2751
      %v2760 = vmax.f32 %v2744, %v2752
      %v2761 = vmax.f32 %v2745, %v2753
      %v2762 = vmax.f32 %v2746, %v2754
      %v2763 = vmax.f32 %v2747, %v2755
      %v2764 = vmax.f32 %v2748, %v2756
      %v2765 = vadd.f32 %v2717, %v2757
      %v2766 = vadd.f32 %v2718, %v2758
      %v2767 = vadd.f32 %v2719, %v2759
      %v2768 = vadd.f32 %v2720, %v2760
      %v2769 = vadd.f32 %v2721, %v2761
      %v2770 = vadd.f32 %v2722, %v2762
      %v2771 = vadd.f32 %v2723, %v2763
      %v2772 = vadd.f32 %v2724, %v2764
      %2773 = vst.msk [vmem:[%s224] sm:$0xff] %vm225, %v2765
      %2774 = vst.msk [vmem:[%s224 + $0x8] sm:$0xff] %vm225, %v2766
      %2775 = vst.msk [vmem:[%s224 + $0x10] sm:$0xff] %vm225, %v2767
      %2776 = vst.msk [vmem:[%s224 + $0x18] sm:$0xff] %vm225, %v2768
      %2777 = vst.msk [vmem:[%s224 + $0x20] sm:$0xff] %vm225, %v2769
      %2778 = vst.msk [vmem:[%s224 + $0x28] sm:$0xff] %vm225, %v2770
      %2779 = vst.msk [vmem:[%s224 + $0x30] sm:$0xff] %vm225, %v2771
      %2780 = vst.msk [vmem:[%s224 + $0x38] sm:$0xff] %vm225, %v2772
      %p2781 = scmp.lt.s32.totalorder %s16, 1
      %s2782 = scalar_select %p2781, %s16, 1
      %s2783 = smul.addr %s2782, 8
      %s2784 = smul.addr %s2783, 8
      %s2785 = scalar_lea.vmem %s5, %s2784
      // Predicated region
      $region41: #{down_conv.1} parent=39 // pred_check
        %p2786 = pneg %p144
      $region42: #{down_conv.1} parent=39 // pred_check_branch
        %2788 = sbr.rel (%p2786) target = $region44
      $region43: #{down_conv.1} parent=39 // pred_region
        _
      $region44: #{down_conv.1} parent=39 // pred_fallthru
        _
    $region40: #{down_conv.1} parent=5 // pred_fallthru
      _
    %p2789 = scmp.le.s32.totalorder 2, %s11
    // Predicated region
    $region45: #{down_conv.1} parent=5 // pred_check
      %p2790 = pneg %p2789
    $region46: #{down_conv.1} parent=5 // pred_check_branch
      %2792 = sbr.rel (%p2790) target = $region48
    $region47: #{down_conv.1} parent=5 // pred_region
      %s2793 = ssub.s32 %s11, 2
      // Predicated region
      $region49: #{down_conv.1} parent=47 // pred_check
        %p2794 = pneg %p150
      $region50: #{down_conv.1} parent=47 // pred_check_branch
        %2796 = sbr.rel (%p2794) target = $region52
      $region51: #{down_conv.1} parent=47 // pred_region
        %p2797 = scmp.lt.s32.totalorder %s17, 1
        %s2798 = scalar_select %p2797, %s17, 1
        %s2799 = smul.addr %s2798, 8
        %s2800 = smul.addr %s2799, 8
        %s2801 = scalar_lea.vmem %s5, %s2800
      $region52: #{down_conv.1} parent=47 // pred_fallthru
        _
    $region48: #{down_conv.1} parent=5 // pred_fallthru
      _
  $region6: #{down_conv.1} parent=0 // loop_footer
    %s15 = sadd.s32 1, %s11
  $region7: #{down_conv.1} parent=0 // loop_footer_branch
    %10 = sbr.rel target = $region3
  $region8: #{down_conv.1} parent=0 // loop_exit
    _

</llo_original>
